<compile_context>
chip_gen: v5e
topology: v5e:2x2
jax: 0.10.0
libtpu: 0.0.40
codegen_flags: <defaults>
</compile_context>

<pallas_src>
import functools

import jax
import jax.numpy as jnp
from jax.experimental import pallas as pl
from jax.experimental.pallas import tpu as pltpu

_SQRT_HALF = 0.7071067811865476


# ----------------------------- in-kernel math ------------------------------

def _erf_poly(x):
    # Abramowitz & Stegun 7.1.26 (max abs err ~1.5e-7). Fallback only.
    a1, a2, a3, a4, a5 = 0.254829592, -0.284496736, 1.421413741, -1.453152027, 1.061405429
    p = 0.3275911
    sgn = jnp.where(x >= 0.0, 1.0, -1.0)
    ax = jnp.abs(x)
    t = 1.0 / (1.0 + p * ax)
    poly = ((((a5 * t + a4) * t + a3) * t + a2) * t + a1) * t
    return sgn * (1.0 - poly * jnp.exp(-ax * ax))


_ERF_IMPL = None


def _erf_fn():
    """Prefer jax.lax.erf (EUP transcendental path); probe once whether this
    Mosaic build lowers it, else fall back to the polynomial."""
    global _ERF_IMPL
    if _ERF_IMPL is None:
        def probe_kernel(x_ref, o_ref):
            o_ref[...] = jax.lax.erf(x_ref[...])
        try:
            xp = jnp.zeros((8, 128), jnp.float32)
            jax.block_until_ready(
                pl.pallas_call(
                    probe_kernel,
                    out_shape=jax.ShapeDtypeStruct((8, 128), jnp.float32))(xp))
            _ERF_IMPL = jax.lax.erf
        except Exception:
            _ERF_IMPL = _erf_poly
    return _ERF_IMPL


_BUF1_OK = None


def _supports_single_buffering():
    """Probe once whether pipeline_mode=pl.Buffered(1) (single-buffered
    constant operands) lowers on this build; fall back to default buffering."""
    global _BUF1_OK
    if _BUF1_OK is None:
        def probe_kernel(x_ref, w_ref, o_ref):
            o_ref[...] = x_ref[...] + w_ref[...]
        try:
            z = jnp.zeros((8, 128), jnp.float32)
            jax.block_until_ready(pl.pallas_call(
                probe_kernel,
                out_shape=jax.ShapeDtypeStruct((8, 128), jnp.float32),
                grid=(2,),
                in_specs=[pl.BlockSpec((8, 128), lambda b: (0, 0)),
                          pl.BlockSpec((8, 128), lambda b: (0, 0),
                                       pipeline_mode=pl.Buffered(1))],
                out_specs=pl.BlockSpec((8, 128), lambda b: (0, 0)))(z, z))
            _BUF1_OK = True
        except Exception:
            _BUF1_OK = False
    return _BUF1_OK


def _gelu_exact(x, erf):
    # torch.nn.GELU() default (approximate='none'): 0.5*x*(1+erf(x/sqrt(2)))
    return 0.5 * x * (1.0 + erf(x * _SQRT_HALF))


def _layernorm(x, g, b, eps):
    # torch.nn.LayerNorm over last dim, biased variance; rsqrt -> EUP.
    mu = jnp.mean(x, axis=-1, keepdims=True)
    xc = x - mu
    var = jnp.mean(xc * xc, axis=-1, keepdims=True)
    return xc * jax.lax.rsqrt(var + eps) * g + b


# ------------------------------ block kernel -------------------------------

def resblock_kernel(x_ref,
                    ln1g_ref, ln1b_ref,
                    wqkv_ref, bqkv_ref,
                    wo_ref, bo_ref,
                    ln2g_ref, ln2b_ref,
                    w1_ref, b1_ref, w2_ref, b2_ref,
                    o_ref,
                    qkv_scr, attn_scr,
                    *, num_heads, eps, erf):
    bf16 = jnp.bfloat16
    nb, S, D = x_ref.shape
    hd = D // num_heads
    # heads are processed in groups whose lane width is a multiple of 128 so
    # every VMEM load/store in the attention section is unmasked / lane-dense
    n_grp = 1 if hd >= 128 else (128 // hd)
    n_grp = min(n_grp, num_heads)
    gw = n_grp * hd
    n_groups = num_heads // n_grp

    x = x_ref[...].reshape(nb * S, D)                       # (rows, D) fp32

    # --- x = x + MultiheadAttention(LN1(x)) --------------------------------
    h = _layernorm(x, ln1g_ref[...], ln1b_ref[...], eps)
    # Fused QKV projection: one MXU pass with N = 3D, rows = nb*S.
    # 1/sqrt(hd) is pre-folded into the q columns of wqkv/bqkv.
    qkv = jnp.dot(h.astype(bf16), wqkv_ref[...],
                  preferred_element_type=jnp.float32) + bqkv_ref[...]
    # single bf16 cast into a VMEM scratch; the head loop reads bf16 directly
    qkv_scr[...] = qkv.reshape(nb, S, 3 * D).astype(bf16)

    # Visible loop over packed batch elements (bounds live ranges); static
    # unroll only over 128-lane head groups.
    # TODO(synk): a head-batched dot_general with a fori over groups needs
    # dynamic 128-aligned lane slicing; kept static for Mosaic portability.
    @pl.loop(0, nb)
    def _(j):
        qkv_j = qkv_scr[j]                                  # (S, 3D) bf16, lane-dense load
        for g in range(n_groups):
            lo = g * gw
            parts = []
            for hh in range(n_grp):
                o = lo + hh * hd
                qh = qkv_j[:, o:o + hd]                     # pre-scaled q
                kh = qkv_j[:, D + o:D + o + hd]
                vh = qkv_j[:, 2 * D + o:2 * D + o + hd]
                s = jax.lax.dot_general(qh, kh, (((1,), (1,)), ((), ())),
                                        preferred_element_type=jnp.float32)  # (S, S)
                s = s - jnp.max(s, axis=-1, keepdims=True)
                e = jnp.exp(s)
                p = e * pl.reciprocal(jnp.sum(e, axis=-1, keepdims=True), approx=True)
                parts.append(jnp.dot(p.astype(bf16), vh,
                                     preferred_element_type=jnp.float32))
            ctx = parts[0] if n_grp == 1 else jnp.concatenate(parts, axis=-1)
            # unmasked store: gw is a multiple of 128 lanes
            attn_scr[j, :, lo:lo + gw] = ctx.astype(bf16)

    attn = jnp.dot(attn_scr[...].reshape(nb * S, D), wo_ref[...],
                   preferred_element_type=jnp.float32) + bo_ref[...]
    x1 = x + attn

    # --- x = x + MLP(LN2(x)) ------------------------------------------------
    h2 = _layernorm(x1, ln2g_ref[...], ln2b_ref[...], eps)
    f = jnp.dot(h2.astype(bf16), w1_ref[...],
                preferred_element_type=jnp.float32) + b1_ref[...]
    f = _gelu_exact(f, erf)
    m = jnp.dot(f.astype(bf16), w2_ref[...],
                preferred_element_type=jnp.float32) + b2_ref[...]
    # dropout_1 / dropout_2 are identities (dropout = 0.0 default)
    o_ref[...] = (x1 + m).reshape(nb, S, D).astype(o_ref.dtype)


# ------------------------------- wrappers -----------------------------------

_PREP_KEYS = ("ln1_g", "ln1_b", "wqkv", "bqkv", "wo", "bo",
              "ln2_g", "ln2_b", "w1", "b1", "w2", "b2")


def prepare_layer(p, num_heads):
    """Fuse wq|wk|wv into one (D, 3D) weight, fold 1/sqrt(hd) into the q
    columns, cast MXU weights to bf16 (fp32 accumulation in-kernel)."""
    D = p["wq"].shape[0]
    hd = D // num_heads
    scale = 1.0 / float(hd) ** 0.5
    wqkv = jnp.concatenate([p["wq"] * scale, p["wk"], p["wv"]], axis=1)
    bqkv = jnp.concatenate([p["bq"] * scale, p["bk"], p["bv"]], axis=1)
    return dict(
        ln1_g=p["ln1_g"].astype(jnp.float32), ln1_b=p["ln1_b"].astype(jnp.float32),
        wqkv=wqkv.astype(jnp.bfloat16), bqkv=bqkv.astype(jnp.float32),
        wo=p["wo"].astype(jnp.bfloat16), bo=p["bo"].astype(jnp.float32),
        ln2_g=p["ln2_g"].astype(jnp.float32), ln2_b=p["ln2_b"].astype(jnp.float32),
        w1=p["w1"].astype(jnp.bfloat16), b1=p["b1"].astype(jnp.float32),
        w2=p["w2"].astype(jnp.bfloat16), b2=p["b2"].astype(jnp.float32),
    )


def prepare_params(layer_params, num_heads):
    """Hoisted out of the forward: build the fused bf16 weights once."""
    return [prepare_layer(p, num_heads) for p in layer_params]


def _pick_batch_block(B, S, target_rows=256, max_rows=1024):
    """Pack nb batch elements per grid step so GEMM rows = nb*S approaches the
    MXU-friendly 256 while keeping >=2 'parallel' grid steps (v7x megacore)."""
    divs = [d for d in range(1, B + 1) if B % d == 0]
    cands = [d for d in divs if d * S <= max_rows] or [1]
    pref = [d for d in cands if B // d >= 2] or cands
    hit = [d for d in pref if d * S >= target_rows]
    return min(hit) if hit else max(pref)


def _vmem_cap_bytes():
    phys = None
    try:
        info = pltpu.get_tpu_info()
        phys = int(getattr(info, "vmem_capacity_bytes", 0)) or None
    except Exception:
        phys = None
    if phys is None:
        return 56 << 20                          # safe on every generation
    if phys <= (64 << 20):                       # v7x-class TensorCore
        return phys - (8 << 20)                  # leave headroom for internal scratch
    return min(phys - (16 << 20), 110 << 20)     # v5e / v6e (128 MiB physical)


def _vmem_limit_bytes(nb, S, D, M, prep, single_buffer):
    f32, b16 = 4, 2
    wmult = 1 if single_buffer else 2
    weights = wmult * sum(int(prep[k].size) * prep[k].dtype.itemsize for k in _PREP_KEYS)
    rows = nb * S
    act = 2 * 2 * nb * S * D * f32               # x in + out, double-buffered
    scratch = nb * S * (3 * D + D) * b16         # qkv + attn bf16 scratches
    tmp = rows * (3 * D + M + 8 * D) * f32 + 4 * S * S * f32
    est = weights + act + scratch + tmp + (4 << 20)
    cap = _vmem_cap_bytes()
    # TODO(synk): if est > cap (production ViT-L/H widths on v7x), tile
    # wqkv/w1/w2 over an extra 'arbitrary' K grid axis instead of keeping them
    # fully resident.
    return int(max(16 << 20, min(est, cap)))


def residual_attention_block(x_bsd, prep, *, num_heads, eps=1e-5, nb=None,
                             single_buffer=True):
    """One ResidualAttentionBlock on (B, S, D) activations; the grid iterates
    over packed batch blocks of nb elements ('parallel')."""
    B, S, D = x_bsd.shape
    M = prep["w1"].shape[1]
    if nb is None:
        nb = _pick_batch_block(B, S)
    assert B % nb == 0

    def const(shape):
        n = len(shape)
        if single_buffer:
            # constant index_map across the grid -> single-buffer the operand
            return pl.BlockSpec(shape, lambda b: (0,) * n,
                                pipeline_mode=pl.Buffered(1))
        return pl.BlockSpec(shape, lambda b: (0,) * n)

    in_specs = [
        pl.BlockSpec((nb, S, D), lambda b: (b, 0, 0)),   # packed batch slab
        const((1, D)), const((1, D)),                    # ln_1 gamma, beta
        const((D, 3 * D)), const((1, 3 * D)),            # fused attn in_proj (q|k|v)
        const((D, D)), const((1, D)),                    # attn out_proj
        const((1, D)), const((1, D)),                    # ln_2 gamma, beta
        const((D, M)), const((1, M)),                    # mlp.c_fc
        const((M, D)), const((1, D)),                    # mlp.c_proj
    ]
    kernel = functools.partial(resblock_kernel, num_heads=num_heads, eps=eps,
                               erf=_erf_fn())
    # TODO(synk): for long sequences (S >= 512) add a flash-style KV-tile loop
    # instead of materializing per-head (S, S) scores; at ViT sequence lengths
    # they fit VMEM comfortably.
    return pl.pallas_call(
        kernel,
        out_shape=jax.ShapeDtypeStruct((B, S, D), x_bsd.dtype),
        grid=(B // nb,),
        in_specs=in_specs,
        out_specs=pl.BlockSpec((nb, S, D), lambda b: (b, 0, 0)),
        scratch_shapes=[pltpu.VMEM((nb, S, 3 * D), jnp.bfloat16),
                        pltpu.VMEM((nb, S, D), jnp.bfloat16)],
        compiler_params=pltpu.CompilerParams(
            dimension_semantics=("parallel",),
            vmem_limit_bytes=_vmem_limit_bytes(nb, S, D, M, prep, single_buffer)),
    )(x_bsd, prep["ln1_g"], prep["ln1_b"],
      prep["wqkv"], prep["bqkv"], prep["wo"], prep["bo"],
      prep["ln2_g"], prep["ln2_b"],
      prep["w1"], prep["b1"], prep["w2"], prep["b2"])


def transformer_forward(x_sbd, prepared_layers, *, num_heads, eps=1e-5):
    """PyTorch-equivalent Transformer.forward; x_sbd: (S, B, D) seq-first.
    One transpose to batch-major per forward (and one back), nothing per layer."""
    S, B, D = x_sbd.shape
    hd = D // num_heads
    assert D % num_heads == 0
    assert D % 128 == 0, "d_model must be lane-dense (multiple of 128)"
    assert hd % 128 == 0 or 128 % hd == 0, "head_dim must divide 128 or be a multiple of 128"
    x = jnp.transpose(x_sbd, (1, 0, 2)).astype(jnp.float32)     # (B, S, D)
    nb = _pick_batch_block(B, S)
    single = _supports_single_buffering()
    # TODO(synk): use_checkpoint only changes gradient rematerialisation, not
    # the forward math, so it is intentionally not modeled here.
    for prep in prepared_layers:
        x = residual_attention_block(x, prep, num_heads=num_heads, eps=eps,
                                     nb=nb, single_buffer=single)
    return jnp.transpose(x, (1, 0, 2))


# --------------------------- deterministic params ---------------------------

def init_params(key, width, d_mlp, layers):
    """Weights stored pre-transposed so the math is `x @ W + b`
    (equivalent to torch Linear / MHA in_proj with W_torch = W.T)."""
    params = []
    for i in range(layers):
        ks = jax.random.split(jax.random.fold_in(key, i), 8)

        def nrm(k, shape, scale=0.02):
            return (scale * jax.random.normal(k, shape)).astype(jnp.float32)

        params.append(dict(
            ln1_g=jnp.ones((1, width), jnp.float32),
            ln1_b=jnp.zeros((1, width), jnp.float32),
            wq=nrm(ks[0], (width, width)),
            wk=nrm(ks[1], (width, width)),
            wv=nrm(ks[2], (width, width)),
            bq=jnp.zeros((1, width), jnp.float32),
            bk=jnp.zeros((1, width), jnp.float32),
            bv=jnp.zeros((1, width), jnp.float32),
            wo=nrm(ks[3], (width, width)),
            bo=jnp.zeros((1, width), jnp.float32),
            ln2_g=jnp.ones((1, width), jnp.float32),
            ln2_b=jnp.zeros((1, width), jnp.float32),
            w1=nrm(ks[4], (width, d_mlp)),
            b1=nrm(ks[5], (1, d_mlp)),
            w2=nrm(ks[6], (d_mlp, width)),
            b2=nrm(ks[7], (1, width)),
        ))
    return params


# --------------------------- fp32 reference (XLA) ----------------------------

def _reference_forward(x_sbd, layer_params, *, num_heads, eps=1e-5):
    x = x_sbd.astype(jnp.float32)
    S, B, D = x.shape
    hd = D // num_heads
    scale = 1.0 / float(hd) ** 0.5

    def ln(v, g, b):
        mu = v.mean(-1, keepdims=True)
        var = ((v - mu) ** 2).mean(-1, keepdims=True)
        return (v - mu) * jax.lax.rsqrt(var + eps) * g + b

    for p in layer_params:
        h = ln(x, p["ln1_g"], p["ln1_b"])
        q = h @ p["wq"] + p["bq"]
        k = h @ p["wk"] + p["bk"]
        v = h @ p["wv"] + p["bv"]
        qh = q.reshape(S, B, num_heads, hd)
        kh = k.reshape(S, B, num_heads, hd)
        vh = v.reshape(S, B, num_heads, hd)
        s = jnp.einsum("qbhd,kbhd->bhqk", qh, kh) * scale
        pattn = jax.nn.softmax(s, axis=-1)
        ctx = jnp.einsum("bhqk,kbhd->qbhd", pattn, vh).reshape(S, B, D)
        x = x + (ctx @ p["wo"] + p["bo"])
        h2 = ln(x, p["ln2_g"], p["ln2_b"])
        f = h2 @ p["w1"] + p["b1"]
        f = 0.5 * f * (1.0 + jax.lax.erf(f * _SQRT_HALF))
        x = x + (f @ p["w2"] + p["b2"])
    return x


if __name__ == "__main__":
    # seq, batch, width, heads, d_mlp, layers — lane-dense (D, M multiples of 128)
    S, B, D, H, M, L = 16, 8, 128, 4, 256, 2
    key = jax.random.PRNGKey(0)
    kx, kp = jax.random.split(key)
    x = jax.random.normal(kx, (S, B, D), dtype=jnp.float32)   # seq-first, like PyTorch
    params = init_params(kp, D, M, L)
    # fused bf16 weights built ONCE (hoisted out of the forward loop)
    prepared = prepare_params(params, H)

    out = transformer_forward(x, prepared, num_heads=H)
    out = jax.block_until_ready(out)
    assert out.shape == (S, B, D) and out.dtype == jnp.float32

    # Loose tolerance: kernel uses bf16 MXU operands (fp32 accumulation) and an
    # approximate softmax reciprocal; reference is pure fp32 XLA.
    ref = _reference_forward(x, params, num_heads=H)
    rel_err = float(jnp.max(jnp.abs(out - ref)) / (jnp.max(jnp.abs(ref)) + 1e-6))
    assert rel_err < 5e-2, f"mismatch vs fp32 reference: rel err {rel_err}"
    print("KERNEL_OK")
</pallas_src>

<mosaic_0001>
module attributes {stable_mosaic.version = 11 : i64} {
  func.func @probe_kernel(%arg0: i32, %arg1: memref<8x128xf32, #tpu.memory_space<vmem>>, %arg2: memref<8x128xf32, #tpu.memory_space<vmem>>, %arg3: memref<8x128xf32, #tpu.memory_space<vmem>>) attributes {dimension_semantics = [#tpu.dimension_semantics<arbitrary>], iteration_bounds = array<i64: 2>, scalar_prefetch = 0 : i64, scratch_operands = 0 : i64, tpu.core_type = #tpu.core_type<tc>, window_params = [{pipeline_mode = #tpu.pipeline_mode<synchronous>, transform_indices = @transform_0, window_bounds = array<i64: 8, 128>}, {pipeline_mode = #tpu.pipeline_mode<synchronous>, transform_indices = @transform_1, window_bounds = array<i64: 8, 128>}, {pipeline_mode = #tpu.pipeline_mode<synchronous>, transform_indices = @transform_2, window_bounds = array<i64: 8, 128>}]} {
    %c0 = arith.constant 0 : index
    %c0_0 = arith.constant 0 : index
    %0 = vector.load %arg1[%c0, %c0_0] : memref<8x128xf32, #tpu.memory_space<vmem>>, vector<8x128xf32>
    %c0_1 = arith.constant 0 : index
    %c0_2 = arith.constant 0 : index
    %1 = vector.load %arg2[%c0_1, %c0_2] : memref<8x128xf32, #tpu.memory_space<vmem>>, vector<8x128xf32>
    %2 = arith.addf %0, %1 : vector<8x128xf32>
    %c0_3 = arith.constant 0 : index
    %c0_4 = arith.constant 0 : index
    %3 = vector.load %arg3[%c0_3, %c0_4] : memref<8x128xf32, #tpu.memory_space<vmem>>, vector<8x128xf32>
    tpu.vector_store %arg3[%c0_3, %c0_4], %2 {strides = array<i32>} : memref<8x128xf32, #tpu.memory_space<vmem>>, vector<8x128xf32>,
    return
  }
  func.func @transform_0(%arg0: i32) -> (i32, i32) {
    %c0_i32 = arith.constant 0 : i32
    %c0_i32_0 = arith.constant 0 : i32
    %c0_i32_1 = arith.constant 0 : i32
    return %c0_i32, %c0_i32_0 : i32, i32
  }
  func.func @transform_1(%arg0: i32) -> (i32, i32) {
    %c0_i32 = arith.constant 0 : i32
    %c0_i32_0 = arith.constant 0 : i32
    %c0_i32_1 = arith.constant 0 : i32
    return %c0_i32, %c0_i32_0 : i32, i32
  }
  func.func @transform_2(%arg0: i32) -> (i32, i32) {
    %c0_i32 = arith.constant 0 : i32
    %c0_i32_0 = arith.constant 0 : i32
    %c0_i32_1 = arith.constant 0 : i32
    return %c0_i32, %c0_i32_0 : i32, i32
  }
}

module attributes {stable_mosaic.version = 11 : i64} {
  func.func @probe_kernel(%arg0: memref<8x128xf32, #tpu.memory_space<vmem>>, %arg1: memref<8x128xf32, #tpu.memory_space<vmem>>) attributes {dimension_semantics = [], scalar_prefetch = 0 : i64, scratch_operands = 0 : i64, tpu.core_type = #tpu.core_type<tc>} {
    %c0 = arith.constant 0 : index
    %c0_0 = arith.constant 0 : index
    %0 = vector.load %arg0[%c0, %c0_0] : memref<8x128xf32, #tpu.memory_space<vmem>>, vector<8x128xf32>
    %1 = math.erf %0 : vector<8x128xf32>
    %c0_1 = arith.constant 0 : index
    %c0_2 = arith.constant 0 : index
    %2 = vector.load %arg1[%c0_1, %c0_2] : memref<8x128xf32, #tpu.memory_space<vmem>>, vector<8x128xf32>
    tpu.vector_store %arg1[%c0_1, %c0_2], %1 {strides = array<i32>} : memref<8x128xf32, #tpu.memory_space<vmem>>, vector<8x128xf32>,
    return
  }
}

module attributes {stable_mosaic.version = 11 : i64} {
  func.func @resblock_kernel(%arg0: i32, %arg1: memref<4x16x128xf32, #tpu.memory_space<vmem>>, %arg2: memref<1x128xf32, #tpu.memory_space<vmem>>, %arg3: memref<1x128xf32, #tpu.memory_space<vmem>>, %arg4: memref<128x384xbf16, #tpu.memory_space<vmem>>, %arg5: memref<1x384xf32, #tpu.memory_space<vmem>>, %arg6: memref<128x128xbf16, #tpu.memory_space<vmem>>, %arg7: memref<1x128xf32, #tpu.memory_space<vmem>>, %arg8: memref<1x128xf32, #tpu.memory_space<vmem>>, %arg9: memref<1x128xf32, #tpu.memory_space<vmem>>, %arg10: memref<128x256xbf16, #tpu.memory_space<vmem>>, %arg11: memref<1x256xf32, #tpu.memory_space<vmem>>, %arg12: memref<256x128xbf16, #tpu.memory_space<vmem>>, %arg13: memref<1x128xf32, #tpu.memory_space<vmem>>, %arg14: memref<4x16x128xf32, #tpu.memory_space<vmem>>, %arg15: memref<4x16x384xbf16, #tpu.memory_space<vmem>>, %arg16: memref<4x16x128xbf16, #tpu.memory_space<vmem>>) attributes {dimension_semantics = [#tpu.dimension_semantics<parallel>], iteration_bounds = array<i64: 2>, scalar_prefetch = 0 : i64, scratch_operands = 2 : i64, tpu.core_type = #tpu.core_type<tc>, window_params = [{transform_indices = @transform_0, window_bounds = array<i64: 4, 16, 128>}, {pipeline_mode = #tpu.pipeline_mode<synchronous>, transform_indices = @transform_1, window_bounds = array<i64: 1, 128>}, {pipeline_mode = #tpu.pipeline_mode<synchronous>, transform_indices = @transform_2, window_bounds = array<i64: 1, 128>}, {pipeline_mode = #tpu.pipeline_mode<synchronous>, transform_indices = @transform_3, window_bounds = array<i64: 128, 384>}, {pipeline_mode = #tpu.pipeline_mode<synchronous>, transform_indices = @transform_4, window_bounds = array<i64: 1, 384>}, {pipeline_mode = #tpu.pipeline_mode<synchronous>, transform_indices = @transform_5, window_bounds = array<i64: 128, 128>}, {pipeline_mode = #tpu.pipeline_mode<synchronous>, transform_indices = @transform_6, window_bounds = array<i64: 1, 128>}, {pipeline_mode = #tpu.pipeline_mode<synchronous>, transform_indices = @transform_7, window_bounds = array<i64: 1, 128>}, {pipeline_mode = #tpu.pipeline_mode<synchronous>, transform_indices = @transform_8, window_bounds = array<i64: 1, 128>}, {pipeline_mode = #tpu.pipeline_mode<synchronous>, transform_indices = @transform_9, window_bounds = array<i64: 128, 256>}, {pipeline_mode = #tpu.pipeline_mode<synchronous>, transform_indices = @transform_10, window_bounds = array<i64: 1, 256>}, {pipeline_mode = #tpu.pipeline_mode<synchronous>, transform_indices = @transform_11, window_bounds = array<i64: 256, 128>}, {pipeline_mode = #tpu.pipeline_mode<synchronous>, transform_indices = @transform_12, window_bounds = array<i64: 1, 128>}, {transform_indices = @transform_13, window_bounds = array<i64: 4, 16, 128>}]} {
    %c0 = arith.constant 0 : index
    %c0_0 = arith.constant 0 : index
    %c0_1 = arith.constant 0 : index
    %0 = vector.load %arg1[%c0, %c0_0, %c0_1] : memref<4x16x128xf32, #tpu.memory_space<vmem>>, vector<4x16x128xf32>
    %1 = vector.shape_cast %0 : vector<4x16x128xf32> to vector<64x128xf32>
    %c0_2 = arith.constant 0 : index
    %c0_3 = arith.constant 0 : index
    %2 = vector.load %arg2[%c0_2, %c0_3] : memref<1x128xf32, #tpu.memory_space<vmem>>, vector<1x128xf32>
    %c0_4 = arith.constant 0 : index
    %c0_5 = arith.constant 0 : index
    %3 = vector.load %arg3[%c0_4, %c0_5] : memref<1x128xf32, #tpu.memory_space<vmem>>, vector<1x128xf32>
    %cst = arith.constant dense<0.000000e+00> : vector<64xf32>
    %4 = vector.multi_reduction <add>, %1, %cst [1] : vector<64x128xf32> to vector<64xf32>
    %5 = vector.shape_cast %4 : vector<64xf32> to vector<64x1xf32>
    %cst_6 = arith.constant 1.280000e+02 : f32
    %6 = vector.broadcast %cst_6 : f32 to vector<64x1xf32>
    %7 = arith.divf %5, %6 : vector<64x1xf32>
    %8 = vector.broadcast %7 : vector<64x1xf32> to vector<64x128xf32>
    %9 = arith.subf %1, %8 : vector<64x128xf32>
    %10 = arith.mulf %9, %9 : vector<64x128xf32>
    %cst_7 = arith.constant dense<0.000000e+00> : vector<64xf32>
    %11 = vector.multi_reduction <add>, %10, %cst_7 [1] : vector<64x128xf32> to vector<64xf32>
    %12 = vector.shape_cast %11 : vector<64xf32> to vector<64x1xf32>
    %cst_8 = arith.constant 1.280000e+02 : f32
    %13 = vector.broadcast %cst_8 : f32 to vector<64x1xf32>
    %14 = arith.divf %12, %13 : vector<64x1xf32>
    %cst_9 = arith.constant 9.99999974E-6 : f32
    %15 = vector.broadcast %cst_9 : f32 to vector<64x1xf32>
    %16 = arith.addf %14, %15 : vector<64x1xf32>
    %17 = math.rsqrt %16 : vector<64x1xf32>
    %18 = vector.broadcast %17 : vector<64x1xf32> to vector<64x128xf32>
    %19 = arith.mulf %9, %18 : vector<64x128xf32>
    %20 = vector.broadcast %2 : vector<1x128xf32> to vector<64x128xf32>
    %21 = arith.mulf %19, %20 : vector<64x128xf32>
    %22 = vector.broadcast %3 : vector<1x128xf32> to vector<64x128xf32>
    %23 = arith.addf %21, %22 : vector<64x128xf32>
    %24 = arith.truncf %23 : vector<64x128xf32> to vector<64x128xbf16>
    %c0_10 = arith.constant 0 : index
    %c0_11 = arith.constant 0 : index
    %25 = vector.load %arg4[%c0_10, %c0_11] : memref<128x384xbf16, #tpu.memory_space<vmem>>, vector<128x384xbf16>
    %cst_12 = arith.constant dense<0.000000e+00> : vector<64x384xf32>
    %26 = tpu.matmul %24, %25, %cst_12 {dimension_numbers = #tpu.dot_dimension_numbers<[1], [0], [0], [1], [0, 0, 1, 1], [], []>} : vector<64x128xbf16>, vector<128x384xbf16>, vector<64x384xf32> -> vector<64x384xf32>
    %c0_13 = arith.constant 0 : index
    %c0_14 = arith.constant 0 : index
    %27 = vector.load %arg5[%c0_13, %c0_14] : memref<1x384xf32, #tpu.memory_space<vmem>>, vector<1x384xf32>
    %28 = vector.broadcast %27 : vector<1x384xf32> to vector<64x384xf32>
    %29 = arith.addf %26, %28 : vector<64x384xf32>
    %30 = vector.shape_cast %29 : vector<64x384xf32> to vector<4x16x384xf32>
    %31 = arith.truncf %30 : vector<4x16x384xf32> to vector<4x16x384xbf16>
    %c0_15 = arith.constant 0 : index
    %c0_16 = arith.constant 0 : index
    %c0_17 = arith.constant 0 : index
    %32 = vector.load %arg15[%c0_15, %c0_16, %c0_17] : memref<4x16x384xbf16, #tpu.memory_space<vmem>>, vector<4x16x384xbf16>
    tpu.vector_store %arg15[%c0_15, %c0_16, %c0_17], %31 {strides = array<i32>} : memref<4x16x384xbf16, #tpu.memory_space<vmem>>, vector<4x16x384xbf16>,
    %c0_i32 = arith.constant 0 : i32
    %c4_i32 = arith.constant 4 : i32
    %33 = arith.addi %c0_i32, %c4_i32 : i32
    %c1_i32 = arith.constant 1 : i32
    scf.for %arg17 = %c0_i32 to %33 step %c1_i32  : i32 {
      %c1_i32_65 = arith.constant 1 : i32
      %120 = arith.muli %arg17, %c1_i32_65 : i32
      %c0_i32_66 = arith.constant 0 : i32
      %121 = arith.addi %c0_i32_66, %120 : i32
      %122 = arith.index_cast %121 : i32 to index
      %c0_67 = arith.constant 0 : index
      %c0_68 = arith.constant 0 : index
      %123 = vector.load %arg15[%122, %c0_67, %c0_68] : memref<4x16x384xbf16, #tpu.memory_space<vmem>>, vector<1x16x384xbf16>
      %124 = vector.shape_cast %123 : vector<1x16x384xbf16> to vector<16x384xbf16>
      %125 = vector.extract_strided_slice %124 {offsets = [0, 0], sizes = [16, 32], strides = [1, 1]} : vector<16x384xbf16> to vector<16x32xbf16>
      %126 = vector.extract_strided_slice %124 {offsets = [0, 128], sizes = [16, 32], strides = [1, 1]} : vector<16x384xbf16> to vector<16x32xbf16>
      %127 = vector.extract_strided_slice %124 {offsets = [0, 256], sizes = [16, 32], strides = [1, 1]} : vector<16x384xbf16> to vector<16x32xbf16>
      %cst_69 = arith.constant dense<0.000000e+00> : vector<16x16xf32>
      %128 = tpu.matmul %125, %126, %cst_69 {dimension_numbers = #tpu.dot_dimension_numbers<[1], [1], [0], [0], [0, 0, 1, 0], [], []>} : vector<16x32xbf16>, vector<16x32xbf16>, vector<16x16xf32> -> vector<16x16xf32>
      %cst_70 = arith.constant dense<0xFF800000> : vector<16xf32>
      %129 = vector.multi_reduction <maximumf>, %128, %cst_70 [1] : vector<16x16xf32> to vector<16xf32>
      %130 = vector.shape_cast %129 : vector<16xf32> to vector<16x1xf32>
      %131 = vector.broadcast %130 : vector<16x1xf32> to vector<16x16xf32>
      %132 = arith.subf %128, %131 : vector<16x16xf32>
      %133 = math.exp %132 : vector<16x16xf32>
      %cst_71 = arith.constant dense<0.000000e+00> : vector<16xf32>
      %134 = vector.multi_reduction <add>, %133, %cst_71 [1] : vector<16x16xf32> to vector<16xf32>
      %135 = vector.shape_cast %134 : vector<16xf32> to vector<16x1xf32>
      %136 = tpu.reciprocal %135 {approx = true} : vector<16x1xf32> -> vector<16x1xf32>
      %137 = vector.broadcast %136 : vector<16x1xf32> to vector<16x16xf32>
      %138 = arith.mulf %133, %137 : vector<16x16xf32>
      %139 = arith.truncf %138 : vector<16x16xf32> to vector<16x16xbf16>
      %cst_72 = arith.constant dense<0.000000e+00> : vector<16x32xf32>
      %140 = tpu.matmul %139, %127, %cst_72 {dimension_numbers = #tpu.dot_dimension_numbers<[1], [0], [0], [1], [0, 0, 1, 1], [], []>} : vector<16x16xbf16>, vector<16x32xbf16>, vector<16x32xf32> -> vector<16x32xf32>
      %141 = vector.extract_strided_slice %124 {offsets = [0, 32], sizes = [16, 32], strides = [1, 1]} : vector<16x384xbf16> to vector<16x32xbf16>
      %142 = vector.extract_strided_slice %124 {offsets = [0, 160], sizes = [16, 32], strides = [1, 1]} : vector<16x384xbf16> to vector<16x32xbf16>
      %143 = vector.extract_strided_slice %124 {offsets = [0, 288], sizes = [16, 32], strides = [1, 1]} : vector<16x384xbf16> to vector<16x32xbf16>
      %cst_73 = arith.constant dense<0.000000e+00> : vector<16x16xf32>
      %144 = tpu.matmul %141, %142, %cst_73 {dimension_numbers = #tpu.dot_dimension_numbers<[1], [1], [0], [0], [0, 0, 1, 0], [], []>} : vector<16x32xbf16>, vector<16x32xbf16>, vector<16x16xf32> -> vector<16x16xf32>
      %cst_74 = arith.constant dense<0xFF800000> : vector<16xf32>
      %145 = vector.multi_reduction <maximumf>, %144, %cst_74 [1] : vector<16x16xf32> to vector<16xf32>
      %146 = vector.shape_cast %145 : vector<16xf32> to vector<16x1xf32>
      %147 = vector.broadcast %146 : vector<16x1xf32> to vector<16x16xf32>
      %148 = arith.subf %144, %147 : vector<16x16xf32>
      %149 = math.exp %148 : vector<16x16xf32>
      %cst_75 = arith.constant dense<0.000000e+00> : vector<16xf32>
      %150 = vector.multi_reduction <add>, %149, %cst_75 [1] : vector<16x16xf32> to vector<16xf32>
      %151 = vector.shape_cast %150 : vector<16xf32> to vector<16x1xf32>
      %152 = tpu.reciprocal %151 {approx = true} : vector<16x1xf32> -> vector<16x1xf32>
      %153 = vector.broadcast %152 : vector<16x1xf32> to vector<16x16xf32>
      %154 = arith.mulf %149, %153 : vector<16x16xf32>
      %155 = arith.truncf %154 : vector<16x16xf32> to vector<16x16xbf16>
      %cst_76 = arith.constant dense<0.000000e+00> : vector<16x32xf32>
      %156 = tpu.matmul %155, %143, %cst_76 {dimension_numbers = #tpu.dot_dimension_numbers<[1], [0], [0], [1], [0, 0, 1, 1], [], []>} : vector<16x16xbf16>, vector<16x32xbf16>, vector<16x32xf32> -> vector<16x32xf32>
      %157 = vector.extract_strided_slice %124 {offsets = [0, 64], sizes = [16, 32], strides = [1, 1]} : vector<16x384xbf16> to vector<16x32xbf16>
      %158 = vector.extract_strided_slice %124 {offsets = [0, 192], sizes = [16, 32], strides = [1, 1]} : vector<16x384xbf16> to vector<16x32xbf16>
      %159 = vector.extract_strided_slice %124 {offsets = [0, 320], sizes = [16, 32], strides = [1, 1]} : vector<16x384xbf16> to vector<16x32xbf16>
      %cst_77 = arith.constant dense<0.000000e+00> : vector<16x16xf32>
      %160 = tpu.matmul %157, %158, %cst_77 {dimension_numbers = #tpu.dot_dimension_numbers<[1], [1], [0], [0], [0, 0, 1, 0], [], []>} : vector<16x32xbf16>, vector<16x32xbf16>, vector<16x16xf32> -> vector<16x16xf32>
      %cst_78 = arith.constant dense<0xFF800000> : vector<16xf32>
      %161 = vector.multi_reduction <maximumf>, %160, %cst_78 [1] : vector<16x16xf32> to vector<16xf32>
      %162 = vector.shape_cast %161 : vector<16xf32> to vector<16x1xf32>
      %163 = vector.broadcast %162 : vector<16x1xf32> to vector<16x16xf32>
      %164 = arith.subf %160, %163 : vector<16x16xf32>
      %165 = math.exp %164 : vector<16x16xf32>
      %cst_79 = arith.constant dense<0.000000e+00> : vector<16xf32>
      %166 = vector.multi_reduction <add>, %165, %cst_79 [1] : vector<16x16xf32> to vector<16xf32>
      %167 = vector.shape_cast %166 : vector<16xf32> to vector<16x1xf32>
      %168 = tpu.reciprocal %167 {approx = true} : vector<16x1xf32> -> vector<16x1xf32>
      %169 = vector.broadcast %168 : vector<16x1xf32> to vector<16x16xf32>
      %170 = arith.mulf %165, %169 : vector<16x16xf32>
      %171 = arith.truncf %170 : vector<16x16xf32> to vector<16x16xbf16>
      %cst_80 = arith.constant dense<0.000000e+00> : vector<16x32xf32>
      %172 = tpu.matmul %171, %159, %cst_80 {dimension_numbers = #tpu.dot_dimension_numbers<[1], [0], [0], [1], [0, 0, 1, 1], [], []>} : vector<16x16xbf16>, vector<16x32xbf16>, vector<16x32xf32> -> vector<16x32xf32>
      %173 = vector.extract_strided_slice %124 {offsets = [0, 96], sizes = [16, 32], strides = [1, 1]} : vector<16x384xbf16> to vector<16x32xbf16>
      %174 = vector.extract_strided_slice %124 {offsets = [0, 224], sizes = [16, 32], strides = [1, 1]} : vector<16x384xbf16> to vector<16x32xbf16>
      %175 = vector.extract_strided_slice %124 {offsets = [0, 352], sizes = [16, 32], strides = [1, 1]} : vector<16x384xbf16> to vector<16x32xbf16>
      %cst_81 = arith.constant dense<0.000000e+00> : vector<16x16xf32>
      %176 = tpu.matmul %173, %174, %cst_81 {dimension_numbers = #tpu.dot_dimension_numbers<[1], [1], [0], [0], [0, 0, 1, 0], [], []>} : vector<16x32xbf16>, vector<16x32xbf16>, vector<16x16xf32> -> vector<16x16xf32>
      %cst_82 = arith.constant dense<0xFF800000> : vector<16xf32>
      %177 = vector.multi_reduction <maximumf>, %176, %cst_82 [1] : vector<16x16xf32> to vector<16xf32>
      %178 = vector.shape_cast %177 : vector<16xf32> to vector<16x1xf32>
      %179 = vector.broadcast %178 : vector<16x1xf32> to vector<16x16xf32>
      %180 = arith.subf %176, %179 : vector<16x16xf32>
      %181 = math.exp %180 : vector<16x16xf32>
      %cst_83 = arith.constant dense<0.000000e+00> : vector<16xf32>
      %182 = vector.multi_reduction <add>, %181, %cst_83 [1] : vector<16x16xf32> to vector<16xf32>
      %183 = vector.shape_cast %182 : vector<16xf32> to vector<16x1xf32>
      %184 = tpu.reciprocal %183 {approx = true} : vector<16x1xf32> -> vector<16x1xf32>
      %185 = vector.broadcast %184 : vector<16x1xf32> to vector<16x16xf32>
      %186 = arith.mulf %181, %185 : vector<16x16xf32>
      %187 = arith.truncf %186 : vector<16x16xf32> to vector<16x16xbf16>
      %cst_84 = arith.constant dense<0.000000e+00> : vector<16x32xf32>
      %188 = tpu.matmul %187, %175, %cst_84 {dimension_numbers = #tpu.dot_dimension_numbers<[1], [0], [0], [1], [0, 0, 1, 1], [], []>} : vector<16x16xbf16>, vector<16x32xbf16>, vector<16x32xf32> -> vector<16x32xf32>
      %189 = tpu.concatenate %140, %156, %172, %188 in 1 : vector<16x32xf32>, vector<16x32xf32>, vector<16x32xf32>, vector<16x32xf32> -> vector<16x128xf32>
      %190 = arith.truncf %189 : vector<16x128xf32> to vector<16x128xbf16>
      %191 = arith.index_cast %121 : i32 to index
      %c0_85 = arith.constant 0 : index
      %c0_86 = arith.constant 0 : index
      %192 = vector.load %arg16[%191, %c0_85, %c0_86] : memref<4x16x128xbf16, #tpu.memory_space<vmem>>, vector<1x16x128xbf16>
      %193 = vector.shape_cast %192 : vector<1x16x128xbf16> to vector<16x128xbf16>
      %194 = vector.shape_cast %190 : vector<16x128xbf16> to vector<1x16x128xbf16>
      tpu.vector_store %arg16[%191, %c0_85, %c0_86], %194 {strides = array<i32>} : memref<4x16x128xbf16, #tpu.memory_space<vmem>>, vector<1x16x128xbf16>,
    }
    %c4_i32_18 = arith.constant 4 : i32
    %c0_19 = arith.constant 0 : index
    %c0_20 = arith.constant 0 : index
    %c0_21 = arith.constant 0 : index
    %34 = vector.load %arg16[%c0_19, %c0_20, %c0_21] : memref<4x16x128xbf16, #tpu.memory_space<vmem>>, vector<4x16x128xbf16>
    %35 = vector.shape_cast %34 : vector<4x16x128xbf16> to vector<64x128xbf16>
    %c0_22 = arith.constant 0 : index
    %c0_23 = arith.constant 0 : index
    %36 = vector.load %arg6[%c0_22, %c0_23] : memref<128x128xbf16, #tpu.memory_space<vmem>>, vector<128x128xbf16>
    %cst_24 = arith.constant dense<0.000000e+00> : vector<64x128xf32>
    %37 = tpu.matmul %35, %36, %cst_24 {dimension_numbers = #tpu.dot_dimension_numbers<[1], [0], [0], [1], [0, 0, 1, 1], [], []>} : vector<64x128xbf16>, vector<128x128xbf16>, vector<64x128xf32> -> vector<64x128xf32>
    %c0_25 = arith.constant 0 : index
    %c0_26 = arith.constant 0 : index
    %38 = vector.load %arg7[%c0_25, %c0_26] : memref<1x128xf32, #tpu.memory_space<vmem>>, vector<1x128xf32>
    %39 = vector.broadcast %38 : vector<1x128xf32> to vector<64x128xf32>
    %40 = arith.addf %37, %39 : vector<64x128xf32>
    %41 = arith.addf %1, %40 : vector<64x128xf32>
    %c0_27 = arith.constant 0 : index
    %c0_28 = arith.constant 0 : index
    %42 = vector.load %arg8[%c0_27, %c0_28] : memref<1x128xf32, #tpu.memory_space<vmem>>, vector<1x128xf32>
    %c0_29 = arith.constant 0 : index
    %c0_30 = arith.constant 0 : index
    %43 = vector.load %arg9[%c0_29, %c0_30] : memref<1x128xf32, #tpu.memory_space<vmem>>, vector<1x128xf32>
    %cst_31 = arith.constant dense<0.000000e+00> : vector<64xf32>
    %44 = vector.multi_reduction <add>, %41, %cst_31 [1] : vector<64x128xf32> to vector<64xf32>
    %45 = vector.shape_cast %44 : vector<64xf32> to vector<64x1xf32>
    %cst_32 = arith.constant 1.280000e+02 : f32
    %46 = vector.broadcast %cst_32 : f32 to vector<64x1xf32>
    %47 = arith.divf %45, %46 : vector<64x1xf32>
    %48 = vector.broadcast %47 : vector<64x1xf32> to vector<64x128xf32>
    %49 = arith.subf %41, %48 : vector<64x128xf32>
    %50 = arith.mulf %49, %49 : vector<64x128xf32>
    %cst_33 = arith.constant dense<0.000000e+00> : vector<64xf32>
    %51 = vector.multi_reduction <add>, %50, %cst_33 [1] : vector<64x128xf32> to vector<64xf32>
    %52 = vector.shape_cast %51 : vector<64xf32> to vector<64x1xf32>
    %cst_34 = arith.constant 1.280000e+02 : f32
    %53 = vector.broadcast %cst_34 : f32 to vector<64x1xf32>
    %54 = arith.divf %52, %53 : vector<64x1xf32>
    %cst_35 = arith.constant 9.99999974E-6 : f32
    %55 = vector.broadcast %cst_35 : f32 to vector<64x1xf32>
    %56 = arith.addf %54, %55 : vector<64x1xf32>
    %57 = math.rsqrt %56 : vector<64x1xf32>
    %58 = vector.broadcast %57 : vector<64x1xf32> to vector<64x128xf32>
    %59 = arith.mulf %49, %58 : vector<64x128xf32>
    %60 = vector.broadcast %42 : vector<1x128xf32> to vector<64x128xf32>
    %61 = arith.mulf %59, %60 : vector<64x128xf32>
    %62 = vector.broadcast %43 : vector<1x128xf32> to vector<64x128xf32>
    %63 = arith.addf %61, %62 : vector<64x128xf32>
    %64 = arith.truncf %63 : vector<64x128xf32> to vector<64x128xbf16>
    %c0_36 = arith.constant 0 : index
    %c0_37 = arith.constant 0 : index
    %65 = vector.load %arg10[%c0_36, %c0_37] : memref<128x256xbf16, #tpu.memory_space<vmem>>, vector<128x256xbf16>
    %cst_38 = arith.constant dense<0.000000e+00> : vector<64x256xf32>
    %66 = tpu.matmul %64, %65, %cst_38 {dimension_numbers = #tpu.dot_dimension_numbers<[1], [0], [0], [1], [0, 0, 1, 1], [], []>} : vector<64x128xbf16>, vector<128x256xbf16>, vector<64x256xf32> -> vector<64x256xf32>
    %c0_39 = arith.constant 0 : index
    %c0_40 = arith.constant 0 : index
    %67 = vector.load %arg11[%c0_39, %c0_40] : memref<1x256xf32, #tpu.memory_space<vmem>>, vector<1x256xf32>
    %68 = vector.broadcast %67 : vector<1x256xf32> to vector<64x256xf32>
    %69 = arith.addf %66, %68 : vector<64x256xf32>
    %cst_41 = arith.constant 5.000000e-01 : f32
    %70 = vector.broadcast %cst_41 : f32 to vector<64x256xf32>
    %71 = arith.mulf %70, %69 : vector<64x256xf32>
    %cst_42 = arith.constant 0.707106769 : f32
    %72 = vector.broadcast %cst_42 : f32 to vector<64x256xf32>
    %73 = arith.mulf %69, %72 : vector<64x256xf32>
    %cst_43 = arith.constant 0.000000e+00 : f32
    %74 = vector.broadcast %cst_43 : f32 to vector<64x256xf32>
    %75 = arith.cmpf oge, %73, %74 : vector<64x256xf32>
    %cst_44 = arith.constant 1.000000e+00 : f32
    %cst_45 = arith.constant -1.000000e+00 : f32
    %76 = vector.broadcast %cst_44 : f32 to vector<64x256xf32>
    %77 = vector.broadcast %cst_45 : f32 to vector<64x256xf32>
    %78 = arith.select %75, %76, %77 : vector<64x256xi1>, vector<64x256xf32>
    %79 = math.absf %73 : vector<64x256xf32>
    %cst_46 = arith.constant 0.327591091 : f32
    %80 = vector.broadcast %cst_46 : f32 to vector<64x256xf32>
    %81 = arith.mulf %80, %79 : vector<64x256xf32>
    %cst_47 = arith.constant 1.000000e+00 : f32
    %82 = vector.broadcast %cst_47 : f32 to vector<64x256xf32>
    %83 = arith.addf %82, %81 : vector<64x256xf32>
    %cst_48 = arith.constant 1.000000e+00 : f32
    %84 = vector.broadcast %cst_48 : f32 to vector<64x256xf32>
    %85 = arith.divf %84, %83 : vector<64x256xf32>
    %cst_49 = arith.constant 1.06140542 : f32
    %86 = vector.broadcast %cst_49 : f32 to vector<64x256xf32>
    %87 = arith.mulf %86, %85 : vector<64x256xf32>
    %cst_50 = arith.constant -1.45315206 : f32
    %88 = vector.broadcast %cst_50 : f32 to vector<64x256xf32>
    %89 = arith.addf %87, %88 : vector<64x256xf32>
    %90 = arith.mulf %89, %85 : vector<64x256xf32>
    %cst_51 = arith.constant 1.42141378 : f32
    %91 = vector.broadcast %cst_51 : f32 to vector<64x256xf32>
    %92 = arith.addf %90, %91 : vector<64x256xf32>
    %93 = arith.mulf %92, %85 : vector<64x256xf32>
    %cst_52 = arith.constant -0.284496725 : f32
    %94 = vector.broadcast %cst_52 : f32 to vector<64x256xf32>
    %95 = arith.addf %93, %94 : vector<64x256xf32>
    %96 = arith.mulf %95, %85 : vector<64x256xf32>
    %cst_53 = arith.constant 0.254829586 : f32
    %97 = vector.broadcast %cst_53 : f32 to vector<64x256xf32>
    %98 = arith.addf %96, %97 : vector<64x256xf32>
    %99 = arith.mulf %98, %85 : vector<64x256xf32>
    %cst_54 = arith.constant 0.000000e+00 : f32
    %100 = vector.broadcast %cst_54 : f32 to vector<64x256xf32>
    %101 = arith.subf %100, %79 : vector<64x256xf32>
    %102 = arith.mulf %101, %79 : vector<64x256xf32>
    %103 = math.exp %102 : vector<64x256xf32>
    %104 = arith.mulf %99, %103 : vector<64x256xf32>
    %cst_55 = arith.constant 1.000000e+00 : f32
    %105 = vector.broadcast %cst_55 : f32 to vector<64x256xf32>
    %106 = arith.subf %105, %104 : vector<64x256xf32>
    %107 = arith.mulf %78, %106 : vector<64x256xf32>
    %cst_56 = arith.constant 1.000000e+00 : f32
    %108 = vector.broadcast %cst_56 : f32 to vector<64x256xf32>
    %109 = arith.addf %108, %107 : vector<64x256xf32>
    %110 = arith.mulf %71, %109 : vector<64x256xf32>
    %111 = arith.truncf %110 : vector<64x256xf32> to vector<64x256xbf16>
    %c0_57 = arith.constant 0 : index
    %c0_58 = arith.constant 0 : index
    %112 = vector.load %arg12[%c0_57, %c0_58] : memref<256x128xbf16, #tpu.memory_space<vmem>>, vector<256x128xbf16>
    %cst_59 = arith.constant dense<0.000000e+00> : vector<64x128xf32>
    %113 = tpu.matmul %111, %112, %cst_59 {dimension_numbers = #tpu.dot_dimension_numbers<[1], [0], [0], [1], [0, 0, 1, 1], [], []>} : vector<64x256xbf16>, vector<256x128xbf16>, vector<64x128xf32> -> vector<64x128xf32>
    %c0_60 = arith.constant 0 : index
    %c0_61 = arith.constant 0 : index
    %114 = vector.load %arg13[%c0_60, %c0_61] : memref<1x128xf32, #tpu.memory_space<vmem>>, vector<1x128xf32>
    %115 = vector.broadcast %114 : vector<1x128xf32> to vector<64x128xf32>
    %116 = arith.addf %113, %115 : vector<64x128xf32>
    %117 = arith.addf %41, %116 : vector<64x128xf32>
    %118 = vector.shape_cast %117 : vector<64x128xf32> to vector<4x16x128xf32>
    %c0_62 = arith.constant 0 : index
    %c0_63 = arith.constant 0 : index
    %c0_64 = arith.constant 0 : index
    %119 = vector.load %arg14[%c0_62, %c0_63, %c0_64] : memref<4x16x128xf32, #tpu.memory_space<vmem>>, vector<4x16x128xf32>
    tpu.vector_store %arg14[%c0_62, %c0_63, %c0_64], %118 {strides = array<i32>} : memref<4x16x128xf32, #tpu.memory_space<vmem>>, vector<4x16x128xf32>,
    return
  }
  func.func @transform_0(%arg0: i32) -> (i32, i32, i32) {
    %c0_i32 = arith.constant 0 : i32
    %c0_i32_0 = arith.constant 0 : i32
    %c0_i32_1 = arith.constant 0 : i32
    return %arg0, %c0_i32, %c0_i32_0 : i32, i32, i32
  }
  func.func @transform_1(%arg0: i32) -> (i32, i32) {
    %c0_i32 = arith.constant 0 : i32
    %c0_i32_0 = arith.constant 0 : i32
    %c0_i32_1 = arith.constant 0 : i32
    return %c0_i32, %c0_i32_0 : i32, i32
  }
  func.func @transform_2(%arg0: i32) -> (i32, i32) {
    %c0_i32 = arith.constant 0 : i32
    %c0_i32_0 = arith.constant 0 : i32
    %c0_i32_1 = arith.constant 0 : i32
    return %c0_i32, %c0_i32_0 : i32, i32
  }
  func.func @transform_3(%arg0: i32) -> (i32, i32) {
    %c0_i32 = arith.constant 0 : i32
    %c0_i32_0 = arith.constant 0 : i32
    %c0_i32_1 = arith.constant 0 : i32
    return %c0_i32, %c0_i32_0 : i32, i32
  }
  func.func @transform_4(%arg0: i32) -> (i32, i32) {
    %c0_i32 = arith.constant 0 : i32
    %c0_i32_0 = arith.constant 0 : i32
    %c0_i32_1 = arith.constant 0 : i32
    return %c0_i32, %c0_i32_0 : i32, i32
  }
  func.func @transform_5(%arg0: i32) -> (i32, i32) {
    %c0_i32 = arith.constant 0 : i32
    %c0_i32_0 = arith.constant 0 : i32
    %c0_i32_1 = arith.constant 0 : i32
    return %c0_i32, %c0_i32_0 : i32, i32
  }
  func.func @transform_6(%arg0: i32) -> (i32, i32) {
    %c0_i32 = arith.constant 0 : i32
    %c0_i32_0 = arith.constant 0 : i32
    %c0_i32_1 = arith.constant 0 : i32
    return %c0_i32, %c0_i32_0 : i32, i32
  }
  func.func @transform_7(%arg0: i32) -> (i32, i32) {
    %c0_i32 = arith.constant 0 : i32
    %c0_i32_0 = arith.constant 0 : i32
    %c0_i32_1 = arith.constant 0 : i32
    return %c0_i32, %c0_i32_0 : i32, i32
  }
  func.func @transform_8(%arg0: i32) -> (i32, i32) {
    %c0_i32 = arith.constant 0 : i32
    %c0_i32_0 = arith.constant 0 : i32
    %c0_i32_1 = arith.constant 0 : i32
    return %c0_i32, %c0_i32_0 : i32, i32
  }
  func.func @transform_9(%arg0: i32) -> (i32, i32) {
    %c0_i32 = arith.constant 0 : i32
    %c0_i32_0 = arith.constant 0 : i32
    %c0_i32_1 = arith.constant 0 : i32
    return %c0_i32, %c0_i32_0 : i32, i32
  }
  func.func @transform_10(%arg0: i32) -> (i32, i32) {
    %c0_i32 = arith.constant 0 : i32
    %c0_i32_0 = arith.constant 0 : i32
    %c0_i32_1 = arith.constant 0 : i32
    return %c0_i32, %c0_i32_0 : i32, i32
  }
  func.func @transform_11(%arg0: i32) -> (i32, i32) {
    %c0_i32 = arith.constant 0 : i32
    %c0_i32_0 = arith.constant 0 : i32
    %c0_i32_1 = arith.constant 0 : i32
    return %c0_i32, %c0_i32_0 : i32, i32
  }
  func.func @transform_12(%arg0: i32) -> (i32, i32) {
    %c0_i32 = arith.constant 0 : i32
    %c0_i32_0 = arith.constant 0 : i32
    %c0_i32_1 = arith.constant 0 : i32
    return %c0_i32, %c0_i32_0 : i32, i32
  }
  func.func @transform_13(%arg0: i32) -> (i32, i32, i32) {
    %c0_i32 = arith.constant 0 : i32
    %c0_i32_0 = arith.constant 0 : i32
    %c0_i32_1 = arith.constant 0 : i32
    return %arg0, %c0_i32, %c0_i32_0 : i32, i32, i32
  }
}

</mosaic_0001>

<llo_original>
// kernel: tpu_custom_call.1
$region0: #{tpu_custom_call.1}
  #allocation0 [shape = 'u32[]', space=smem, size = 0x4, offset = 0x4, fixed_abs, tag = 'smem constant byte address 0x4 - core index']
  #allocation1 [shape = 'u32[72,128]{1,0:T(1,128)}', space=vmem, size = 0x9000, scoped, tag = 'internal scratch']
  %s0 = inlined_call_operand.hbm [shape: f32[8,128], index: 0, kind: input, shape index: {}]
  %s1 = inlined_call_operand.hbm [shape: f32[8,128], index: 1, kind: input, shape index: {}]
  %s2 = inlined_call_operand.hbm [shape: f32[8,128], index: 2, kind: output, shape index: {}]
  %s3 = sld [smem:[#allocation0]]
  $region49: #{tpu_custom_call.1} parent=0
    _
  %s5 = ssub.s32 1, %s3
  %s6 = scalar_select 0, %s5, %s3
  $region1: #{tpu_custom_call.1} parent=0
    #allocation2 [shape = 'u8[4096]{0}', space=vmem, size = 0x1000, scoped, tag = 'input window, operand 0, single buffered']
    #allocation3 [shape = 's32[2]{0}', space=sflag, size = 0x8, scoped, tag = 'scoped memory for tpu_custom_call.1']
    #allocation4 [shape = 's32[2]{0}', space=sflag, size = 0x8, scoped, tag = 'scoped memory for tpu_custom_call.1']
    #allocation5 [shape = 'u8[4096]{0}', space=vmem, size = 0x1000, scoped, tag = 'input window, operand 1, single buffered']
    #allocation6 [shape = 's32[1]{0}', space=sflag, size = 0x4, scoped, tag = 'scoped memory for tpu_custom_call.1']
    #allocation7 [shape = 'u8[4096]{0}', space=vmem, size = 0x1000, scoped, tag = 'output window, operand 0, single buffered']
    %7 = vsyncpa [#allocation3], 0
    %8 = vsyncpa [#allocation6], 0
    %9 = vsyncpa [#allocation4], 0
    loop: start=0, step=1, limit=4
    $region2: #{tpu_custom_call.1} parent=1 // loop_pre_header
      _
    $region3: #{tpu_custom_call.1} parent=1 // loop_header
      %s11 = sphi 0, %s15
      %p12 = scmp.ge.s32.totalorder %s11, 4
      %s19 = sphi 0, %s19
      %s21 = sphi 0, %s19
      %s22 = sphi 0, %s21
      %s36 = sphi 0, %s22
      %s40 = sphi 0, %s40
      %s42 = sphi 0, %s40
      %s43 = sphi 0, %s42
      %s57 = sphi 0, %s43
      %s61 = sphi 0, %s61
      %s63 = sphi 0, %s61
      %s64 = sphi 0, %s63
      %s78 = sphi 0, %s64
    $region4: #{tpu_custom_call.1} parent=1 // loop_header_branch
      %14 = sbr.rel (%p12) target = $region8
    $region5: #{tpu_custom_call.1} parent=1 // loop_body
      %s16 = ssub.s32 %s11, 1
      %s17 = ssub.s32 %s11, 2
      %s18 = sadd.s32 %s11, 1
      %s20 = sadd.s32 %s19, 1
      %p23 = scmp.eq.s32.totalorder %s11, 1
      %p24 = scmp.ne.s32.totalorder %s19, %s21
      %p25 = scmp.eq.s32.totalorder %s11, 0
      %p26 = por %p24, %p25
      %p27 = scmp.ne.s32.totalorder %s19, %s21
      %p28 = scmp.eq.s32.totalorder %s16, 1
      %p29 = por %p27, %p28
      %p30 = scmp.ne.s32.totalorder %s21, %s22
      %p31 = scmp.eq.s32.totalorder %s16, 0
      %p32 = por %p30, %p31
      %p33 = scmp.ne.s32.totalorder %s21, %s22
      %p34 = scmp.eq.s32.totalorder %s17, 1
      %p35 = por %p33, %p34
      %p37 = scmp.ne.s32.totalorder %s22, %s36
      %p38 = scmp.eq.s32.totalorder %s17, 0
      %p39 = por %p37, %p38
      %s41 = sadd.s32 %s40, 1
      %p44 = scmp.eq.s32.totalorder %s11, 1
      %p45 = scmp.ne.s32.totalorder %s40, %s42
      %p46 = scmp.eq.s32.totalorder %s11, 0
      %p47 = por %p45, %p46
      %p48 = scmp.ne.s32.totalorder %s40, %s42
      %p49 = scmp.eq.s32.totalorder %s16, 1
      %p50 = por %p48, %p49
      %p51 = scmp.ne.s32.totalorder %s42, %s43
      %p52 = scmp.eq.s32.totalorder %s16, 0
      %p53 = por %p51, %p52
      %p54 = scmp.ne.s32.totalorder %s42, %s43
      %p55 = scmp.eq.s32.totalorder %s17, 1
      %p56 = por %p54, %p55
      %p58 = scmp.ne.s32.totalorder %s43, %s57
      %p59 = scmp.eq.s32.totalorder %s17, 0
      %p60 = por %p58, %p59
      %s62 = sadd.s32 %s61, 1
      %p65 = scmp.eq.s32.totalorder %s11, 1
      %p66 = scmp.ne.s32.totalorder %s61, %s63
      %p67 = scmp.eq.s32.totalorder %s11, 0
      %p68 = por %p66, %p67
      %p69 = scmp.ne.s32.totalorder %s61, %s63
      %p70 = scmp.eq.s32.totalorder %s16, 1
      %p71 = por %p69, %p70
      %p72 = scmp.ne.s32.totalorder %s63, %s64
      %p73 = scmp.eq.s32.totalorder %s16, 0
      %p74 = por %p72, %p73
      %p75 = scmp.ne.s32.totalorder %s63, %s64
      %p76 = scmp.eq.s32.totalorder %s17, 1
      %p77 = por %p75, %p76
      %p79 = scmp.ne.s32.totalorder %s64, %s78
      %p80 = scmp.eq.s32.totalorder %s17, 0
      %p81 = por %p79, %p80
      %p82 = scmp.le.s32.totalorder 1, %s11
      %p83 = scmp.lt.s32.totalorder %s11, 3
      %p84 = pnand %p82, %p83
      %p85 = pneg %p84
      // Predicated region
      $region9: #{tpu_custom_call.1} parent=5 // pred_check
        _
      $region10: #{tpu_custom_call.1} parent=5 // pred_check_branch
        %87 = sbr.rel (%p84) target = $region12
      $region11: #{tpu_custom_call.1} parent=5 // pred_region
        %s88 = ssub.s32 %s11, 1
        // Predicated region
        $region13: #{tpu_custom_call.1} parent=11 // pred_check
          %p89 = pneg %p32
        $region14: #{tpu_custom_call.1} parent=11 // pred_check_branch
          %91 = sbr.rel (%p89) target = $region16
        $region15: #{tpu_custom_call.1} parent=11 // pred_region
          %93 = vsyncadd [#allocation3], 0
          %s95 = sshll.u32 %s0, 4
          %s96 = int_to_ptr.hbm [resolvable:$true] %s95
          %s97 = sshll.u32 [#allocation2], 4
          %s98 = int_to_ptr.vmem [resolvable:$true] %s97
          %100 = dma.hbm_to_vmem [thread:$0]  %s96, 128, %s98, [#allocation3]
        $region16: #{tpu_custom_call.1} parent=11 // pred_fallthru
          _
        // Predicated region
        $region17: #{tpu_custom_call.1} parent=11 // pred_check
          %p101 = pneg %p53
        $region18: #{tpu_custom_call.1} parent=11 // pred_check_branch
          %103 = sbr.rel (%p101) target = $region20
        $region19: #{tpu_custom_call.1} parent=11 // pred_region
          %105 = vsyncadd [#allocation6], 0
          %s107 = sshll.u32 %s1, 4
          %s108 = int_to_ptr.hbm [resolvable:$true] %s107
          %s109 = sshll.u32 [#allocation5], 4
          %s110 = int_to_ptr.vmem [resolvable:$true] %s109
          %112 = dma.hbm_to_vmem [thread:$0]  %s108, 128, %s110, [#allocation6]
        $region20: #{tpu_custom_call.1} parent=11 // pred_fallthru
          _
      $region12: #{tpu_custom_call.1} parent=5 // pred_fallthru
        _
      %p113 = scmp.lt.s32.totalorder %s11, 2
      // Predicated region
      $region21: #{tpu_custom_call.1} parent=5 // pred_check
        %p114 = pneg %p113
      $region22: #{tpu_custom_call.1} parent=5 // pred_check_branch
        %116 = sbr.rel (%p114) target = $region24
      $region23: #{tpu_custom_call.1} parent=5 // pred_region
        _
      $region24: #{tpu_custom_call.1} parent=5 // pred_fallthru
        _
      %p117 = scmp.le.s32.totalorder 1, %s11
      %p118 = scmp.lt.s32.totalorder %s11, 3
      %p119 = pnand %p117, %p118
      %p120 = pneg %p119
      // Predicated region
      $region25: #{tpu_custom_call.1} parent=5 // pred_check
        _
      $region26: #{tpu_custom_call.1} parent=5 // pred_check_branch
        %122 = sbr.rel (%p119) target = $region28
      $region27: #{tpu_custom_call.1} parent=5 // pred_region
        %s123 = ssub.s32 %s11, 1
        // Predicated region
        $region29: #{tpu_custom_call.1} parent=27 // pred_check
          %p124 = pneg %p32
        $region30: #{tpu_custom_call.1} parent=27 // pred_check_branch
          %126 = sbr.rel (%p124) target = $region32
        $region31: #{tpu_custom_call.1} parent=27 // pred_region
          %128 = dma.done [#allocation3], 128
        $region32: #{tpu_custom_call.1} parent=27 // pred_fallthru
          _
        // Predicated region
        $region33: #{tpu_custom_call.1} parent=27 // pred_check
          %p129 = pneg %p53
        $region34: #{tpu_custom_call.1} parent=27 // pred_check_branch
          %131 = sbr.rel (%p129) target = $region36
        $region35: #{tpu_custom_call.1} parent=27 // pred_region
          %133 = dma.done [#allocation6], 128
        $region36: #{tpu_custom_call.1} parent=27 // pred_fallthru
          _
        %p134 = pneg %p32
        %p135 = pneg %p29
        %p136 = pneg %p53
        %p137 = pneg %p50
        %p138 = pneg %p74
        %p139 = pneg %p71
        %v140 = vld [vmem:[#allocation2] sm:$0xff]
        %v141 = vld [vmem:[#allocation5] sm:$0xff]
        %v142 = vadd.f32 %v140, %v141
        %143 = vst [vmem:[#allocation7] sm:$0xff] %v142
        // Predicated region
        $region37: #{tpu_custom_call.1} parent=27 // pred_check
          %p144 = pneg %p71
        $region38: #{tpu_custom_call.1} parent=27 // pred_check_branch
          %146 = sbr.rel (%p144) target = $region40
        $region39: #{tpu_custom_call.1} parent=27 // pred_region
          %148 = vsyncadd [#allocation4], 0
          %s150 = sshll.u32 [#allocation7], 4
          %s151 = int_to_ptr.vmem [resolvable:$true] %s150
          %s152 = sshll.u32 %s2, 4
          %s153 = int_to_ptr.hbm [resolvable:$true] %s152
          %155 = dma.vmem_to_hbm [thread:$0]  %s151, 128, %s153, [#allocation4]
        $region40: #{tpu_custom_call.1} parent=27 // pred_fallthru
          _
        // Predicated region
        $region41: #{tpu_custom_call.1} parent=27 // pred_check
          %p156 = pneg %p71
        $region42: #{tpu_custom_call.1} parent=27 // pred_check_branch
          %158 = sbr.rel (%p156) target = $region44
        $region43: #{tpu_custom_call.1} parent=27 // pred_region
          %160 = dma.done [#allocation4], 128
        $region44: #{tpu_custom_call.1} parent=27 // pred_fallthru
          _
      $region28: #{tpu_custom_call.1} parent=5 // pred_fallthru
        _
      %p161 = scmp.le.s32.totalorder 2, %s11
      // Predicated region
      $region45: #{tpu_custom_call.1} parent=5 // pred_check
        %p162 = pneg %p161
      $region46: #{tpu_custom_call.1} parent=5 // pred_check_branch
        %164 = sbr.rel (%p162) target = $region48
      $region47: #{tpu_custom_call.1} parent=5 // pred_region
        %s165 = ssub.s32 %s11, 2
      $region48: #{tpu_custom_call.1} parent=5 // pred_fallthru
        _
    $region6: #{tpu_custom_call.1} parent=1 // loop_footer
      %s15 = sadd.s32 1, %s11
    $region7: #{tpu_custom_call.1} parent=1 // loop_footer_branch
      %10 = sbr.rel target = $region3
    $region8: #{tpu_custom_call.1} parent=1 // loop_exit
      _
    %166 = vsyncpa [#allocation3], 1
    %s167 = scalar_lea.sflag [#allocation3], 1
    %168 = vsyncpa %s167, 1
    %169 = vsyncpa [#allocation6], 1
    %170 = vsyncpa [#allocation4], 1
    %s171 = scalar_lea.sflag [#allocation4], 1
    %172 = vsyncpa %s171, 1

// kernel: tpu_custom_call.1
$region0: #{tpu_custom_call.1}
  #allocation0 [shape = 'u32[]', space=smem, size = 0x4, offset = 0x4, fixed_abs, tag = 'smem constant byte address 0x4 - core index']
  #allocation1 [shape = 'u32[72,128]{1,0:T(1,128)}', space=vmem, size = 0x9000, scoped, tag = 'internal scratch']
  %s0 = inlined_call_operand.hbm [shape: f32[8,128], index: 0, kind: input, shape index: {}]
  %s1 = inlined_call_operand.hbm [shape: f32[8,128], index: 1, kind: output, shape index: {}]
  %s2 = sld [smem:[#allocation0]]
  $region18: #{tpu_custom_call.1} parent=0
    _
  %s4 = ssub.s32 1, %s2
  %s5 = scalar_select 0, %s4, %s2
  $region1: #{tpu_custom_call.1} parent=0
    #allocation2 [shape = 'u8[4096]{0}', space=vmem, size = 0x1000, scoped, tag = 'input window, operand 0, single buffered']
    #allocation3 [shape = 's32[1]{0}', space=sflag, size = 0x4, scoped, tag = 'scoped memory for tpu_custom_call.1']
    #allocation4 [shape = 's32[1]{0}', space=sflag, size = 0x4, scoped, tag = 'scoped memory for tpu_custom_call.1']
    #allocation5 [shape = 'u8[4096]{0}', space=vmem, size = 0x1000, scoped, tag = 'output window, operand 0, single buffered']
    %6 = vsyncpa [#allocation3], 0
    %7 = vsyncpa [#allocation4], 0
    // Predicated region
    $region2: #{tpu_custom_call.1} parent=1 // pred_check
      _
    $region3: #{tpu_custom_call.1} parent=1 // pred_check_branch
      %9 = sbr.rel (0) target = $region5
    $region4: #{tpu_custom_call.1} parent=1 // pred_region
      %11 = vsyncadd [#allocation3], 0
      %s13 = sshll.u32 %s0, 4
      %s14 = int_to_ptr.hbm [resolvable:$true] %s13
      %s15 = sshll.u32 [#allocation2], 4
      %s16 = int_to_ptr.vmem [resolvable:$true] %s15
      %18 = dma.hbm_to_vmem [thread:$0]  %s14, 128, %s16, [#allocation3]
    $region5: #{tpu_custom_call.1} parent=1 // pred_fallthru
      _
    // Predicated region
    $region6: #{tpu_custom_call.1} parent=1 // pred_check
      _
    $region7: #{tpu_custom_call.1} parent=1 // pred_check_branch
      %20 = sbr.rel (0) target = $region9
    $region8: #{tpu_custom_call.1} parent=1 // pred_region
      %22 = dma.done [#allocation3], 128
    $region9: #{tpu_custom_call.1} parent=1 // pred_fallthru
      _
    %v23 = vld [vmem:[#allocation2] sm:$0xff]
    %v24 = vmul.f32 %v23, %v23
    %v25 = vmin.f32 16.0, %v24
    %v26 = vmul.f32 %v25, 2.1237322e-06
    %v27 = vadd.f32 %v26, 0.00028619796
    %v28 = vmul.f32 %v25, %v27
    %v29 = vadd.f32 %v28, 0.0036580483
    %v30 = vmul.f32 %v25, %v29
    %v31 = vadd.f32 %v30, 0.05243302
    %v32 = vmul.f32 %v25, %v31
    %v33 = vadd.f32 %v32, 0.18741608
    %v34 = vmul.f32 %v25, %v33
    %v35 = vadd.f32 %v34, 1.1283791
    %v36 = vmul.f32 %v23, %v35
    %v37 = vmul.f32 %v25, 3.8918573e-05
    %v38 = vadd.f32 %v37, 0.001143296
    %v39 = vmul.f32 %v25, %v38
    %v40 = vadd.f32 %v39, 0.014752088
    %v41 = vmul.f32 %v25, %v40
    %v42 = vadd.f32 %v41, 0.112945676
    %v43 = vmul.f32 %v25, %v42
    %v44 = vadd.f32 %v43, 0.4994258
    %v45 = vmul.f32 %v25, %v44
    %v46 = vadd.f32 %v45, 1.0
    %v47 = vrcp.pop %v46
    %v48 = vmul.f32 %v46, %v47
    %v49 = vsub.f32 1.0, %v48
    %v50 = vmul.f32 %v47, %v49
    %v51 = vadd.f32 %v47, %v50
    %vm52 = vweird.f32 %v46
    %vm53 = vweird.f32 %v47
    %vm54 = vmor %vm52, %vm53
    %v55 = vsel %vm54, %v47, %v51
    %v56 = vand.u32 2147483647, %v46
    %vm57 = vcmp.eq.f32.partialorder %v56, 8.507059e+37
    %v58 = vand.u32 %v46, 2147483648
    %v59 = vor.u32 1.1754944e-38, %v58
    %v60 = vsel %vm57, %v59, %v55
    %v61 = vmul.f32 %v36, %v60
    %v62 = vmin.f32 %v61, 1.0
    %v63 = vmax.f32 %v62, -1.0
    %64 = vst [vmem:[#allocation5] sm:$0xff] %v63
    // Predicated region
    $region10: #{tpu_custom_call.1} parent=1 // pred_check
      _
    $region11: #{tpu_custom_call.1} parent=1 // pred_check_branch
      %66 = sbr.rel (0) target = $region13
    $region12: #{tpu_custom_call.1} parent=1 // pred_region
      %68 = vsyncadd [#allocation4], 0
      %s70 = sshll.u32 [#allocation5], 4
      %s71 = int_to_ptr.vmem [resolvable:$true] %s70
      %s72 = sshll.u32 %s1, 4
      %s73 = int_to_ptr.hbm [resolvable:$true] %s72
      %75 = dma.vmem_to_hbm [thread:$0]  %s71, 128, %s73, [#allocation4]
    $region13: #{tpu_custom_call.1} parent=1 // pred_fallthru
      _
    // Predicated region
    $region14: #{tpu_custom_call.1} parent=1 // pred_check
      _
    $region15: #{tpu_custom_call.1} parent=1 // pred_check_branch
      %77 = sbr.rel (0) target = $region17
    $region16: #{tpu_custom_call.1} parent=1 // pred_region
      %79 = dma.done [#allocation4], 128
    $region17: #{tpu_custom_call.1} parent=1 // pred_fallthru
      _
    %80 = vsyncpa [#allocation3], 1
    %81 = vsyncpa [#allocation4], 1

// kernel: tpu_custom_call.1
$region0: #{tpu_custom_call.1}
  #allocation0 [shape = 'u32[]', space=smem, size = 0x4, offset = 0x4, fixed_abs, tag = 'smem constant byte address 0x4 - core index']
  #allocation1 [shape = 'u32[72,128]{1,0:T(1,128)}', space=vmem, size = 0x9000, scoped, tag = 'internal scratch']
  #allocation2 [shape = 'bf16[4,16,384]{2,1,0:T(8,128)(2,1)}', space=vmem, size = 0xc000, scoped, tag = 'scratch operand']
  #allocation3 [shape = 'bf16[4,16,128]{2,1,0:T(8,128)(2,1)}', space=vmem, size = 0x4000, scoped, tag = 'scratch operand']
  %s0 = inlined_call_operand.hbm [shape: f32[8,16,128], index: 0, kind: input, shape index: {}]
  %s1 = inlined_call_operand.hbm [shape: f32[1,128], index: 1, kind: input, shape index: {}]
  %s2 = inlined_call_operand.hbm [shape: f32[1,128], index: 2, kind: input, shape index: {}]
  %s3 = inlined_call_operand.hbm [shape: bf16[128,384], index: 3, kind: input, shape index: {}]
  %s4 = inlined_call_operand.vmem [shape: f32[1,384], index: 4, kind: input, shape index: {}]
  %s5 = inlined_call_operand.hbm [shape: bf16[128,128], index: 5, kind: input, shape index: {}]
  %s6 = inlined_call_operand.hbm [shape: f32[1,128], index: 6, kind: input, shape index: {}]
  %s7 = inlined_call_operand.vmem [shape: f32[1,128], index: 7, kind: input, shape index: {}]
  %s8 = inlined_call_operand.vmem [shape: f32[1,128], index: 8, kind: input, shape index: {}]
  %s9 = inlined_call_operand.hbm [shape: bf16[128,256], index: 9, kind: input, shape index: {}]
  %s10 = inlined_call_operand.vmem [shape: f32[1,256], index: 10, kind: input, shape index: {}]
  %s11 = inlined_call_operand.hbm [shape: bf16[256,128], index: 11, kind: input, shape index: {}]
  %s12 = inlined_call_operand.vmem [shape: f32[1,128], index: 12, kind: input, shape index: {}]
  %s13 = inlined_call_operand.hbm [shape: f32[8,16,128], index: 13, kind: output, shape index: {}]
  %s14 = sld [smem:[#allocation0]]
  $region124: #{tpu_custom_call.1} parent=0
    _
  %s16 = ssub.s32 1, %s14
  %s17 = scalar_select 0, %s16, %s14
  $region1: #{tpu_custom_call.1} parent=0
    #allocation4 [shape = 'u8[65536]{0}', space=vmem, size = 0x10000, scoped, tag = 'input window, operand 0']
    #allocation5 [shape = 's32[2]{0}', space=sflag, size = 0x8, scoped, tag = 'scoped memory for tpu_custom_call.1']
    #allocation6 [shape = 's32[2]{0}', space=sflag, size = 0x8, scoped, tag = 'scoped memory for tpu_custom_call.1']
    #allocation7 [shape = 'u8[512]{0}', space=vmem, size = 0x400, scoped, tag = 'input window, operand 1, single buffered']
    #allocation8 [shape = 's32[1]{0}', space=sflag, size = 0x4, scoped, tag = 'scoped memory for tpu_custom_call.1']
    #allocation9 [shape = 'u8[512]{0}', space=vmem, size = 0x400, scoped, tag = 'input window, operand 2, single buffered']
    #allocation10 [shape = 'u8[98304]{0}', space=vmem, size = 0x18000, scoped, tag = 'input window, operand 3, single buffered']
    #allocation11 [shape = 's32[1]{0}', space=sflag, size = 0x4, scoped, tag = 'scoped memory for tpu_custom_call.1']
    #allocation12 [shape = 'u8[32768]{0}', space=vmem, size = 0x8000, scoped, tag = 'input window, operand 5, single buffered']
    #allocation13 [shape = 'u8[512]{0}', space=vmem, size = 0x400, scoped, tag = 'input window, operand 6, single buffered']
    #allocation14 [shape = 's32[1]{0}', space=sflag, size = 0x4, scoped, tag = 'scoped memory for tpu_custom_call.1']
    #allocation15 [shape = 'u8[65536]{0}', space=vmem, size = 0x10000, scoped, tag = 'input window, operand 9, single buffered']
    #allocation16 [shape = 'u8[65536]{0}', space=vmem, size = 0x10000, scoped, tag = 'input window, operand 11, single buffered']
    #allocation17 [shape = 's32[1]{0}', space=sflag, size = 0x4, scoped, tag = 'scoped memory for tpu_custom_call.1']
    #allocation18 [shape = 'u8[65536]{0}', space=vmem, size = 0x10000, scoped, tag = 'output window, operand 0']
    %18 = vsyncpa [#allocation5], 0
    %s19 = scalar_lea.sflag [#allocation5], 1
    %20 = vsyncpa %s19, 0
    %21 = vsyncpa [#allocation8], 0
    %22 = vsyncpa [#allocation11], 0
    %23 = vsyncpa [#allocation14], 0
    %24 = vsyncpa [#allocation17], 0
    %25 = vsyncpa [#allocation6], 0
    %s26 = scalar_lea.sflag [#allocation6], 1
    %27 = vsyncpa %s26, 0
    loop: start=0, step=1, limit=4
    $region2: #{tpu_custom_call.1} parent=1 // loop_pre_header
      _
    $region3: #{tpu_custom_call.1} parent=1 // loop_header
      %s29 = sphi 0, %s33
      %p30 = scmp.ge.s32.totalorder %s29, 4
      %s39 = sphi 0, %s41
      %s42 = sphi 0, %s39
      %s43 = sphi 0, %s42
      %s59 = sphi 0, %s43
      %s63 = sphi 0, %s63
      %s65 = sphi 0, %s63
      %s66 = sphi 0, %s65
      %s80 = sphi 0, %s66
      %s84 = sphi 0, %s84
      %s86 = sphi 0, %s84
      %s87 = sphi 0, %s86
      %s101 = sphi 0, %s87
      %s105 = sphi 0, %s105
      %s107 = sphi 0, %s105
      %s108 = sphi 0, %s107
      %s122 = sphi 0, %s108
      %s126 = sphi 0, %s126
      %s128 = sphi 0, %s126
      %s129 = sphi 0, %s128
      %s143 = sphi 0, %s129
      %s147 = sphi 0, %s147
      %s149 = sphi 0, %s147
      %s150 = sphi 0, %s149
      %s164 = sphi 0, %s150
      %s168 = sphi 0, %s168
      %s170 = sphi 0, %s168
      %s171 = sphi 0, %s170
      %s185 = sphi 0, %s171
      %s189 = sphi 0, %s189
      %s191 = sphi 0, %s189
      %s192 = sphi 0, %s191
      %s206 = sphi 0, %s192
      %s210 = sphi 0, %s210
      %s212 = sphi 0, %s210
      %s213 = sphi 0, %s212
      %s227 = sphi 0, %s213
      %s231 = sphi 0, %s231
      %s233 = sphi 0, %s231
      %s234 = sphi 0, %s233
      %s248 = sphi 0, %s234
      %s252 = sphi 0, %s252
      %s254 = sphi 0, %s252
      %s255 = sphi 0, %s254
      %s269 = sphi 0, %s255
      %s273 = sphi 0, %s273
      %s275 = sphi 0, %s273
      %s276 = sphi 0, %s275
      %s290 = sphi 0, %s276
      %s294 = sphi 0, %s294
      %s296 = sphi 0, %s294
      %s297 = sphi 0, %s296
      %s311 = sphi 0, %s297
      %s317 = sphi 0, %s319
      %s320 = sphi 0, %s317
      %s321 = sphi 0, %s320
      %s337 = sphi 0, %s321
    $region4: #{tpu_custom_call.1} parent=1 // loop_header_branch
      %32 = sbr.rel (%p30) target = $region8
    $region5: #{tpu_custom_call.1} parent=1 // loop_body
      %s34 = ssub.s32 %s29, 1
      %s35 = ssub.s32 %s29, 2
      %s36 = sadd.s32 %s29, 1
      %s37 = ssub.s32 %s29, %s36
      %p38 = scmp.eq.s32.totalorder %s37, 0
      %s40 = sadd.s32 %s39, 1
      %s41 = scalar_select %p38, %s39, %s40
      %p44 = pneg %p38
      %p45 = scmp.eq.s32.totalorder %s29, 1
      %p46 = por %p44, %p45
      %p47 = scmp.ne.s32.totalorder %s39, %s42
      %p48 = scmp.eq.s32.totalorder %s29, 0
      %p49 = por %p47, %p48
      %p50 = scmp.ne.s32.totalorder %s39, %s42
      %p51 = scmp.eq.s32.totalorder %s34, 1
      %p52 = por %p50, %p51
      %p53 = scmp.ne.s32.totalorder %s42, %s43
      %p54 = scmp.eq.s32.totalorder %s34, 0
      %p55 = por %p53, %p54
      %p56 = scmp.ne.s32.totalorder %s42, %s43
      %p57 = scmp.eq.s32.totalorder %s35, 1
      %p58 = por %p56, %p57
      %p60 = scmp.ne.s32.totalorder %s43, %s59
      %p61 = scmp.eq.s32.totalorder %s35, 0
      %p62 = por %p60, %p61
      %s64 = sadd.s32 %s63, 1
      %p67 = scmp.eq.s32.totalorder %s29, 1
      %p68 = scmp.ne.s32.totalorder %s63, %s65
      %p69 = scmp.eq.s32.totalorder %s29, 0
      %p70 = por %p68, %p69
      %p71 = scmp.ne.s32.totalorder %s63, %s65
      %p72 = scmp.eq.s32.totalorder %s34, 1
      %p73 = por %p71, %p72
      %p74 = scmp.ne.s32.totalorder %s65, %s66
      %p75 = scmp.eq.s32.totalorder %s34, 0
      %p76 = por %p74, %p75
      %p77 = scmp.ne.s32.totalorder %s65, %s66
      %p78 = scmp.eq.s32.totalorder %s35, 1
      %p79 = por %p77, %p78
      %p81 = scmp.ne.s32.totalorder %s66, %s80
      %p82 = scmp.eq.s32.totalorder %s35, 0
      %p83 = por %p81, %p82
      %s85 = sadd.s32 %s84, 1
      %p88 = scmp.eq.s32.totalorder %s29, 1
      %p89 = scmp.ne.s32.totalorder %s84, %s86
      %p90 = scmp.eq.s32.totalorder %s29, 0
      %p91 = por %p89, %p90
      %p92 = scmp.ne.s32.totalorder %s84, %s86
      %p93 = scmp.eq.s32.totalorder %s34, 1
      %p94 = por %p92, %p93
      %p95 = scmp.ne.s32.totalorder %s86, %s87
      %p96 = scmp.eq.s32.totalorder %s34, 0
      %p97 = por %p95, %p96
      %p98 = scmp.ne.s32.totalorder %s86, %s87
      %p99 = scmp.eq.s32.totalorder %s35, 1
      %p100 = por %p98, %p99
      %p102 = scmp.ne.s32.totalorder %s87, %s101
      %p103 = scmp.eq.s32.totalorder %s35, 0
      %p104 = por %p102, %p103
      %s106 = sadd.s32 %s105, 1
      %p109 = scmp.eq.s32.totalorder %s29, 1
      %p110 = scmp.ne.s32.totalorder %s105, %s107
      %p111 = scmp.eq.s32.totalorder %s29, 0
      %p112 = por %p110, %p111
      %p113 = scmp.ne.s32.totalorder %s105, %s107
      %p114 = scmp.eq.s32.totalorder %s34, 1
      %p115 = por %p113, %p114
      %p116 = scmp.ne.s32.totalorder %s107, %s108
      %p117 = scmp.eq.s32.totalorder %s34, 0
      %p118 = por %p116, %p117
      %p119 = scmp.ne.s32.totalorder %s107, %s108
      %p120 = scmp.eq.s32.totalorder %s35, 1
      %p121 = por %p119, %p120
      %p123 = scmp.ne.s32.totalorder %s108, %s122
      %p124 = scmp.eq.s32.totalorder %s35, 0
      %p125 = por %p123, %p124
      %s127 = sadd.s32 %s126, 1
      %p130 = scmp.eq.s32.totalorder %s29, 1
      %p131 = scmp.ne.s32.totalorder %s126, %s128
      %p132 = scmp.eq.s32.totalorder %s29, 0
      %p133 = por %p131, %p132
      %p134 = scmp.ne.s32.totalorder %s126, %s128
      %p135 = scmp.eq.s32.totalorder %s34, 1
      %p136 = por %p134, %p135
      %p137 = scmp.ne.s32.totalorder %s128, %s129
      %p138 = scmp.eq.s32.totalorder %s34, 0
      %p139 = por %p137, %p138
      %p140 = scmp.ne.s32.totalorder %s128, %s129
      %p141 = scmp.eq.s32.totalorder %s35, 1
      %p142 = por %p140, %p141
      %p144 = scmp.ne.s32.totalorder %s129, %s143
      %p145 = scmp.eq.s32.totalorder %s35, 0
      %p146 = por %p144, %p145
      %s148 = sadd.s32 %s147, 1
      %p151 = scmp.eq.s32.totalorder %s29, 1
      %p152 = scmp.ne.s32.totalorder %s147, %s149
      %p153 = scmp.eq.s32.totalorder %s29, 0
      %p154 = por %p152, %p153
      %p155 = scmp.ne.s32.totalorder %s147, %s149
      %p156 = scmp.eq.s32.totalorder %s34, 1
      %p157 = por %p155, %p156
      %p158 = scmp.ne.s32.totalorder %s149, %s150
      %p159 = scmp.eq.s32.totalorder %s34, 0
      %p160 = por %p158, %p159
      %p161 = scmp.ne.s32.totalorder %s149, %s150
      %p162 = scmp.eq.s32.totalorder %s35, 1
      %p163 = por %p161, %p162
      %p165 = scmp.ne.s32.totalorder %s150, %s164
      %p166 = scmp.eq.s32.totalorder %s35, 0
      %p167 = por %p165, %p166
      %s169 = sadd.s32 %s168, 1
      %p172 = scmp.eq.s32.totalorder %s29, 1
      %p173 = scmp.ne.s32.totalorder %s168, %s170
      %p174 = scmp.eq.s32.totalorder %s29, 0
      %p175 = por %p173, %p174
      %p176 = scmp.ne.s32.totalorder %s168, %s170
      %p177 = scmp.eq.s32.totalorder %s34, 1
      %p178 = por %p176, %p177
      %p179 = scmp.ne.s32.totalorder %s170, %s171
      %p180 = scmp.eq.s32.totalorder %s34, 0
      %p181 = por %p179, %p180
      %p182 = scmp.ne.s32.totalorder %s170, %s171
      %p183 = scmp.eq.s32.totalorder %s35, 1
      %p184 = por %p182, %p183
      %p186 = scmp.ne.s32.totalorder %s171, %s185
      %p187 = scmp.eq.s32.totalorder %s35, 0
      %p188 = por %p186, %p187
      %s190 = sadd.s32 %s189, 1
      %p193 = scmp.eq.s32.totalorder %s29, 1
      %p194 = scmp.ne.s32.totalorder %s189, %s191
      %p195 = scmp.eq.s32.totalorder %s29, 0
      %p196 = por %p194, %p195
      %p197 = scmp.ne.s32.totalorder %s189, %s191
      %p198 = scmp.eq.s32.totalorder %s34, 1
      %p199 = por %p197, %p198
      %p200 = scmp.ne.s32.totalorder %s191, %s192
      %p201 = scmp.eq.s32.totalorder %s34, 0
      %p202 = por %p200, %p201
      %p203 = scmp.ne.s32.totalorder %s191, %s192
      %p204 = scmp.eq.s32.totalorder %s35, 1
      %p205 = por %p203, %p204
      %p207 = scmp.ne.s32.totalorder %s192, %s206
      %p208 = scmp.eq.s32.totalorder %s35, 0
      %p209 = por %p207, %p208
      %s211 = sadd.s32 %s210, 1
      %p214 = scmp.eq.s32.totalorder %s29, 1
      %p215 = scmp.ne.s32.totalorder %s210, %s212
      %p216 = scmp.eq.s32.totalorder %s29, 0
      %p217 = por %p215, %p216
      %p218 = scmp.ne.s32.totalorder %s210, %s212
      %p219 = scmp.eq.s32.totalorder %s34, 1
      %p220 = por %p218, %p219
      %p221 = scmp.ne.s32.totalorder %s212, %s213
      %p222 = scmp.eq.s32.totalorder %s34, 0
      %p223 = por %p221, %p222
      %p224 = scmp.ne.s32.totalorder %s212, %s213
      %p225 = scmp.eq.s32.totalorder %s35, 1
      %p226 = por %p224, %p225
      %p228 = scmp.ne.s32.totalorder %s213, %s227
      %p229 = scmp.eq.s32.totalorder %s35, 0
      %p230 = por %p228, %p229
      %s232 = sadd.s32 %s231, 1
      %p235 = scmp.eq.s32.totalorder %s29, 1
      %p236 = scmp.ne.s32.totalorder %s231, %s233
      %p237 = scmp.eq.s32.totalorder %s29, 0
      %p238 = por %p236, %p237
      %p239 = scmp.ne.s32.totalorder %s231, %s233
      %p240 = scmp.eq.s32.totalorder %s34, 1
      %p241 = por %p239, %p240
      %p242 = scmp.ne.s32.totalorder %s233, %s234
      %p243 = scmp.eq.s32.totalorder %s34, 0
      %p244 = por %p242, %p243
      %p245 = scmp.ne.s32.totalorder %s233, %s234
      %p246 = scmp.eq.s32.totalorder %s35, 1
      %p247 = por %p245, %p246
      %p249 = scmp.ne.s32.totalorder %s234, %s248
      %p250 = scmp.eq.s32.totalorder %s35, 0
      %p251 = por %p249, %p250
      %s253 = sadd.s32 %s252, 1
      %p256 = scmp.eq.s32.totalorder %s29, 1
      %p257 = scmp.ne.s32.totalorder %s252, %s254
      %p258 = scmp.eq.s32.totalorder %s29, 0
      %p259 = por %p257, %p258
      %p260 = scmp.ne.s32.totalorder %s252, %s254
      %p261 = scmp.eq.s32.totalorder %s34, 1
      %p262 = por %p260, %p261
      %p263 = scmp.ne.s32.totalorder %s254, %s255
      %p264 = scmp.eq.s32.totalorder %s34, 0
      %p265 = por %p263, %p264
      %p266 = scmp.ne.s32.totalorder %s254, %s255
      %p267 = scmp.eq.s32.totalorder %s35, 1
      %p268 = por %p266, %p267
      %p270 = scmp.ne.s32.totalorder %s255, %s269
      %p271 = scmp.eq.s32.totalorder %s35, 0
      %p272 = por %p270, %p271
      %s274 = sadd.s32 %s273, 1
      %p277 = scmp.eq.s32.totalorder %s29, 1
      %p278 = scmp.ne.s32.totalorder %s273, %s275
      %p279 = scmp.eq.s32.totalorder %s29, 0
      %p280 = por %p278, %p279
      %p281 = scmp.ne.s32.totalorder %s273, %s275
      %p282 = scmp.eq.s32.totalorder %s34, 1
      %p283 = por %p281, %p282
      %p284 = scmp.ne.s32.totalorder %s275, %s276
      %p285 = scmp.eq.s32.totalorder %s34, 0
      %p286 = por %p284, %p285
      %p287 = scmp.ne.s32.totalorder %s275, %s276
      %p288 = scmp.eq.s32.totalorder %s35, 1
      %p289 = por %p287, %p288
      %p291 = scmp.ne.s32.totalorder %s276, %s290
      %p292 = scmp.eq.s32.totalorder %s35, 0
      %p293 = por %p291, %p292
      %s295 = sadd.s32 %s294, 1
      %p298 = scmp.eq.s32.totalorder %s29, 1
      %p299 = scmp.ne.s32.totalorder %s294, %s296
      %p300 = scmp.eq.s32.totalorder %s29, 0
      %p301 = por %p299, %p300
      %p302 = scmp.ne.s32.totalorder %s294, %s296
      %p303 = scmp.eq.s32.totalorder %s34, 1
      %p304 = por %p302, %p303
      %p305 = scmp.ne.s32.totalorder %s296, %s297
      %p306 = scmp.eq.s32.totalorder %s34, 0
      %p307 = por %p305, %p306
      %p308 = scmp.ne.s32.totalorder %s296, %s297
      %p309 = scmp.eq.s32.totalorder %s35, 1
      %p310 = por %p308, %p309
      %p312 = scmp.ne.s32.totalorder %s297, %s311
      %p313 = scmp.eq.s32.totalorder %s35, 0
      %p314 = por %p312, %p313
      %s315 = ssub.s32 %s29, %s36
      %p316 = scmp.eq.s32.totalorder %s315, 0
      %s318 = sadd.s32 %s317, 1
      %s319 = scalar_select %p316, %s317, %s318
      %p322 = pneg %p316
      %p323 = scmp.eq.s32.totalorder %s29, 1
      %p324 = por %p322, %p323
      %p325 = scmp.ne.s32.totalorder %s317, %s320
      %p326 = scmp.eq.s32.totalorder %s29, 0
      %p327 = por %p325, %p326
      %p328 = scmp.ne.s32.totalorder %s317, %s320
      %p329 = scmp.eq.s32.totalorder %s34, 1
      %p330 = por %p328, %p329
      %p331 = scmp.ne.s32.totalorder %s320, %s321
      %p332 = scmp.eq.s32.totalorder %s34, 0
      %p333 = por %p331, %p332
      %p334 = scmp.ne.s32.totalorder %s320, %s321
      %p335 = scmp.eq.s32.totalorder %s35, 1
      %p336 = por %p334, %p335
      %p338 = scmp.ne.s32.totalorder %s321, %s337
      %p339 = scmp.eq.s32.totalorder %s35, 0
      %p340 = por %p338, %p339
      %p341 = scmp.le.s32.totalorder 1, %s29
      %p342 = scmp.lt.s32.totalorder %s29, 3
      %p343 = pnand %p341, %p342
      %p344 = pneg %p343
      // Predicated region
      $region9: #{tpu_custom_call.1} parent=5 // pred_check
        _
      $region10: #{tpu_custom_call.1} parent=5 // pred_check_branch
        %346 = sbr.rel (%p343) target = $region12
      $region11: #{tpu_custom_call.1} parent=5 // pred_region
        %s347 = ssub.s32 %s29, 1
        // Predicated region
        $region13: #{tpu_custom_call.1} parent=11 // pred_check
          %p348 = pneg %p76
        $region14: #{tpu_custom_call.1} parent=11 // pred_check_branch
          %350 = sbr.rel (%p348) target = $region16
        $region15: #{tpu_custom_call.1} parent=11 // pred_region
          %352 = vsyncadd [#allocation8], 0
          %s354 = sshll.u32 %s1, 4
          %s355 = int_to_ptr.hbm [resolvable:$true] %s354
          %s356 = sshll.u32 [#allocation7], 4
          %s357 = int_to_ptr.vmem [resolvable:$true] %s356
          %359 = dma.hbm_to_vmem [thread:$0]  %s355, 16, %s357, [#allocation8]
        $region16: #{tpu_custom_call.1} parent=11 // pred_fallthru
          _
        // Predicated region
        $region17: #{tpu_custom_call.1} parent=11 // pred_check
          %p360 = pneg %p97
        $region18: #{tpu_custom_call.1} parent=11 // pred_check_branch
          %362 = sbr.rel (%p360) target = $region20
        $region19: #{tpu_custom_call.1} parent=11 // pred_region
          %364 = vsyncadd [#allocation8], 0
          %s366 = sshll.u32 %s2, 4
          %s367 = int_to_ptr.hbm [resolvable:$true] %s366
          %s368 = sshll.u32 [#allocation9], 4
          %s369 = int_to_ptr.vmem [resolvable:$true] %s368
          %371 = dma.hbm_to_vmem [thread:$0]  %s367, 16, %s369, [#allocation8]
        $region20: #{tpu_custom_call.1} parent=11 // pred_fallthru
          _
        // Predicated region
        $region21: #{tpu_custom_call.1} parent=11 // pred_check
          %p372 = pneg %p118
        $region22: #{tpu_custom_call.1} parent=11 // pred_check_branch
          %374 = sbr.rel (%p372) target = $region24
        $region23: #{tpu_custom_call.1} parent=11 // pred_region
          %376 = vsyncadd [#allocation11], 0
          %s377 = sshll.u32 %s3, 4
          %s378 = int_to_ptr.hbm [resolvable:$true] %s377
          %s379 = sshll.u32 [#allocation10], 4
          %s380 = int_to_ptr.vmem [resolvable:$true] %s379
          %385 = dma.hbm_to_vmem [thread:$0]  %s378, 3072, %s380, [#allocation11], 192, 192, 12
        $region24: #{tpu_custom_call.1} parent=11 // pred_fallthru
          _
        // Predicated region
        $region25: #{tpu_custom_call.1} parent=11 // pred_check
          %p386 = pneg %p139
        $region26: #{tpu_custom_call.1} parent=11 // pred_check_branch
          %388 = sbr.rel (%p386) target = $region28
        $region27: #{tpu_custom_call.1} parent=11 // pred_region
          _
        $region28: #{tpu_custom_call.1} parent=11 // pred_fallthru
          _
        // Predicated region
        $region29: #{tpu_custom_call.1} parent=11 // pred_check
          %p389 = pneg %p160
        $region30: #{tpu_custom_call.1} parent=11 // pred_check_branch
          %391 = sbr.rel (%p389) target = $region32
        $region31: #{tpu_custom_call.1} parent=11 // pred_region
          %393 = vsyncadd [#allocation11], 0
          %s394 = sshll.u32 %s5, 4
          %s395 = int_to_ptr.hbm [resolvable:$true] %s394
          %s396 = sshll.u32 [#allocation12], 4
          %s397 = int_to_ptr.vmem [resolvable:$true] %s396
          %402 = dma.hbm_to_vmem [thread:$0]  %s395, 1024, %s397, [#allocation11], 64, 64, 4
        $region32: #{tpu_custom_call.1} parent=11 // pred_fallthru
          _
        // Predicated region
        $region33: #{tpu_custom_call.1} parent=11 // pred_check
          %p403 = pneg %p181
        $region34: #{tpu_custom_call.1} parent=11 // pred_check_branch
          %405 = sbr.rel (%p403) target = $region36
        $region35: #{tpu_custom_call.1} parent=11 // pred_region
          %407 = vsyncadd [#allocation14], 0
          %s409 = sshll.u32 %s6, 4
          %s410 = int_to_ptr.hbm [resolvable:$true] %s409
          %s411 = sshll.u32 [#allocation13], 4
          %s412 = int_to_ptr.vmem [resolvable:$true] %s411
          %414 = dma.hbm_to_vmem [thread:$0]  %s410, 16, %s412, [#allocation14]
        $region36: #{tpu_custom_call.1} parent=11 // pred_fallthru
          _
        // Predicated region
        $region37: #{tpu_custom_call.1} parent=11 // pred_check
          %p415 = pneg %p202
        $region38: #{tpu_custom_call.1} parent=11 // pred_check_branch
          %417 = sbr.rel (%p415) target = $region40
        $region39: #{tpu_custom_call.1} parent=11 // pred_region
          _
        $region40: #{tpu_custom_call.1} parent=11 // pred_fallthru
          _
        // Predicated region
        $region41: #{tpu_custom_call.1} parent=11 // pred_check
          %p418 = pneg %p223
        $region42: #{tpu_custom_call.1} parent=11 // pred_check_branch
          %420 = sbr.rel (%p418) target = $region44
        $region43: #{tpu_custom_call.1} parent=11 // pred_region
          _
        $region44: #{tpu_custom_call.1} parent=11 // pred_fallthru
          _
        // Predicated region
        $region45: #{tpu_custom_call.1} parent=11 // pred_check
          %p421 = pneg %p244
        $region46: #{tpu_custom_call.1} parent=11 // pred_check_branch
          %423 = sbr.rel (%p421) target = $region48
        $region47: #{tpu_custom_call.1} parent=11 // pred_region
          %425 = vsyncadd [#allocation14], 0
          %s426 = sshll.u32 %s9, 4
          %s427 = int_to_ptr.hbm [resolvable:$true] %s426
          %s428 = sshll.u32 [#allocation15], 4
          %s429 = int_to_ptr.vmem [resolvable:$true] %s428
          %434 = dma.hbm_to_vmem [thread:$0]  %s427, 2048, %s429, [#allocation14], 128, 128, 8
        $region48: #{tpu_custom_call.1} parent=11 // pred_fallthru
          _
        // Predicated region
        $region49: #{tpu_custom_call.1} parent=11 // pred_check
          %p435 = pneg %p265
        $region50: #{tpu_custom_call.1} parent=11 // pred_check_branch
          %437 = sbr.rel (%p435) target = $region52
        $region51: #{tpu_custom_call.1} parent=11 // pred_region
          _
        $region52: #{tpu_custom_call.1} parent=11 // pred_fallthru
          _
        // Predicated region
        $region53: #{tpu_custom_call.1} parent=11 // pred_check
          %p438 = pneg %p286
        $region54: #{tpu_custom_call.1} parent=11 // pred_check_branch
          %440 = sbr.rel (%p438) target = $region56
        $region55: #{tpu_custom_call.1} parent=11 // pred_region
          %442 = vsyncadd [#allocation17], 0
          %s443 = sshll.u32 %s11, 4
          %s444 = int_to_ptr.hbm [resolvable:$true] %s443
          %s445 = sshll.u32 [#allocation16], 4
          %s446 = int_to_ptr.vmem [resolvable:$true] %s445
          %451 = dma.hbm_to_vmem [thread:$0]  %s444, 2048, %s446, [#allocation17], 64, 64, 4
        $region56: #{tpu_custom_call.1} parent=11 // pred_fallthru
          _
        // Predicated region
        $region57: #{tpu_custom_call.1} parent=11 // pred_check
          %p452 = pneg %p307
        $region58: #{tpu_custom_call.1} parent=11 // pred_check_branch
          %454 = sbr.rel (%p452) target = $region60
        $region59: #{tpu_custom_call.1} parent=11 // pred_region
          _
        $region60: #{tpu_custom_call.1} parent=11 // pred_fallthru
          _
      $region12: #{tpu_custom_call.1} parent=5 // pred_fallthru
        _
      %p455 = scmp.lt.s32.totalorder %s29, 2
      // Predicated region
      $region61: #{tpu_custom_call.1} parent=5 // pred_check
        %p456 = pneg %p455
      $region62: #{tpu_custom_call.1} parent=5 // pred_check_branch
        %458 = sbr.rel (%p456) target = $region64
      $region63: #{tpu_custom_call.1} parent=5 // pred_region
        // Predicated region
        $region65: #{tpu_custom_call.1} parent=63 // pred_check
          %p459 = pneg %p49
        $region66: #{tpu_custom_call.1} parent=63 // pred_check_branch
          %461 = sbr.rel (%p459) target = $region68
        $region67: #{tpu_custom_call.1} parent=63 // pred_region
          %s462 = sand.u32 %s39, 1
          %s463 = scalar_lea.sflag [#allocation5], %s462
          %s464 = sand.u32 %s39, 1
          %s465 = smul.addr %s464, 64
          %s466 = scalar_lea.vmem [#allocation4], %s465
          %s467 = smul.u32 4, %s29
          %469 = vsyncadd %s463, 0
          %s470 = smul.addr %s467, 2
          %s471 = smul.addr %s470, 8
          %s472 = scalar_lea.hbm %s0, %s471
          %s473 = sshll.u32 %s472, 4
          %s474 = int_to_ptr.hbm [resolvable:$true] %s473
          %s475 = sshll.u32 %s466, 4
          %s476 = int_to_ptr.vmem [resolvable:$true] %s475
          %481 = dma.hbm_to_vmem [thread:$0]  %s474, 1024, %s476, %s463, 128, 128, 8
        $region68: #{tpu_custom_call.1} parent=63 // pred_fallthru
          _
      $region64: #{tpu_custom_call.1} parent=5 // pred_fallthru
        _
      %p482 = scmp.le.s32.totalorder 1, %s29
      %p483 = scmp.lt.s32.totalorder %s29, 3
      %p484 = pnand %p482, %p483
      %p485 = pneg %p484
      // Predicated region
      $region69: #{tpu_custom_call.1} parent=5 // pred_check
        _
      $region70: #{tpu_custom_call.1} parent=5 // pred_check_branch
        %487 = sbr.rel (%p484) target = $region72
      $region71: #{tpu_custom_call.1} parent=5 // pred_region
        %s488 = ssub.s32 %s29, 1
        %s489 = sand.u32 %s42, 1
        %s490 = scalar_lea.sflag [#allocation5], %s489
        %s491 = sand.u32 %s42, 1
        %s492 = smul.addr %s491, 64
        %s493 = scalar_lea.vmem [#allocation4], %s492
        // Predicated region
        $region73: #{tpu_custom_call.1} parent=71 // pred_check
          %p494 = pneg %p55
        $region74: #{tpu_custom_call.1} parent=71 // pred_check_branch
          %496 = sbr.rel (%p494) target = $region76
        $region75: #{tpu_custom_call.1} parent=71 // pred_region
          %498 = dma.done %s490, 1024
        $region76: #{tpu_custom_call.1} parent=71 // pred_fallthru
          _
        // Predicated region
        $region77: #{tpu_custom_call.1} parent=71 // pred_check
          %p499 = pneg %p76
        $region78: #{tpu_custom_call.1} parent=71 // pred_check_branch
          %501 = sbr.rel (%p499) target = $region80
        $region79: #{tpu_custom_call.1} parent=71 // pred_region
          %503 = dma.done [#allocation8], 16
        $region80: #{tpu_custom_call.1} parent=71 // pred_fallthru
          _
        // Predicated region
        $region81: #{tpu_custom_call.1} parent=71 // pred_check
          %p504 = pneg %p97
        $region82: #{tpu_custom_call.1} parent=71 // pred_check_branch
          %506 = sbr.rel (%p504) target = $region84
        $region83: #{tpu_custom_call.1} parent=71 // pred_region
          %508 = dma.done [#allocation8], 16
        $region84: #{tpu_custom_call.1} parent=71 // pred_fallthru
          _
        // Predicated region
        $region85: #{tpu_custom_call.1} parent=71 // pred_check
          %p509 = pneg %p118
        $region86: #{tpu_custom_call.1} parent=71 // pred_check_branch
          %511 = sbr.rel (%p509) target = $region88
        $region87: #{tpu_custom_call.1} parent=71 // pred_region
          %513 = dma.done [#allocation11], 3072
        $region88: #{tpu_custom_call.1} parent=71 // pred_fallthru
          _
        // Predicated region
        $region89: #{tpu_custom_call.1} parent=71 // pred_check
          %p514 = pneg %p160
        $region90: #{tpu_custom_call.1} parent=71 // pred_check_branch
          %516 = sbr.rel (%p514) target = $region92
        $region91: #{tpu_custom_call.1} parent=71 // pred_region
          %518 = dma.done [#allocation11], 1024
        $region92: #{tpu_custom_call.1} parent=71 // pred_fallthru
          _
        // Predicated region
        $region93: #{tpu_custom_call.1} parent=71 // pred_check
          %p519 = pneg %p181
        $region94: #{tpu_custom_call.1} parent=71 // pred_check_branch
          %521 = sbr.rel (%p519) target = $region96
        $region95: #{tpu_custom_call.1} parent=71 // pred_region
          %523 = dma.done [#allocation14], 16
        $region96: #{tpu_custom_call.1} parent=71 // pred_fallthru
          _
        // Predicated region
        $region97: #{tpu_custom_call.1} parent=71 // pred_check
          %p524 = pneg %p244
        $region98: #{tpu_custom_call.1} parent=71 // pred_check_branch
          %526 = sbr.rel (%p524) target = $region100
        $region99: #{tpu_custom_call.1} parent=71 // pred_region
          %528 = dma.done [#allocation14], 2048
        $region100: #{tpu_custom_call.1} parent=71 // pred_fallthru
          _
        // Predicated region
        $region101: #{tpu_custom_call.1} parent=71 // pred_check
          %p529 = pneg %p286
        $region102: #{tpu_custom_call.1} parent=71 // pred_check_branch
          %531 = sbr.rel (%p529) target = $region104
        $region103: #{tpu_custom_call.1} parent=71 // pred_region
          %533 = dma.done [#allocation17], 2048
        $region104: #{tpu_custom_call.1} parent=71 // pred_fallthru
          _
        %s534 = sand.u32 %s42, 1
        %s535 = scalar_lea.sflag [#allocation5], %s534
        %s536 = sand.u32 %s42, 1
        %s537 = smul.addr %s536, 64
        %s538 = scalar_lea.vmem [#allocation4], %s537
        %p539 = pneg %p55
        %p540 = pneg %p52
        %p541 = pneg %p76
        %p542 = pneg %p73
        %p543 = pneg %p97
        %p544 = pneg %p94
        %p545 = pneg %p118
        %p546 = pneg %p115
        %p547 = pneg %p139
        %p548 = pneg %p136
        %p549 = pneg %p160
        %p550 = pneg %p157
        %p551 = pneg %p181
        %p552 = pneg %p178
        %p553 = pneg %p202
        %p554 = pneg %p199
        %p555 = pneg %p223
        %p556 = pneg %p220
        %p557 = pneg %p244
        %p558 = pneg %p241
        %p559 = pneg %p265
        %p560 = pneg %p262
        %p561 = pneg %p286
        %p562 = pneg %p283
        %p563 = pneg %p307
        %p564 = pneg %p304
        %p565 = pneg %p333
        %p566 = pneg %p330
        %s567 = sand.u32 %s320, 1
        %s568 = scalar_lea.sflag [#allocation6], %s567
        %s569 = sand.u32 %s320, 1
        %s570 = smul.addr %s569, 64
        %s571 = scalar_lea.vmem [#allocation18], %s570
        %s572 = smul.u32 4, %s34
        %s573 = smul.u32 4, %s34
        %v575 = vld [vmem:[%s493] sm:$0xff]
        %v576 = vld [vmem:[%s493 + $0x8] sm:$0xff]
        %v577 = vld [vmem:[%s493 + $0x10] sm:$0xff]
        %v578 = vld [vmem:[%s493 + $0x18] sm:$0xff]
        %v579 = vld [vmem:[%s493 + $0x20] sm:$0xff]
        %v580 = vld [vmem:[%s493 + $0x28] sm:$0xff]
        %v581 = vld [vmem:[%s493 + $0x30] sm:$0xff]
        %v582 = vld [vmem:[%s493 + $0x38] sm:$0xff]
        %v583 = vld [vmem:[#allocation7] sm:$0x1]
        %v584 = vld [vmem:[#allocation9] sm:$0x1]
        %585 = vadd.xlane.f32.xlu0 %v575
        %v586 = vpop.xlane.xlu0 %585
        %587 = vadd.xlane.f32.xlu0 %v576
        %v588 = vpop.xlane.xlu0 %587
        %589 = vadd.xlane.f32.xlu0 %v577
        %v590 = vpop.xlane.xlu0 %589
        %591 = vadd.xlane.f32.xlu0 %v578
        %v592 = vpop.xlane.xlu0 %591
        %593 = vadd.xlane.f32.xlu0 %v579
        %v594 = vpop.xlane.xlu0 %593
        %595 = vadd.xlane.f32.xlu0 %v580
        %v596 = vpop.xlane.xlu0 %595
        %597 = vadd.xlane.f32.xlu0 %v581
        %v598 = vpop.xlane.xlu0 %597
        %599 = vadd.xlane.f32.xlu0 %v582
        %v600 = vpop.xlane.xlu0 %599
        %v601 = vrcp.pop 128.0
        %v602 = vmul.f32 128.0, %v601
        %v603 = vsub.f32 1.0, %v602
        %v604 = vmul.f32 %v601, %v603
        %v605 = vadd.f32 %v601, %v604
        %vm606 = vweird.f32 %v601
        %v607 = vsel %vm606, %v601, %v605
        %v608 = vmul.f32 %v586, %v607
        %v609 = vmul.f32 %v588, %v607
        %v610 = vmul.f32 %v590, %v607
        %v611 = vmul.f32 %v592, %v607
        %v612 = vmul.f32 %v594, %v607
        %v613 = vmul.f32 %v596, %v607
        %v614 = vmul.f32 %v598, %v607
        %v615 = vmul.f32 %v600, %v607
        %v616 = vsub.f32 %v575, %v608
        %v617 = vsub.f32 %v576, %v609
        %v618 = vsub.f32 %v577, %v610
        %v619 = vsub.f32 %v578, %v611
        %v620 = vsub.f32 %v579, %v612
        %v621 = vsub.f32 %v580, %v613
        %v622 = vsub.f32 %v581, %v614
        %v623 = vsub.f32 %v582, %v615
        %v624 = vmul.f32 %v616, %v616
        %v625 = vmul.f32 %v617, %v617
        %v626 = vmul.f32 %v618, %v618
        %v627 = vmul.f32 %v619, %v619
        %v628 = vmul.f32 %v620, %v620
        %v629 = vmul.f32 %v621, %v621
        %v630 = vmul.f32 %v622, %v622
        %v631 = vmul.f32 %v623, %v623
        %632 = vadd.xlane.f32.xlu0 %v624
        %v633 = vpop.xlane.xlu0 %632
        %634 = vadd.xlane.f32.xlu0 %v625
        %v635 = vpop.xlane.xlu0 %634
        %636 = vadd.xlane.f32.xlu0 %v626
        %v637 = vpop.xlane.xlu0 %636
        %638 = vadd.xlane.f32.xlu0 %v627
        %v639 = vpop.xlane.xlu0 %638
        %640 = vadd.xlane.f32.xlu0 %v628
        %v641 = vpop.xlane.xlu0 %640
        %642 = vadd.xlane.f32.xlu0 %v629
        %v643 = vpop.xlane.xlu0 %642
        %644 = vadd.xlane.f32.xlu0 %v630
        %v645 = vpop.xlane.xlu0 %644
        %646 = vadd.xlane.f32.xlu0 %v631
        %v647 = vpop.xlane.xlu0 %646
        %v648 = vmul.f32 %v633, %v607
        %v649 = vmul.f32 %v635, %v607
        %v650 = vmul.f32 %v637, %v607
        %v651 = vmul.f32 %v639, %v607
        %v652 = vmul.f32 %v641, %v607
        %v653 = vmul.f32 %v643, %v607
        %v654 = vmul.f32 %v645, %v607
        %v655 = vmul.f32 %v647, %v607
        %v656 = vadd.f32 %v648, 1e-05
        %v657 = vadd.f32 %v649, 1e-05
        %v658 = vadd.f32 %v650, 1e-05
        %v659 = vadd.f32 %v651, 1e-05
        %v660 = vadd.f32 %v652, 1e-05
        %v661 = vadd.f32 %v653, 1e-05
        %v662 = vadd.f32 %v654, 1e-05
        %v663 = vadd.f32 %v655, 1e-05
        %v664 = vrsqrt.pop %v656
        %v665 = vmul.f32 %v664, %v656
        %v666 = vmul.f32 %v665, %v664
        %v667 = vmul.f32 0.5, %v666
        %v668 = vsub.f32 1.5, %v667
        %v669 = vmul.f32 %v664, %v668
        %vm670 = vweird.f32 %v656
        %vm671 = vweird.f32 %v664
        %vm672 = vmor %vm670, %vm671
        %v673 = vsel %vm672, %v664, %v669
        %v674 = vrsqrt.pop %v657
        %v675 = vmul.f32 %v674, %v657
        %v676 = vmul.f32 %v675, %v674
        %v677 = vmul.f32 0.5, %v676
        %v678 = vsub.f32 1.5, %v677
        %v679 = vmul.f32 %v674, %v678
        %vm680 = vweird.f32 %v657
        %vm681 = vweird.f32 %v674
        %vm682 = vmor %vm680, %vm681
        %v683 = vsel %vm682, %v674, %v679
        %v684 = vrsqrt.pop %v658
        %v685 = vmul.f32 %v684, %v658
        %v686 = vmul.f32 %v685, %v684
        %v687 = vmul.f32 0.5, %v686
        %v688 = vsub.f32 1.5, %v687
        %v689 = vmul.f32 %v684, %v688
        %vm690 = vweird.f32 %v658
        %vm691 = vweird.f32 %v684
        %vm692 = vmor %vm690, %vm691
        %v693 = vsel %vm692, %v684, %v689
        %v694 = vrsqrt.pop %v659
        %v695 = vmul.f32 %v694, %v659
        %v696 = vmul.f32 %v695, %v694
        %v697 = vmul.f32 0.5, %v696
        %v698 = vsub.f32 1.5, %v697
        %v699 = vmul.f32 %v694, %v698
        %vm700 = vweird.f32 %v659
        %vm701 = vweird.f32 %v694
        %vm702 = vmor %vm700, %vm701
        %v703 = vsel %vm702, %v694, %v699
        %v704 = vrsqrt.pop %v660
        %v705 = vmul.f32 %v704, %v660
        %v706 = vmul.f32 %v705, %v704
        %v707 = vmul.f32 0.5, %v706
        %v708 = vsub.f32 1.5, %v707
        %v709 = vmul.f32 %v704, %v708
        %vm710 = vweird.f32 %v660
        %vm711 = vweird.f32 %v704
        %vm712 = vmor %vm710, %vm711
        %v713 = vsel %vm712, %v704, %v709
        %v714 = vrsqrt.pop %v661
        %v715 = vmul.f32 %v714, %v661
        %v716 = vmul.f32 %v715, %v714
        %v717 = vmul.f32 0.5, %v716
        %v718 = vsub.f32 1.5, %v717
        %v719 = vmul.f32 %v714, %v718
        %vm720 = vweird.f32 %v661
        %vm721 = vweird.f32 %v714
        %vm722 = vmor %vm720, %vm721
        %v723 = vsel %vm722, %v714, %v719
        %v724 = vrsqrt.pop %v662
        %v725 = vmul.f32 %v724, %v662
        %v726 = vmul.f32 %v725, %v724
        %v727 = vmul.f32 0.5, %v726
        %v728 = vsub.f32 1.5, %v727
        %v729 = vmul.f32 %v724, %v728
        %vm730 = vweird.f32 %v662
        %vm731 = vweird.f32 %v724
        %vm732 = vmor %vm730, %vm731
        %v733 = vsel %vm732, %v724, %v729
        %v734 = vrsqrt.pop %v663
        %v735 = vmul.f32 %v734, %v663
        %v736 = vmul.f32 %v735, %v734
        %v737 = vmul.f32 0.5, %v736
        %v738 = vsub.f32 1.5, %v737
        %v739 = vmul.f32 %v734, %v738
        %vm740 = vweird.f32 %v663
        %vm741 = vweird.f32 %v734
        %vm742 = vmor %vm740, %vm741
        %v743 = vsel %vm742, %v734, %v739
        %v744 = vmul.f32 %v616, %v673
        %v745 = vmul.f32 %v617, %v683
        %v746 = vmul.f32 %v618, %v693
        %v747 = vmul.f32 %v619, %v703
        %v748 = vmul.f32 %v620, %v713
        %v749 = vmul.f32 %v621, %v723
        %v750 = vmul.f32 %v622, %v733
        %v751 = vmul.f32 %v623, %v743
        %v753 = vperm.slane %v583, 0
        %v755 = vmul.f32 %v744, %v753
        %v756 = vmul.f32 %v745, %v753
        %v757 = vmul.f32 %v746, %v753
        %v758 = vmul.f32 %v747, %v753
        %v759 = vmul.f32 %v748, %v753
        %v760 = vmul.f32 %v749, %v753
        %v761 = vmul.f32 %v750, %v753
        %v762 = vmul.f32 %v751, %v753
        %v764 = vperm.slane %v584, 0
        %v766 = vadd.f32 %v755, %v764
        %v767 = vadd.f32 %v756, %v764
        %v768 = vadd.f32 %v757, %v764
        %v769 = vadd.f32 %v758, %v764
        %v770 = vadd.f32 %v759, %v764
        %v771 = vadd.f32 %v760, %v764
        %v772 = vadd.f32 %v761, %v764
        %v773 = vadd.f32 %v762, %v764
        %v774 = vpack.c.bf16 %v767, %v766
        %v775 = vpack.c.bf16 %v769, %v768
        %v776 = vpack.c.bf16 %v771, %v770
        %v777 = vpack.c.bf16 %v773, %v772
        %v778 = vld [vmem:[#allocation10] sm:$0xff]
        %v779 = vld [vmem:[#allocation10 + $0x8] sm:$0xf]
        %v780 = vld [vmem:[#allocation10 + $0xc] sm:$0xff]
        %v781 = vld [vmem:[#allocation10 + $0x14] sm:$0xf]
        %v782 = vld [vmem:[#allocation10 + $0x18] sm:$0xff]
        %v783 = vld [vmem:[#allocation10 + $0x20] sm:$0xf]
        %v784 = vld [vmem:[#allocation10 + $0x24] sm:$0xff]
        %v785 = vld [vmem:[#allocation10 + $0x2c] sm:$0xf]
        %v786 = vld [vmem:[#allocation10 + $0x30] sm:$0xff]
        %v787 = vld [vmem:[#allocation10 + $0x38] sm:$0xf]
        %v788 = vld [vmem:[#allocation10 + $0x3c] sm:$0xff]
        %v789 = vld [vmem:[#allocation10 + $0x44] sm:$0xf]
        %v790 = vld [vmem:[#allocation10 + $0x48] sm:$0xff]
        %v791 = vld [vmem:[#allocation10 + $0x50] sm:$0xf]
        %v792 = vld [vmem:[#allocation10 + $0x54] sm:$0xff]
        %v793 = vld [vmem:[#allocation10 + $0x5c] sm:$0xf]
        %v794 = vld [vmem:[#allocation10 + $0x60] sm:$0xff]
        %v795 = vld [vmem:[#allocation10 + $0x68] sm:$0xf]
        %v796 = vld [vmem:[#allocation10 + $0x6c] sm:$0xff]
        %v797 = vld [vmem:[#allocation10 + $0x74] sm:$0xf]
        %v798 = vld [vmem:[#allocation10 + $0x78] sm:$0xff]
        %v799 = vld [vmem:[#allocation10 + $0x80] sm:$0xf]
        %v800 = vld [vmem:[#allocation10 + $0x84] sm:$0xff]
        %v801 = vld [vmem:[#allocation10 + $0x8c] sm:$0xf]
        %v802 = vld [vmem:[#allocation10 + $0x90] sm:$0xff]
        %v803 = vld [vmem:[#allocation10 + $0x98] sm:$0xf]
        %v804 = vld [vmem:[#allocation10 + $0x9c] sm:$0xff]
        %v805 = vld [vmem:[#allocation10 + $0xa4] sm:$0xf]
        %v806 = vld [vmem:[#allocation10 + $0xa8] sm:$0xff]
        %v807 = vld [vmem:[#allocation10 + $0xb0] sm:$0xf]
        %v808 = vld [vmem:[#allocation10 + $0xb4] sm:$0xff]
        %v809 = vld [vmem:[#allocation10 + $0xbc] sm:$0xf]
        %v810 = vld [vmem:[%s4] sm:$0x7]
        %v812 = vperm.slane %v810, 0
        %v813 = vperm.slane %v810, 1
        %v814 = vperm.slane %v810, 2
        %v850 = vunpack.c.l.b16 %v778
        %v851 = vunpack.c.h.b16 %v778
        %v852 = vunpack.c.l.b16 %v779
        %v853 = vunpack.c.l.b16 %v780
        %v854 = vunpack.c.h.b16 %v780
        %v855 = vunpack.c.l.b16 %v781
        %v856 = vunpack.c.l.b16 %v782
        %v857 = vunpack.c.h.b16 %v782
        %v858 = vunpack.c.l.b16 %v783
        %v859 = vunpack.c.l.b16 %v784
        %v860 = vunpack.c.h.b16 %v784
        %v861 = vunpack.c.l.b16 %v785
        %v862 = vunpack.c.l.b16 %v786
        %v863 = vunpack.c.h.b16 %v786
        %v864 = vunpack.c.l.b16 %v787
        %v865 = vunpack.c.l.b16 %v788
        %v866 = vunpack.c.h.b16 %v788
        %v867 = vunpack.c.l.b16 %v789
        %v868 = vunpack.c.l.b16 %v790
        %v869 = vunpack.c.h.b16 %v790
        %v870 = vunpack.c.l.b16 %v791
        %v871 = vunpack.c.l.b16 %v792
        %v872 = vunpack.c.h.b16 %v792
        %v873 = vunpack.c.l.b16 %v793
        %v874 = vunpack.c.l.b16 %v794
        %v875 = vunpack.c.h.b16 %v794
        %v876 = vunpack.c.l.b16 %v795
        %v877 = vunpack.c.l.b16 %v796
        %v878 = vunpack.c.h.b16 %v796
        %v879 = vunpack.c.l.b16 %v797
        %v880 = vunpack.c.l.b16 %v798
        %v881 = vunpack.c.h.b16 %v798
        %v882 = vunpack.c.l.b16 %v799
        %v883 = vunpack.c.l.b16 %v800
        %v884 = vunpack.c.h.b16 %v800
        %v885 = vunpack.c.l.b16 %v801
        %v886 = vunpack.c.l.b16 %v802
        %v887 = vunpack.c.h.b16 %v802
        %v888 = vunpack.c.l.b16 %v803
        %v889 = vunpack.c.l.b16 %v804
        %v890 = vunpack.c.h.b16 %v804
        %v891 = vunpack.c.l.b16 %v805
        %v892 = vunpack.c.l.b16 %v806
        %v893 = vunpack.c.h.b16 %v806
        %v894 = vunpack.c.l.b16 %v807
        %v895 = vunpack.c.l.b16 %v808
        %v896 = vunpack.c.h.b16 %v808
        %v897 = vunpack.c.l.b16 %v809
        %v898 = vpack.c.b16 %v853, %v850
        %v899 = vpack.c.b16 %v854, %v851
        %v900 = vpack.c.b16 %v855, %v852
        %v901 = vpack.c.b16 %v859, %v856
        %v902 = vpack.c.b16 %v860, %v857
        %v903 = vpack.c.b16 %v861, %v858
        %v904 = vpack.c.b16 %v865, %v862
        %v905 = vpack.c.b16 %v866, %v863
        %v906 = vpack.c.b16 %v867, %v864
        %v907 = vpack.c.b16 %v871, %v868
        %v908 = vpack.c.b16 %v872, %v869
        %v909 = vpack.c.b16 %v873, %v870
        %v910 = vpack.c.b16 %v877, %v874
        %v911 = vpack.c.b16 %v878, %v875
        %v912 = vpack.c.b16 %v879, %v876
        %v913 = vpack.c.b16 %v883, %v880
        %v914 = vpack.c.b16 %v884, %v881
        %v915 = vpack.c.b16 %v885, %v882
        %v916 = vpack.c.b16 %v889, %v886
        %v917 = vpack.c.b16 %v890, %v887
        %v918 = vpack.c.b16 %v891, %v888
        %v919 = vpack.c.b16 %v895, %v892
        %v920 = vpack.c.b16 %v896, %v893
        %v921 = vpack.c.b16 %v897, %v894
        %946 = vmatpush.bf16.msra.mxu0 %v919
        %947 = vmatpush.bf16.msra.mxu0 %v916
        %948 = vmatpush.bf16.msra.mxu0 %v913
        %949 = vmatpush.bf16.msra.mxu0 %v910
        %950 = vmatpush.bf16.msra.mxu0 %v907
        %951 = vmatpush.bf16.msra.mxu0 %v904
        %952 = vmatpush.bf16.msra.mxu0 %v901
        %953 = vmatpush.bf16.msra.mxu0 %v898
        %954 = vmatmul.bf16.gmra.mxu0 %v774
        %v955 = vpop.f32.mrf.mxu0
        %v956 = vadd.f32 %v812, %v955
        %v957 = vpop.f32.mrf.mxu0
        %v958 = vadd.f32 %v812, %v957
        %959 = vmatmul.bf16.gmra.mxu0 %v775
        %v960 = vpop.f32.mrf.mxu0
        %v961 = vadd.f32 %v812, %v960
        %v962 = vpop.f32.mrf.mxu0
        %v963 = vadd.f32 %v812, %v962
        %964 = vmatmul.bf16.gmra.mxu0 %v776
        %v965 = vpop.f32.mrf.mxu0
        %v966 = vadd.f32 %v812, %v965
        %v967 = vpop.f32.mrf.mxu0
        %v968 = vadd.f32 %v812, %v967
        %969 = vmatmul.bf16.gmra.mxu0 %v777
        %v970 = vpop.f32.mrf.mxu0
        %v971 = vadd.f32 %v812, %v970
        %v972 = vpop.f32.mrf.mxu0
        %v973 = vadd.f32 %v812, %v972
        %974 = vdwg.mxu0
        %975 = vmatpush.bf16.msra.mxu0 %v920
        %976 = vmatpush.bf16.msra.mxu0 %v917
        %977 = vmatpush.bf16.msra.mxu0 %v914
        %978 = vmatpush.bf16.msra.mxu0 %v911
        %979 = vmatpush.bf16.msra.mxu0 %v908
        %980 = vmatpush.bf16.msra.mxu0 %v905
        %981 = vmatpush.bf16.msra.mxu0 %v902
        %982 = vmatpush.bf16.msra.mxu0 %v899
        %983 = vmatmul.bf16.gmra.mxu0 %v774
        %v984 = vpop.f32.mrf.mxu0
        %v985 = vadd.f32 %v813, %v984
        %v986 = vpop.f32.mrf.mxu0
        %v987 = vadd.f32 %v813, %v986
        %988 = vmatmul.bf16.gmra.mxu0 %v775
        %v989 = vpop.f32.mrf.mxu0
        %v990 = vadd.f32 %v813, %v989
        %v991 = vpop.f32.mrf.mxu0
        %v992 = vadd.f32 %v813, %v991
        %993 = vmatmul.bf16.gmra.mxu0 %v776
        %v994 = vpop.f32.mrf.mxu0
        %v995 = vadd.f32 %v813, %v994
        %v996 = vpop.f32.mrf.mxu0
        %v997 = vadd.f32 %v813, %v996
        %998 = vmatmul.bf16.gmra.mxu0 %v777
        %v999 = vpop.f32.mrf.mxu0
        %v1000 = vadd.f32 %v813, %v999
        %v1001 = vpop.f32.mrf.mxu0
        %v1002 = vadd.f32 %v813, %v1001
        %1003 = vdwg.mxu0
        %1004 = vmatpush.bf16.msra.mxu0 %v921
        %1005 = vmatpush.bf16.msra.mxu0 %v918
        %1006 = vmatpush.bf16.msra.mxu0 %v915
        %1007 = vmatpush.bf16.msra.mxu0 %v912
        %1008 = vmatpush.bf16.msra.mxu0 %v909
        %1009 = vmatpush.bf16.msra.mxu0 %v906
        %1010 = vmatpush.bf16.msra.mxu0 %v903
        %1011 = vmatpush.bf16.msra.mxu0 %v900
        %1012 = vmatmul.bf16.gmra.mxu0 %v774
        %v1013 = vpop.f32.mrf.mxu0
        %v1014 = vadd.f32 %v814, %v1013
        %v1015 = vpop.f32.mrf.mxu0
        %v1016 = vadd.f32 %v814, %v1015
        %1017 = vmatmul.bf16.gmra.mxu0 %v775
        %v1018 = vpop.f32.mrf.mxu0
        %v1019 = vadd.f32 %v814, %v1018
        %v1020 = vpop.f32.mrf.mxu0
        %v1021 = vadd.f32 %v814, %v1020
        %1022 = vmatmul.bf16.gmra.mxu0 %v776
        %v1023 = vpop.f32.mrf.mxu0
        %v1024 = vadd.f32 %v814, %v1023
        %v1025 = vpop.f32.mrf.mxu0
        %v1026 = vadd.f32 %v814, %v1025
        %1027 = vmatmul.bf16.gmra.mxu0 %v777
        %v1028 = vpop.f32.mrf.mxu0
        %v1029 = vadd.f32 %v814, %v1028
        %v1030 = vpop.f32.mrf.mxu0
        %v1031 = vadd.f32 %v814, %v1030
        %1032 = vdwg.mxu0
        %v1033 = vpack.c.bf16 %v985, %v956
        %v1034 = vpack.c.bf16 %v1014, %v1014
        %v1035 = vpack.c.bf16 %v987, %v958
        %v1036 = vpack.c.bf16 %v1016, %v1016
        %v1037 = vpack.c.bf16 %v990, %v961
        %v1038 = vpack.c.bf16 %v1019, %v1019
        %v1039 = vpack.c.bf16 %v992, %v963
        %v1040 = vpack.c.bf16 %v1021, %v1021
        %v1041 = vpack.c.bf16 %v995, %v966
        %v1042 = vpack.c.bf16 %v1024, %v1024
        %v1043 = vpack.c.bf16 %v997, %v968
        %v1044 = vpack.c.bf16 %v1026, %v1026
        %v1045 = vpack.c.bf16 %v1000, %v971
        %v1046 = vpack.c.bf16 %v1029, %v1029
        %v1047 = vpack.c.bf16 %v1002, %v973
        %v1048 = vpack.c.bf16 %v1031, %v1031
        %1049 = vst [vmem:[#allocation2] sm:$0xff] %v1033
        %1050 = vst [vmem:[#allocation2 + $0x8] sm:$0xf] %v1034
        %1051 = vst [vmem:[#allocation2 + $0xc] sm:$0xff] %v1035
        %1052 = vst [vmem:[#allocation2 + $0x14] sm:$0xf] %v1036
        %1053 = vst [vmem:[#allocation2 + $0x18] sm:$0xff] %v1037
        %1054 = vst [vmem:[#allocation2 + $0x20] sm:$0xf] %v1038
        %1055 = vst [vmem:[#allocation2 + $0x24] sm:$0xff] %v1039
        %1056 = vst [vmem:[#allocation2 + $0x2c] sm:$0xf] %v1040
        %1057 = vst [vmem:[#allocation2 + $0x30] sm:$0xff] %v1041
        %1058 = vst [vmem:[#allocation2 + $0x38] sm:$0xf] %v1042
        %1059 = vst [vmem:[#allocation2 + $0x3c] sm:$0xff] %v1043
        %1060 = vst [vmem:[#allocation2 + $0x44] sm:$0xf] %v1044
        %1061 = vst [vmem:[#allocation2 + $0x48] sm:$0xff] %v1045
        %1062 = vst [vmem:[#allocation2 + $0x50] sm:$0xf] %v1046
        %1063 = vst [vmem:[#allocation2 + $0x54] sm:$0xff] %v1047
        %1064 = vst [vmem:[#allocation2 + $0x5c] sm:$0xf] %v1048
        loop: start=0, step=1, limit=4
        $region105: #{tpu_custom_call.1} parent=71 // loop_pre_header
          _
        $region106: #{tpu_custom_call.1} parent=71 // loop_header
          %s1066 = sphi 0, %s1070
          %p1067 = scmp.ge.s32.totalorder %s1066, 4
        $region107: #{tpu_custom_call.1} parent=71 // loop_header_branch
          %1069 = sbr.rel (%p1067) target = $region111
        $region108: #{tpu_custom_call.1} parent=71 // loop_body
          %s1071 = smul.u32 %s1066, 6
          %s1072 = smul.addr %s1071, 4
          %s1073 = scalar_lea.vmem [#allocation2], %s1072
          %v1074 = vld [vmem:[%s1073] sm:$0xff]
          %v1075 = vld [vmem:[%s1073 + $0x8] sm:$0xf]
          %v1076 = vld [vmem:[%s1073 + $0xc] sm:$0xff]
          %v1077 = vld [vmem:[%s1073 + $0x14] sm:$0xf]
          %v1080 = vunpack.c.l.b16 %v1074
          %v1081 = vunpack.c.l.b16 %v1076
          %v1082 = vpack.c.b16 %v1081, %v1080
          %v1083 = vunpack.c.h.b16 %v1074
          %v1084 = vunpack.c.h.b16 %v1076
          %v1085 = vpack.c.b16 %v1084, %v1083
          %vm1086 = vcmask 261120
          %v1088 = vsel %vm1086, %v1082, 0
          %v1091 = vsel %vm1086, %v1085, 0
          %1093 = vmatpush.bf16.xpose.msra.mxu0 0
          %1094 = vmatpush.bf16.xpose.msra.mxu0 0
          %1095 = vmatpush.bf16.xpose.msra.mxu0 0
          %1096 = vmatpush.bf16.xpose.msra.mxu0 0
          %1097 = vmatpush.bf16.xpose.msra.mxu0 0
          %1098 = vmatpush.bf16.xpose.msra.mxu0 0
          %1099 = vmatpush.bf16.xpose.msra.mxu0 0
          %1100 = vmatpush.bf16.xpose.msra.mxu0 %v1091
          %1101 = vmatmul.bf16.gmra.mxu0 %v1088
          %v1102 = vpop.f32.mrf.mxu0
          %v1103 = vadd.f32 0.0, %v1102
          %v1104 = vpop.f32.mrf.mxu0
          %v1105 = vadd.f32 0.0, %v1104
          %1106 = vdwg.mxu0
          %vm1107 = vcmask 130048
          %v1108 = vsel %vm1107, %v1103, -inf
          %1109 = vmax.xlane.f32.xlu0 %v1108
          %v1110 = vpop.xlane.xlu0 %1109
          %v1111 = vsel %vm1107, %v1105, -inf
          %1112 = vmax.xlane.f32.xlu0 %v1111
          %v1113 = vpop.xlane.xlu0 %1112
          %v1114 = vsub.f32 %v1103, %v1110
          %v1115 = vsub.f32 %v1105, %v1113
          %v1116 = vmul.f32 %v1114, 1.442695
          %v1117 = vpow.pop %v1116
          %v1118 = vmul.f32 %v1115, 1.442695
          %v1119 = vpow.pop %v1118
          %v1120 = vsel %vm1107, %v1117, 0.0
          %1121 = vadd.xlane.f32.xlu0 %v1120
          %v1122 = vpop.xlane.xlu0 %1121
          %v1123 = vsel %vm1107, %v1119, 0.0
          %1124 = vadd.xlane.f32.xlu0 %v1123
          %v1125 = vpop.xlane.xlu0 %1124
          %v1126 = vrcp.pop %v1122
          %v1127 = vrcp.pop %v1125
          %v1128 = vmul.f32 %v1117, %v1126
          %v1129 = vmul.f32 %v1119, %v1127
          %v1130 = vpack.c.bf16 %v1129, %v1128
          %v1133 = vunpack.c.l.b16 %v1075
          %v1134 = vunpack.c.l.b16 %v1077
          %v1135 = vpack.c.b16 %v1134, %v1133
          %v1138 = vsel %vm1107, %v1130, 0
          %1140 = vmatpush.bf16.msra.mxu0 0
          %1141 = vmatpush.bf16.msra.mxu0 0
          %1142 = vmatpush.bf16.msra.mxu0 0
          %1143 = vmatpush.bf16.msra.mxu0 0
          %1144 = vmatpush.bf16.msra.mxu0 0
          %1145 = vmatpush.bf16.msra.mxu0 0
          %1146 = vmatpush.bf16.msra.mxu0 0
          %1147 = vmatpush.bf16.msra.mxu0 %v1135
          %1148 = vmatmul.bf16.gmra.mxu0 %v1138
          %v1149 = vpop.f32.mrf.mxu0
          %v1150 = vadd.f32 0.0, %v1149
          %v1151 = vpop.f32.mrf.mxu0
          %v1152 = vadd.f32 0.0, %v1151
          %1153 = vdwg.mxu0
          %1154 = vrot.lane.b32.xlu0 %v1082, 96
          %v1155 = vpop.permute.xlu0 %1154
          %1156 = vrot.lane.b32.xlu0 %v1085, 96
          %v1157 = vpop.permute.xlu0 %1156
          %v1159 = vsel %vm1086, %v1155, 0
          %v1162 = vsel %vm1086, %v1157, 0
          %1164 = vmatpush.bf16.xpose.msra.mxu0 0
          %1165 = vmatpush.bf16.xpose.msra.mxu0 0
          %1166 = vmatpush.bf16.xpose.msra.mxu0 0
          %1167 = vmatpush.bf16.xpose.msra.mxu0 0
          %1168 = vmatpush.bf16.xpose.msra.mxu0 0
          %1169 = vmatpush.bf16.xpose.msra.mxu0 0
          %1170 = vmatpush.bf16.xpose.msra.mxu0 0
          %1171 = vmatpush.bf16.xpose.msra.mxu0 %v1162
          %1172 = vmatmul.bf16.gmra.mxu0 %v1159
          %v1173 = vpop.f32.mrf.mxu0
          %v1174 = vadd.f32 0.0, %v1173
          %v1175 = vpop.f32.mrf.mxu0
          %v1176 = vadd.f32 0.0, %v1175
          %1177 = vdwg.mxu0
          %v1178 = vsel %vm1107, %v1174, -inf
          %1179 = vmax.xlane.f32.xlu0 %v1178
          %v1180 = vpop.xlane.xlu0 %1179
          %v1181 = vsel %vm1107, %v1176, -inf
          %1182 = vmax.xlane.f32.xlu0 %v1181
          %v1183 = vpop.xlane.xlu0 %1182
          %v1184 = vsub.f32 %v1174, %v1180
          %v1185 = vsub.f32 %v1176, %v1183
          %v1186 = vmul.f32 %v1184, 1.442695
          %v1187 = vpow.pop %v1186
          %v1188 = vmul.f32 %v1185, 1.442695
          %v1189 = vpow.pop %v1188
          %v1190 = vsel %vm1107, %v1187, 0.0
          %1191 = vadd.xlane.f32.xlu0 %v1190
          %v1192 = vpop.xlane.xlu0 %1191
          %v1193 = vsel %vm1107, %v1189, 0.0
          %1194 = vadd.xlane.f32.xlu0 %v1193
          %v1195 = vpop.xlane.xlu0 %1194
          %v1196 = vrcp.pop %v1192
          %v1197 = vrcp.pop %v1195
          %v1198 = vmul.f32 %v1187, %v1196
          %v1199 = vmul.f32 %v1189, %v1197
          %v1200 = vpack.c.bf16 %v1199, %v1198
          %1201 = vrot.lane.b32.xlu0 %v1135, 96
          %v1202 = vpop.permute.xlu0 %1201
          %v1205 = vsel %vm1107, %v1200, 0
          %1207 = vmatpush.bf16.msra.mxu0 0
          %1208 = vmatpush.bf16.msra.mxu0 0
          %1209 = vmatpush.bf16.msra.mxu0 0
          %1210 = vmatpush.bf16.msra.mxu0 0
          %1211 = vmatpush.bf16.msra.mxu0 0
          %1212 = vmatpush.bf16.msra.mxu0 0
          %1213 = vmatpush.bf16.msra.mxu0 0
          %1214 = vmatpush.bf16.msra.mxu0 %v1202
          %1215 = vmatmul.bf16.gmra.mxu0 %v1205
          %v1216 = vpop.f32.mrf.mxu0
          %v1217 = vadd.f32 0.0, %v1216
          %v1218 = vpop.f32.mrf.mxu0
          %v1219 = vadd.f32 0.0, %v1218
          %1220 = vdwg.mxu0
          %1221 = vrot.lane.b32.xlu0 %v1082, 64
          %v1222 = vpop.permute.xlu0 %1221
          %1223 = vrot.lane.b32.xlu0 %v1085, 64
          %v1224 = vpop.permute.xlu0 %1223
          %v1226 = vsel %vm1086, %v1222, 0
          %v1229 = vsel %vm1086, %v1224, 0
          %1231 = vmatpush.bf16.xpose.msra.mxu0 0
          %1232 = vmatpush.bf16.xpose.msra.mxu0 0
          %1233 = vmatpush.bf16.xpose.msra.mxu0 0
          %1234 = vmatpush.bf16.xpose.msra.mxu0 0
          %1235 = vmatpush.bf16.xpose.msra.mxu0 0
          %1236 = vmatpush.bf16.xpose.msra.mxu0 0
          %1237 = vmatpush.bf16.xpose.msra.mxu0 0
          %1238 = vmatpush.bf16.xpose.msra.mxu0 %v1229
          %1239 = vmatmul.bf16.gmra.mxu0 %v1226
          %v1240 = vpop.f32.mrf.mxu0
          %v1241 = vadd.f32 0.0, %v1240
          %v1242 = vpop.f32.mrf.mxu0
          %v1243 = vadd.f32 0.0, %v1242
          %1244 = vdwg.mxu0
          %v1245 = vsel %vm1107, %v1241, -inf
          %1246 = vmax.xlane.f32.xlu0 %v1245
          %v1247 = vpop.xlane.xlu0 %1246
          %v1248 = vsel %vm1107, %v1243, -inf
          %1249 = vmax.xlane.f32.xlu0 %v1248
          %v1250 = vpop.xlane.xlu0 %1249
          %v1251 = vsub.f32 %v1241, %v1247
          %v1252 = vsub.f32 %v1243, %v1250
          %v1253 = vmul.f32 %v1251, 1.442695
          %v1254 = vpow.pop %v1253
          %v1255 = vmul.f32 %v1252, 1.442695
          %v1256 = vpow.pop %v1255
          %v1257 = vsel %vm1107, %v1254, 0.0
          %1258 = vadd.xlane.f32.xlu0 %v1257
          %v1259 = vpop.xlane.xlu0 %1258
          %v1260 = vsel %vm1107, %v1256, 0.0
          %1261 = vadd.xlane.f32.xlu0 %v1260
          %v1262 = vpop.xlane.xlu0 %1261
          %v1263 = vrcp.pop %v1259
          %v1264 = vrcp.pop %v1262
          %v1265 = vmul.f32 %v1254, %v1263
          %v1266 = vmul.f32 %v1256, %v1264
          %v1267 = vpack.c.bf16 %v1266, %v1265
          %1268 = vrot.lane.b32.xlu0 %v1135, 64
          %v1269 = vpop.permute.xlu0 %1268
          %v1272 = vsel %vm1107, %v1267, 0
          %1274 = vmatpush.bf16.msra.mxu0 0
          %1275 = vmatpush.bf16.msra.mxu0 0
          %1276 = vmatpush.bf16.msra.mxu0 0
          %1277 = vmatpush.bf16.msra.mxu0 0
          %1278 = vmatpush.bf16.msra.mxu0 0
          %1279 = vmatpush.bf16.msra.mxu0 0
          %1280 = vmatpush.bf16.msra.mxu0 0
          %1281 = vmatpush.bf16.msra.mxu0 %v1269
          %1282 = vmatmul.bf16.gmra.mxu0 %v1272
          %v1283 = vpop.f32.mrf.mxu0
          %v1284 = vadd.f32 0.0, %v1283
          %v1285 = vpop.f32.mrf.mxu0
          %v1286 = vadd.f32 0.0, %v1285
          %1287 = vdwg.mxu0
          %1288 = vrot.lane.b32.xlu0 %v1082, 32
          %v1289 = vpop.permute.xlu0 %1288
          %1290 = vrot.lane.b32.xlu0 %v1085, 32
          %v1291 = vpop.permute.xlu0 %1290
          %v1293 = vsel %vm1086, %v1289, 0
          %v1296 = vsel %vm1086, %v1291, 0
          %1298 = vmatpush.bf16.xpose.msra.mxu0 0
          %1299 = vmatpush.bf16.xpose.msra.mxu0 0
          %1300 = vmatpush.bf16.xpose.msra.mxu0 0
          %1301 = vmatpush.bf16.xpose.msra.mxu0 0
          %1302 = vmatpush.bf16.xpose.msra.mxu0 0
          %1303 = vmatpush.bf16.xpose.msra.mxu0 0
          %1304 = vmatpush.bf16.xpose.msra.mxu0 0
          %1305 = vmatpush.bf16.xpose.msra.mxu0 %v1296
          %1306 = vmatmul.bf16.gmra.mxu0 %v1293
          %v1307 = vpop.f32.mrf.mxu0
          %v1308 = vadd.f32 0.0, %v1307
          %v1309 = vpop.f32.mrf.mxu0
          %v1310 = vadd.f32 0.0, %v1309
          %1311 = vdwg.mxu0
          %v1312 = vsel %vm1107, %v1308, -inf
          %1313 = vmax.xlane.f32.xlu0 %v1312
          %v1314 = vpop.xlane.xlu0 %1313
          %v1315 = vsel %vm1107, %v1310, -inf
          %1316 = vmax.xlane.f32.xlu0 %v1315
          %v1317 = vpop.xlane.xlu0 %1316
          %v1318 = vsub.f32 %v1308, %v1314
          %v1319 = vsub.f32 %v1310, %v1317
          %v1320 = vmul.f32 %v1318, 1.442695
          %v1321 = vpow.pop %v1320
          %v1322 = vmul.f32 %v1319, 1.442695
          %v1323 = vpow.pop %v1322
          %v1324 = vsel %vm1107, %v1321, 0.0
          %1325 = vadd.xlane.f32.xlu0 %v1324
          %v1326 = vpop.xlane.xlu0 %1325
          %v1327 = vsel %vm1107, %v1323, 0.0
          %1328 = vadd.xlane.f32.xlu0 %v1327
          %v1329 = vpop.xlane.xlu0 %1328
          %v1330 = vrcp.pop %v1326
          %v1331 = vrcp.pop %v1329
          %v1332 = vmul.f32 %v1321, %v1330
          %v1333 = vmul.f32 %v1323, %v1331
          %v1334 = vpack.c.bf16 %v1333, %v1332
          %1335 = vrot.lane.b32.xlu0 %v1135, 32
          %v1336 = vpop.permute.xlu0 %1335
          %v1339 = vsel %vm1107, %v1334, 0
          %1341 = vmatpush.bf16.msra.mxu0 0
          %1342 = vmatpush.bf16.msra.mxu0 0
          %1343 = vmatpush.bf16.msra.mxu0 0
          %1344 = vmatpush.bf16.msra.mxu0 0
          %1345 = vmatpush.bf16.msra.mxu0 0
          %1346 = vmatpush.bf16.msra.mxu0 0
          %1347 = vmatpush.bf16.msra.mxu0 0
          %1348 = vmatpush.bf16.msra.mxu0 %v1336
          %1349 = vmatmul.bf16.gmra.mxu0 %v1339
          %v1350 = vpop.f32.mrf.mxu0
          %v1351 = vadd.f32 0.0, %v1350
          %v1352 = vpop.f32.mrf.mxu0
          %v1353 = vadd.f32 0.0, %v1352
          %1354 = vdwg.mxu0
          %1357 = vrot.lane.b32.xlu0 %v1217, 32
          %v1358 = vpop.permute.xlu0 %1357
          %1359 = vrot.lane.b32.xlu0 %v1219, 32
          %v1360 = vpop.permute.xlu0 %1359
          %1365 = vrot.lane.b32.xlu0 %v1284, 64
          %v1366 = vpop.permute.xlu0 %1365
          %1367 = vrot.lane.b32.xlu0 %v1286, 64
          %v1368 = vpop.permute.xlu0 %1367
          %1373 = vrot.lane.b32.xlu0 %v1351, 96
          %v1374 = vpop.permute.xlu0 %1373
          %1375 = vrot.lane.b32.xlu0 %v1353, 96
          %v1376 = vpop.permute.xlu0 %1375
          %v1379 = vsel %vm1086, %v1150, %v1358
          %v1380 = vsel %vm1086, %v1152, %v1360
          %vm1381 = vcmask 523264
          %v1382 = vsel %vm1381, %v1379, %v1366
          %v1383 = vsel %vm1381, %v1380, %v1368
          %vm1384 = vcmask 785408
          %v1385 = vsel %vm1384, %v1382, %v1374
          %v1386 = vsel %vm1384, %v1383, %v1376
          %v1387 = vpack.c.bf16 %v1385, %v1385
          %v1388 = vpack.c.bf16 %v1386, %v1386
          %s1389 = smul.u32 %s1066, 2
          %s1390 = smul.addr %s1389, 4
          %s1391 = scalar_lea.vmem [#allocation3], %s1390
          %1392 = vst [vmem:[%s1391] sm:$0xf] %v1387
          %1393 = vst [vmem:[%s1391 + $0x4] sm:$0xf] %v1388
        $region109: #{tpu_custom_call.1} parent=71 // loop_footer
          %s1070 = sadd.s32 1, %s1066
        $region110: #{tpu_custom_call.1} parent=71 // loop_footer_branch
          %1065 = sbr.rel target = $region106
        $region111: #{tpu_custom_call.1} parent=71 // loop_exit
          _
        %v1394 = vld [vmem:[#allocation3] sm:$0xf]
        %v1395 = vld [vmem:[#allocation3 + $0x4] sm:$0xf]
        %v1396 = vld [vmem:[#allocation3 + $0x8] sm:$0xf]
        %v1397 = vld [vmem:[#allocation3 + $0xc] sm:$0xf]
        %v1398 = vld [vmem:[#allocation3 + $0x10] sm:$0xf]
        %v1399 = vld [vmem:[#allocation3 + $0x14] sm:$0xf]
        %v1400 = vld [vmem:[#allocation3 + $0x18] sm:$0xf]
        %v1401 = vld [vmem:[#allocation3 + $0x1c] sm:$0xf]
        %v1402 = vld [vmem:[#allocation12] sm:$0xf]
        %v1403 = vld [vmem:[#allocation12 + $0x4] sm:$0xf]
        %v1404 = vld [vmem:[#allocation12 + $0x8] sm:$0xf]
        %v1405 = vld [vmem:[#allocation12 + $0xc] sm:$0xf]
        %v1406 = vld [vmem:[#allocation12 + $0x10] sm:$0xf]
        %v1407 = vld [vmem:[#allocation12 + $0x14] sm:$0xf]
        %v1408 = vld [vmem:[#allocation12 + $0x18] sm:$0xf]
        %v1409 = vld [vmem:[#allocation12 + $0x1c] sm:$0xf]
        %v1410 = vld [vmem:[#allocation12 + $0x20] sm:$0xf]
        %v1411 = vld [vmem:[#allocation12 + $0x24] sm:$0xf]
        %v1412 = vld [vmem:[#allocation12 + $0x28] sm:$0xf]
        %v1413 = vld [vmem:[#allocation12 + $0x2c] sm:$0xf]
        %v1414 = vld [vmem:[#allocation12 + $0x30] sm:$0xf]
        %v1415 = vld [vmem:[#allocation12 + $0x34] sm:$0xf]
        %v1416 = vld [vmem:[#allocation12 + $0x38] sm:$0xf]
        %v1417 = vld [vmem:[#allocation12 + $0x3c] sm:$0xf]
        %v1418 = vld [vmem:[#allocation13] sm:$0x1]
        %v1420 = vperm.slane %v1418, 0
        %v1430 = vunpack.c.l.b16 %v1394
        %v1431 = vunpack.c.l.b16 %v1395
        %v1432 = vunpack.c.l.b16 %v1396
        %v1433 = vunpack.c.l.b16 %v1397
        %v1434 = vunpack.c.l.b16 %v1398
        %v1435 = vunpack.c.l.b16 %v1399
        %v1436 = vunpack.c.l.b16 %v1400
        %v1437 = vunpack.c.l.b16 %v1401
        %v1438 = vpack.c.b16 %v1431, %v1430
        %v1439 = vpack.c.b16 %v1433, %v1432
        %v1440 = vpack.c.b16 %v1435, %v1434
        %v1441 = vpack.c.b16 %v1437, %v1436
        %v1462 = vunpack.c.l.b16 %v1402
        %v1463 = vunpack.c.l.b16 %v1403
        %v1464 = vunpack.c.l.b16 %v1404
        %v1465 = vunpack.c.l.b16 %v1405
        %v1466 = vunpack.c.l.b16 %v1406
        %v1467 = vunpack.c.l.b16 %v1407
        %v1468 = vunpack.c.l.b16 %v1408
        %v1469 = vunpack.c.l.b16 %v1409
        %v1470 = vunpack.c.l.b16 %v1410
        %v1471 = vunpack.c.l.b16 %v1411
        %v1472 = vunpack.c.l.b16 %v1412
        %v1473 = vunpack.c.l.b16 %v1413
        %v1474 = vunpack.c.l.b16 %v1414
        %v1475 = vunpack.c.l.b16 %v1415
        %v1476 = vunpack.c.l.b16 %v1416
        %v1477 = vunpack.c.l.b16 %v1417
        %v1478 = vpack.c.b16 %v1463, %v1462
        %v1479 = vpack.c.b16 %v1465, %v1464
        %v1480 = vpack.c.b16 %v1467, %v1466
        %v1481 = vpack.c.b16 %v1469, %v1468
        %v1482 = vpack.c.b16 %v1471, %v1470
        %v1483 = vpack.c.b16 %v1473, %v1472
        %v1484 = vpack.c.b16 %v1475, %v1474
        %v1485 = vpack.c.b16 %v1477, %v1476
        %1494 = vmatpush.bf16.msra.mxu0 %v1485
        %1495 = vmatpush.bf16.msra.mxu0 %v1484
        %1496 = vmatpush.bf16.msra.mxu0 %v1483
        %1497 = vmatpush.bf16.msra.mxu0 %v1482
        %1498 = vmatpush.bf16.msra.mxu0 %v1481
        %1499 = vmatpush.bf16.msra.mxu0 %v1480
        %1500 = vmatpush.bf16.msra.mxu0 %v1479
        %1501 = vmatpush.bf16.msra.mxu0 %v1478
        %1502 = vmatmul.bf16.gmra.mxu0 %v1438
        %v1503 = vpop.f32.mrf.mxu0
        %v1504 = vadd.f32 %v1420, %v1503
        %v1505 = vpop.f32.mrf.mxu0
        %v1506 = vadd.f32 %v1420, %v1505
        %1507 = vmatmul.bf16.gmra.mxu0 %v1439
        %v1508 = vpop.f32.mrf.mxu0
        %v1509 = vadd.f32 %v1420, %v1508
        %v1510 = vpop.f32.mrf.mxu0
        %v1511 = vadd.f32 %v1420, %v1510
        %1512 = vmatmul.bf16.gmra.mxu0 %v1440
        %v1513 = vpop.f32.mrf.mxu0
        %v1514 = vadd.f32 %v1420, %v1513
        %v1515 = vpop.f32.mrf.mxu0
        %v1516 = vadd.f32 %v1420, %v1515
        %1517 = vmatmul.bf16.gmra.mxu0 %v1441
        %v1518 = vpop.f32.mrf.mxu0
        %v1519 = vadd.f32 %v1420, %v1518
        %v1520 = vpop.f32.mrf.mxu0
        %v1521 = vadd.f32 %v1420, %v1520
        %1522 = vdwg.mxu0
        %v1523 = vadd.f32 %v575, %v1504
        %v1524 = vadd.f32 %v576, %v1506
        %v1525 = vadd.f32 %v577, %v1509
        %v1526 = vadd.f32 %v578, %v1511
        %v1527 = vadd.f32 %v579, %v1514
        %v1528 = vadd.f32 %v580, %v1516
        %v1529 = vadd.f32 %v581, %v1519
        %v1530 = vadd.f32 %v582, %v1521
        %v1531 = vld [vmem:[%s7] sm:$0x1]
        %v1532 = vld [vmem:[%s8] sm:$0x1]
        %1533 = vadd.xlane.f32.xlu0 %v1523
        %v1534 = vpop.xlane.xlu0 %1533
        %1535 = vadd.xlane.f32.xlu0 %v1524
        %v1536 = vpop.xlane.xlu0 %1535
        %1537 = vadd.xlane.f32.xlu0 %v1525
        %v1538 = vpop.xlane.xlu0 %1537
        %1539 = vadd.xlane.f32.xlu0 %v1526
        %v1540 = vpop.xlane.xlu0 %1539
        %1541 = vadd.xlane.f32.xlu0 %v1527
        %v1542 = vpop.xlane.xlu0 %1541
        %1543 = vadd.xlane.f32.xlu0 %v1528
        %v1544 = vpop.xlane.xlu0 %1543
        %1545 = vadd.xlane.f32.xlu0 %v1529
        %v1546 = vpop.xlane.xlu0 %1545
        %1547 = vadd.xlane.f32.xlu0 %v1530
        %v1548 = vpop.xlane.xlu0 %1547
        %v1549 = vmul.f32 %v1534, %v607
        %v1550 = vmul.f32 %v1536, %v607
        %v1551 = vmul.f32 %v1538, %v607
        %v1552 = vmul.f32 %v1540, %v607
        %v1553 = vmul.f32 %v1542, %v607
        %v1554 = vmul.f32 %v1544, %v607
        %v1555 = vmul.f32 %v1546, %v607
        %v1556 = vmul.f32 %v1548, %v607
        %v1557 = vsub.f32 %v1523, %v1549
        %v1558 = vsub.f32 %v1524, %v1550
        %v1559 = vsub.f32 %v1525, %v1551
        %v1560 = vsub.f32 %v1526, %v1552
        %v1561 = vsub.f32 %v1527, %v1553
        %v1562 = vsub.f32 %v1528, %v1554
        %v1563 = vsub.f32 %v1529, %v1555
        %v1564 = vsub.f32 %v1530, %v1556
        %v1565 = vmul.f32 %v1557, %v1557
        %v1566 = vmul.f32 %v1558, %v1558
        %v1567 = vmul.f32 %v1559, %v1559
        %v1568 = vmul.f32 %v1560, %v1560
        %v1569 = vmul.f32 %v1561, %v1561
        %v1570 = vmul.f32 %v1562, %v1562
        %v1571 = vmul.f32 %v1563, %v1563
        %v1572 = vmul.f32 %v1564, %v1564
        %1573 = vadd.xlane.f32.xlu0 %v1565
        %v1574 = vpop.xlane.xlu0 %1573
        %1575 = vadd.xlane.f32.xlu0 %v1566
        %v1576 = vpop.xlane.xlu0 %1575
        %1577 = vadd.xlane.f32.xlu0 %v1567
        %v1578 = vpop.xlane.xlu0 %1577
        %1579 = vadd.xlane.f32.xlu0 %v1568
        %v1580 = vpop.xlane.xlu0 %1579
        %1581 = vadd.xlane.f32.xlu0 %v1569
        %v1582 = vpop.xlane.xlu0 %1581
        %1583 = vadd.xlane.f32.xlu0 %v1570
        %v1584 = vpop.xlane.xlu0 %1583
        %1585 = vadd.xlane.f32.xlu0 %v1571
        %v1586 = vpop.xlane.xlu0 %1585
        %1587 = vadd.xlane.f32.xlu0 %v1572
        %v1588 = vpop.xlane.xlu0 %1587
        %v1589 = vmul.f32 %v1574, %v607
        %v1590 = vmul.f32 %v1576, %v607
        %v1591 = vmul.f32 %v1578, %v607
        %v1592 = vmul.f32 %v1580, %v607
        %v1593 = vmul.f32 %v1582, %v607
        %v1594 = vmul.f32 %v1584, %v607
        %v1595 = vmul.f32 %v1586, %v607
        %v1596 = vmul.f32 %v1588, %v607
        %v1597 = vadd.f32 %v1589, 1e-05
        %v1598 = vadd.f32 %v1590, 1e-05
        %v1599 = vadd.f32 %v1591, 1e-05
        %v1600 = vadd.f32 %v1592, 1e-05
        %v1601 = vadd.f32 %v1593, 1e-05
        %v1602 = vadd.f32 %v1594, 1e-05
        %v1603 = vadd.f32 %v1595, 1e-05
        %v1604 = vadd.f32 %v1596, 1e-05
        %v1605 = vrsqrt.pop %v1597
        %v1606 = vmul.f32 %v1605, %v1597
        %v1607 = vmul.f32 %v1606, %v1605
        %v1608 = vmul.f32 0.5, %v1607
        %v1609 = vsub.f32 1.5, %v1608
        %v1610 = vmul.f32 %v1605, %v1609
        %vm1611 = vweird.f32 %v1597
        %vm1612 = vweird.f32 %v1605
        %vm1613 = vmor %vm1611, %vm1612
        %v1614 = vsel %vm1613, %v1605, %v1610
        %v1615 = vrsqrt.pop %v1598
        %v1616 = vmul.f32 %v1615, %v1598
        %v1617 = vmul.f32 %v1616, %v1615
        %v1618 = vmul.f32 0.5, %v1617
        %v1619 = vsub.f32 1.5, %v1618
        %v1620 = vmul.f32 %v1615, %v1619
        %vm1621 = vweird.f32 %v1598
        %vm1622 = vweird.f32 %v1615
        %vm1623 = vmor %vm1621, %vm1622
        %v1624 = vsel %vm1623, %v1615, %v1620
        %v1625 = vrsqrt.pop %v1599
        %v1626 = vmul.f32 %v1625, %v1599
        %v1627 = vmul.f32 %v1626, %v1625
        %v1628 = vmul.f32 0.5, %v1627
        %v1629 = vsub.f32 1.5, %v1628
        %v1630 = vmul.f32 %v1625, %v1629
        %vm1631 = vweird.f32 %v1599
        %vm1632 = vweird.f32 %v1625
        %vm1633 = vmor %vm1631, %vm1632
        %v1634 = vsel %vm1633, %v1625, %v1630
        %v1635 = vrsqrt.pop %v1600
        %v1636 = vmul.f32 %v1635, %v1600
        %v1637 = vmul.f32 %v1636, %v1635
        %v1638 = vmul.f32 0.5, %v1637
        %v1639 = vsub.f32 1.5, %v1638
        %v1640 = vmul.f32 %v1635, %v1639
        %vm1641 = vweird.f32 %v1600
        %vm1642 = vweird.f32 %v1635
        %vm1643 = vmor %vm1641, %vm1642
        %v1644 = vsel %vm1643, %v1635, %v1640
        %v1645 = vrsqrt.pop %v1601
        %v1646 = vmul.f32 %v1645, %v1601
        %v1647 = vmul.f32 %v1646, %v1645
        %v1648 = vmul.f32 0.5, %v1647
        %v1649 = vsub.f32 1.5, %v1648
        %v1650 = vmul.f32 %v1645, %v1649
        %vm1651 = vweird.f32 %v1601
        %vm1652 = vweird.f32 %v1645
        %vm1653 = vmor %vm1651, %vm1652
        %v1654 = vsel %vm1653, %v1645, %v1650
        %v1655 = vrsqrt.pop %v1602
        %v1656 = vmul.f32 %v1655, %v1602
        %v1657 = vmul.f32 %v1656, %v1655
        %v1658 = vmul.f32 0.5, %v1657
        %v1659 = vsub.f32 1.5, %v1658
        %v1660 = vmul.f32 %v1655, %v1659
        %vm1661 = vweird.f32 %v1602
        %vm1662 = vweird.f32 %v1655
        %vm1663 = vmor %vm1661, %vm1662
        %v1664 = vsel %vm1663, %v1655, %v1660
        %v1665 = vrsqrt.pop %v1603
        %v1666 = vmul.f32 %v1665, %v1603
        %v1667 = vmul.f32 %v1666, %v1665
        %v1668 = vmul.f32 0.5, %v1667
        %v1669 = vsub.f32 1.5, %v1668
        %v1670 = vmul.f32 %v1665, %v1669
        %vm1671 = vweird.f32 %v1603
        %vm1672 = vweird.f32 %v1665
        %vm1673 = vmor %vm1671, %vm1672
        %v1674 = vsel %vm1673, %v1665, %v1670
        %v1675 = vrsqrt.pop %v1604
        %v1676 = vmul.f32 %v1675, %v1604
        %v1677 = vmul.f32 %v1676, %v1675
        %v1678 = vmul.f32 0.5, %v1677
        %v1679 = vsub.f32 1.5, %v1678
        %v1680 = vmul.f32 %v1675, %v1679
        %vm1681 = vweird.f32 %v1604
        %vm1682 = vweird.f32 %v1675
        %vm1683 = vmor %vm1681, %vm1682
        %v1684 = vsel %vm1683, %v1675, %v1680
        %v1685 = vmul.f32 %v1557, %v1614
        %v1686 = vmul.f32 %v1558, %v1624
        %v1687 = vmul.f32 %v1559, %v1634
        %v1688 = vmul.f32 %v1560, %v1644
        %v1689 = vmul.f32 %v1561, %v1654
        %v1690 = vmul.f32 %v1562, %v1664
        %v1691 = vmul.f32 %v1563, %v1674
        %v1692 = vmul.f32 %v1564, %v1684
        %v1694 = vperm.slane %v1531, 0
        %v1696 = vmul.f32 %v1685, %v1694
        %v1697 = vmul.f32 %v1686, %v1694
        %v1698 = vmul.f32 %v1687, %v1694
        %v1699 = vmul.f32 %v1688, %v1694
        %v1700 = vmul.f32 %v1689, %v1694
        %v1701 = vmul.f32 %v1690, %v1694
        %v1702 = vmul.f32 %v1691, %v1694
        %v1703 = vmul.f32 %v1692, %v1694
        %v1705 = vperm.slane %v1532, 0
        %v1707 = vadd.f32 %v1696, %v1705
        %v1708 = vadd.f32 %v1697, %v1705
        %v1709 = vadd.f32 %v1698, %v1705
        %v1710 = vadd.f32 %v1699, %v1705
        %v1711 = vadd.f32 %v1700, %v1705
        %v1712 = vadd.f32 %v1701, %v1705
        %v1713 = vadd.f32 %v1702, %v1705
        %v1714 = vadd.f32 %v1703, %v1705
        %v1715 = vpack.c.bf16 %v1708, %v1707
        %v1716 = vpack.c.bf16 %v1710, %v1709
        %v1717 = vpack.c.bf16 %v1712, %v1711
        %v1718 = vpack.c.bf16 %v1714, %v1713
        %v1719 = vld [vmem:[#allocation15] sm:$0xff]
        %v1720 = vld [vmem:[#allocation15 + $0x8] sm:$0xff]
        %v1721 = vld [vmem:[#allocation15 + $0x10] sm:$0xff]
        %v1722 = vld [vmem:[#allocation15 + $0x18] sm:$0xff]
        %v1723 = vld [vmem:[#allocation15 + $0x20] sm:$0xff]
        %v1724 = vld [vmem:[#allocation15 + $0x28] sm:$0xff]
        %v1725 = vld [vmem:[#allocation15 + $0x30] sm:$0xff]
        %v1726 = vld [vmem:[#allocation15 + $0x38] sm:$0xff]
        %v1727 = vld [vmem:[#allocation15 + $0x40] sm:$0xff]
        %v1728 = vld [vmem:[#allocation15 + $0x48] sm:$0xff]
        %v1729 = vld [vmem:[#allocation15 + $0x50] sm:$0xff]
        %v1730 = vld [vmem:[#allocation15 + $0x58] sm:$0xff]
        %v1731 = vld [vmem:[#allocation15 + $0x60] sm:$0xff]
        %v1732 = vld [vmem:[#allocation15 + $0x68] sm:$0xff]
        %v1733 = vld [vmem:[#allocation15 + $0x70] sm:$0xff]
        %v1734 = vld [vmem:[#allocation15 + $0x78] sm:$0xff]
        %v1735 = vld [vmem:[%s10] sm:$0x3]
        %v1737 = vperm.slane %v1735, 0
        %v1738 = vperm.slane %v1735, 1
        %v1757 = vunpack.c.l.b16 %v1719
        %v1758 = vunpack.c.h.b16 %v1719
        %v1759 = vunpack.c.l.b16 %v1720
        %v1760 = vunpack.c.h.b16 %v1720
        %v1761 = vunpack.c.l.b16 %v1721
        %v1762 = vunpack.c.h.b16 %v1721
        %v1763 = vunpack.c.l.b16 %v1722
        %v1764 = vunpack.c.h.b16 %v1722
        %v1765 = vunpack.c.l.b16 %v1723
        %v1766 = vunpack.c.h.b16 %v1723
        %v1767 = vunpack.c.l.b16 %v1724
        %v1768 = vunpack.c.h.b16 %v1724
        %v1769 = vunpack.c.l.b16 %v1725
        %v1770 = vunpack.c.h.b16 %v1725
        %v1771 = vunpack.c.l.b16 %v1726
        %v1772 = vunpack.c.h.b16 %v1726
        %v1773 = vunpack.c.l.b16 %v1727
        %v1774 = vunpack.c.h.b16 %v1727
        %v1775 = vunpack.c.l.b16 %v1728
        %v1776 = vunpack.c.h.b16 %v1728
        %v1777 = vunpack.c.l.b16 %v1729
        %v1778 = vunpack.c.h.b16 %v1729
        %v1779 = vunpack.c.l.b16 %v1730
        %v1780 = vunpack.c.h.b16 %v1730
        %v1781 = vunpack.c.l.b16 %v1731
        %v1782 = vunpack.c.h.b16 %v1731
        %v1783 = vunpack.c.l.b16 %v1732
        %v1784 = vunpack.c.h.b16 %v1732
        %v1785 = vunpack.c.l.b16 %v1733
        %v1786 = vunpack.c.h.b16 %v1733
        %v1787 = vunpack.c.l.b16 %v1734
        %v1788 = vunpack.c.h.b16 %v1734
        %v1789 = vpack.c.b16 %v1759, %v1757
        %v1790 = vpack.c.b16 %v1760, %v1758
        %v1791 = vpack.c.b16 %v1763, %v1761
        %v1792 = vpack.c.b16 %v1764, %v1762
        %v1793 = vpack.c.b16 %v1767, %v1765
        %v1794 = vpack.c.b16 %v1768, %v1766
        %v1795 = vpack.c.b16 %v1771, %v1769
        %v1796 = vpack.c.b16 %v1772, %v1770
        %v1797 = vpack.c.b16 %v1775, %v1773
        %v1798 = vpack.c.b16 %v1776, %v1774
        %v1799 = vpack.c.b16 %v1779, %v1777
        %v1800 = vpack.c.b16 %v1780, %v1778
        %v1801 = vpack.c.b16 %v1783, %v1781
        %v1802 = vpack.c.b16 %v1784, %v1782
        %v1803 = vpack.c.b16 %v1787, %v1785
        %v1804 = vpack.c.b16 %v1788, %v1786
        %1821 = vmatpush.bf16.msra.mxu0 %v1803
        %1822 = vmatpush.bf16.msra.mxu0 %v1801
        %1823 = vmatpush.bf16.msra.mxu0 %v1799
        %1824 = vmatpush.bf16.msra.mxu0 %v1797
        %1825 = vmatpush.bf16.msra.mxu0 %v1795
        %1826 = vmatpush.bf16.msra.mxu0 %v1793
        %1827 = vmatpush.bf16.msra.mxu0 %v1791
        %1828 = vmatpush.bf16.msra.mxu0 %v1789
        %1829 = vmatmul.bf16.gmra.mxu0 %v1715
        %v1830 = vpop.f32.mrf.mxu0
        %v1831 = vadd.f32 %v1737, %v1830
        %v1832 = vpop.f32.mrf.mxu0
        %v1833 = vadd.f32 %v1737, %v1832
        %1834 = vmatmul.bf16.gmra.mxu0 %v1716
        %v1835 = vpop.f32.mrf.mxu0
        %v1836 = vadd.f32 %v1737, %v1835
        %v1837 = vpop.f32.mrf.mxu0
        %v1838 = vadd.f32 %v1737, %v1837
        %1839 = vmatmul.bf16.gmra.mxu0 %v1717
        %v1840 = vpop.f32.mrf.mxu0
        %v1841 = vadd.f32 %v1737, %v1840
        %v1842 = vpop.f32.mrf.mxu0
        %v1843 = vadd.f32 %v1737, %v1842
        %1844 = vmatmul.bf16.gmra.mxu0 %v1718
        %v1845 = vpop.f32.mrf.mxu0
        %v1846 = vadd.f32 %v1737, %v1845
        %v1847 = vpop.f32.mrf.mxu0
        %v1848 = vadd.f32 %v1737, %v1847
        %1849 = vdwg.mxu0
        %1850 = vmatpush.bf16.msra.mxu0 %v1804
        %1851 = vmatpush.bf16.msra.mxu0 %v1802
        %1852 = vmatpush.bf16.msra.mxu0 %v1800
        %1853 = vmatpush.bf16.msra.mxu0 %v1798
        %1854 = vmatpush.bf16.msra.mxu0 %v1796
        %1855 = vmatpush.bf16.msra.mxu0 %v1794
        %1856 = vmatpush.bf16.msra.mxu0 %v1792
        %1857 = vmatpush.bf16.msra.mxu0 %v1790
        %1858 = vmatmul.bf16.gmra.mxu0 %v1715
        %v1859 = vpop.f32.mrf.mxu0
        %v1860 = vadd.f32 %v1738, %v1859
        %v1861 = vpop.f32.mrf.mxu0
        %v1862 = vadd.f32 %v1738, %v1861
        %1863 = vmatmul.bf16.gmra.mxu0 %v1716
        %v1864 = vpop.f32.mrf.mxu0
        %v1865 = vadd.f32 %v1738, %v1864
        %v1866 = vpop.f32.mrf.mxu0
        %v1867 = vadd.f32 %v1738, %v1866
        %1868 = vmatmul.bf16.gmra.mxu0 %v1717
        %v1869 = vpop.f32.mrf.mxu0
        %v1870 = vadd.f32 %v1738, %v1869
        %v1871 = vpop.f32.mrf.mxu0
        %v1872 = vadd.f32 %v1738, %v1871
        %1873 = vmatmul.bf16.gmra.mxu0 %v1718
        %v1874 = vpop.f32.mrf.mxu0
        %v1875 = vadd.f32 %v1738, %v1874
        %v1876 = vpop.f32.mrf.mxu0
        %v1877 = vadd.f32 %v1738, %v1876
        %1878 = vdwg.mxu0
        %v1879 = vmul.f32 %v1831, 0.5
        %v1880 = vmul.f32 %v1860, 0.5
        %v1881 = vmul.f32 %v1833, 0.5
        %v1882 = vmul.f32 %v1862, 0.5
        %v1883 = vmul.f32 %v1836, 0.5
        %v1884 = vmul.f32 %v1865, 0.5
        %v1885 = vmul.f32 %v1838, 0.5
        %v1886 = vmul.f32 %v1867, 0.5
        %v1887 = vmul.f32 %v1841, 0.5
        %v1888 = vmul.f32 %v1870, 0.5
        %v1889 = vmul.f32 %v1843, 0.5
        %v1890 = vmul.f32 %v1872, 0.5
        %v1891 = vmul.f32 %v1846, 0.5
        %v1892 = vmul.f32 %v1875, 0.5
        %v1893 = vmul.f32 %v1848, 0.5
        %v1894 = vmul.f32 %v1877, 0.5
        %v1895 = vmul.f32 %v1831, 0.70710677
        %v1896 = vmul.f32 %v1860, 0.70710677
        %v1897 = vmul.f32 %v1833, 0.70710677
        %v1898 = vmul.f32 %v1862, 0.70710677
        %v1899 = vmul.f32 %v1836, 0.70710677
        %v1900 = vmul.f32 %v1865, 0.70710677
        %v1901 = vmul.f32 %v1838, 0.70710677
        %v1902 = vmul.f32 %v1867, 0.70710677
        %v1903 = vmul.f32 %v1841, 0.70710677
        %v1904 = vmul.f32 %v1870, 0.70710677
        %v1905 = vmul.f32 %v1843, 0.70710677
        %v1906 = vmul.f32 %v1872, 0.70710677
        %v1907 = vmul.f32 %v1846, 0.70710677
        %v1908 = vmul.f32 %v1875, 0.70710677
        %v1909 = vmul.f32 %v1848, 0.70710677
        %v1910 = vmul.f32 %v1877, 0.70710677
        %vm1911 = vcmp.ge.f32.partialorder %v1895, 0.0
        %vm1912 = vcmp.ge.f32.partialorder %v1896, 0.0
        %vm1913 = vcmp.ge.f32.partialorder %v1897, 0.0
        %vm1914 = vcmp.ge.f32.partialorder %v1898, 0.0
        %vm1915 = vcmp.ge.f32.partialorder %v1899, 0.0
        %vm1916 = vcmp.ge.f32.partialorder %v1900, 0.0
        %vm1917 = vcmp.ge.f32.partialorder %v1901, 0.0
        %vm1918 = vcmp.ge.f32.partialorder %v1902, 0.0
        %vm1919 = vcmp.ge.f32.partialorder %v1903, 0.0
        %vm1920 = vcmp.ge.f32.partialorder %v1904, 0.0
        %vm1921 = vcmp.ge.f32.partialorder %v1905, 0.0
        %vm1922 = vcmp.ge.f32.partialorder %v1906, 0.0
        %vm1923 = vcmp.ge.f32.partialorder %v1907, 0.0
        %vm1924 = vcmp.ge.f32.partialorder %v1908, 0.0
        %vm1925 = vcmp.ge.f32.partialorder %v1909, 0.0
        %vm1926 = vcmp.ge.f32.partialorder %v1910, 0.0
        %v1927 = vsel %vm1911, 1.0, -1.0
        %v1928 = vsel %vm1912, 1.0, -1.0
        %v1929 = vsel %vm1913, 1.0, -1.0
        %v1930 = vsel %vm1914, 1.0, -1.0
        %v1931 = vsel %vm1915, 1.0, -1.0
        %v1932 = vsel %vm1916, 1.0, -1.0
        %v1933 = vsel %vm1917, 1.0, -1.0
        %v1934 = vsel %vm1918, 1.0, -1.0
        %v1935 = vsel %vm1919, 1.0, -1.0
        %v1936 = vsel %vm1920, 1.0, -1.0
        %v1937 = vsel %vm1921, 1.0, -1.0
        %v1938 = vsel %vm1922, 1.0, -1.0
        %v1939 = vsel %vm1923, 1.0, -1.0
        %v1940 = vsel %vm1924, 1.0, -1.0
        %v1941 = vsel %vm1925, 1.0, -1.0
        %v1942 = vsel %vm1926, 1.0, -1.0
        %v1943 = vand.u32 2147483647, %v1895
        %v1944 = vand.u32 2147483647, %v1896
        %v1945 = vand.u32 2147483647, %v1897
        %v1946 = vand.u32 2147483647, %v1898
        %v1947 = vand.u32 2147483647, %v1899
        %v1948 = vand.u32 2147483647, %v1900
        %v1949 = vand.u32 2147483647, %v1901
        %v1950 = vand.u32 2147483647, %v1902
        %v1951 = vand.u32 2147483647, %v1903
        %v1952 = vand.u32 2147483647, %v1904
        %v1953 = vand.u32 2147483647, %v1905
        %v1954 = vand.u32 2147483647, %v1906
        %v1955 = vand.u32 2147483647, %v1907
        %v1956 = vand.u32 2147483647, %v1908
        %v1957 = vand.u32 2147483647, %v1909
        %v1958 = vand.u32 2147483647, %v1910
        %v1959 = vmul.f32 %v1943, 0.3275911
        %v1960 = vmul.f32 %v1944, 0.3275911
        %v1961 = vmul.f32 %v1945, 0.3275911
        %v1962 = vmul.f32 %v1946, 0.3275911
        %v1963 = vmul.f32 %v1947, 0.3275911
        %v1964 = vmul.f32 %v1948, 0.3275911
        %v1965 = vmul.f32 %v1949, 0.3275911
        %v1966 = vmul.f32 %v1950, 0.3275911
        %v1967 = vmul.f32 %v1951, 0.3275911
        %v1968 = vmul.f32 %v1952, 0.3275911
        %v1969 = vmul.f32 %v1953, 0.3275911
        %v1970 = vmul.f32 %v1954, 0.3275911
        %v1971 = vmul.f32 %v1955, 0.3275911
        %v1972 = vmul.f32 %v1956, 0.3275911
        %v1973 = vmul.f32 %v1957, 0.3275911
        %v1974 = vmul.f32 %v1958, 0.3275911
        %v1975 = vadd.f32 %v1959, 1.0
        %v1976 = vadd.f32 %v1960, 1.0
        %v1977 = vadd.f32 %v1961, 1.0
        %v1978 = vadd.f32 %v1962, 1.0
        %v1979 = vadd.f32 %v1963, 1.0
        %v1980 = vadd.f32 %v1964, 1.0
        %v1981 = vadd.f32 %v1965, 1.0
        %v1982 = vadd.f32 %v1966, 1.0
        %v1983 = vadd.f32 %v1967, 1.0
        %v1984 = vadd.f32 %v1968, 1.0
        %v1985 = vadd.f32 %v1969, 1.0
        %v1986 = vadd.f32 %v1970, 1.0
        %v1987 = vadd.f32 %v1971, 1.0
        %v1988 = vadd.f32 %v1972, 1.0
        %v1989 = vadd.f32 %v1973, 1.0
        %v1990 = vadd.f32 %v1974, 1.0
        %v1991 = vrcp.pop %v1975
        %v1992 = vmul.f32 %v1975, %v1991
        %v1993 = vsub.f32 1.0, %v1992
        %v1994 = vmul.f32 %v1991, %v1993
        %v1995 = vadd.f32 %v1991, %v1994
        %vm1996 = vweird.f32 %v1975
        %vm1997 = vweird.f32 %v1991
        %vm1998 = vmor %vm1996, %vm1997
        %v1999 = vsel %vm1998, %v1991, %v1995
        %v2000 = vand.u32 2147483647, %v1975
        %vm2001 = vcmp.eq.f32.partialorder %v2000, 8.507059e+37
        %v2002 = vand.u32 %v1975, 2147483648
        %v2003 = vor.u32 1.1754944e-38, %v2002
        %v2004 = vsel %vm2001, %v2003, %v1999
        %v2005 = vmul.f32 1.0, %v2004
        %v2006 = vrcp.pop %v1976
        %v2007 = vmul.f32 %v1976, %v2006
        %v2008 = vsub.f32 1.0, %v2007
        %v2009 = vmul.f32 %v2006, %v2008
        %v2010 = vadd.f32 %v2006, %v2009
        %vm2011 = vweird.f32 %v1976
        %vm2012 = vweird.f32 %v2006
        %vm2013 = vmor %vm2011, %vm2012
        %v2014 = vsel %vm2013, %v2006, %v2010
        %v2015 = vand.u32 2147483647, %v1976
        %vm2016 = vcmp.eq.f32.partialorder %v2015, 8.507059e+37
        %v2017 = vand.u32 %v1976, 2147483648
        %v2018 = vor.u32 1.1754944e-38, %v2017
        %v2019 = vsel %vm2016, %v2018, %v2014
        %v2020 = vmul.f32 1.0, %v2019
        %v2021 = vrcp.pop %v1977
        %v2022 = vmul.f32 %v1977, %v2021
        %v2023 = vsub.f32 1.0, %v2022
        %v2024 = vmul.f32 %v2021, %v2023
        %v2025 = vadd.f32 %v2021, %v2024
        %vm2026 = vweird.f32 %v1977
        %vm2027 = vweird.f32 %v2021
        %vm2028 = vmor %vm2026, %vm2027
        %v2029 = vsel %vm2028, %v2021, %v2025
        %v2030 = vand.u32 2147483647, %v1977
        %vm2031 = vcmp.eq.f32.partialorder %v2030, 8.507059e+37
        %v2032 = vand.u32 %v1977, 2147483648
        %v2033 = vor.u32 1.1754944e-38, %v2032
        %v2034 = vsel %vm2031, %v2033, %v2029
        %v2035 = vmul.f32 1.0, %v2034
        %v2036 = vrcp.pop %v1978
        %v2037 = vmul.f32 %v1978, %v2036
        %v2038 = vsub.f32 1.0, %v2037
        %v2039 = vmul.f32 %v2036, %v2038
        %v2040 = vadd.f32 %v2036, %v2039
        %vm2041 = vweird.f32 %v1978
        %vm2042 = vweird.f32 %v2036
        %vm2043 = vmor %vm2041, %vm2042
        %v2044 = vsel %vm2043, %v2036, %v2040
        %v2045 = vand.u32 2147483647, %v1978
        %vm2046 = vcmp.eq.f32.partialorder %v2045, 8.507059e+37
        %v2047 = vand.u32 %v1978, 2147483648
        %v2048 = vor.u32 1.1754944e-38, %v2047
        %v2049 = vsel %vm2046, %v2048, %v2044
        %v2050 = vmul.f32 1.0, %v2049
        %v2051 = vrcp.pop %v1979
        %v2052 = vmul.f32 %v1979, %v2051
        %v2053 = vsub.f32 1.0, %v2052
        %v2054 = vmul.f32 %v2051, %v2053
        %v2055 = vadd.f32 %v2051, %v2054
        %vm2056 = vweird.f32 %v1979
        %vm2057 = vweird.f32 %v2051
        %vm2058 = vmor %vm2056, %vm2057
        %v2059 = vsel %vm2058, %v2051, %v2055
        %v2060 = vand.u32 2147483647, %v1979
        %vm2061 = vcmp.eq.f32.partialorder %v2060, 8.507059e+37
        %v2062 = vand.u32 %v1979, 2147483648
        %v2063 = vor.u32 1.1754944e-38, %v2062
        %v2064 = vsel %vm2061, %v2063, %v2059
        %v2065 = vmul.f32 1.0, %v2064
        %v2066 = vrcp.pop %v1980
        %v2067 = vmul.f32 %v1980, %v2066
        %v2068 = vsub.f32 1.0, %v2067
        %v2069 = vmul.f32 %v2066, %v2068
        %v2070 = vadd.f32 %v2066, %v2069
        %vm2071 = vweird.f32 %v1980
        %vm2072 = vweird.f32 %v2066
        %vm2073 = vmor %vm2071, %vm2072
        %v2074 = vsel %vm2073, %v2066, %v2070
        %v2075 = vand.u32 2147483647, %v1980
        %vm2076 = vcmp.eq.f32.partialorder %v2075, 8.507059e+37
        %v2077 = vand.u32 %v1980, 2147483648
        %v2078 = vor.u32 1.1754944e-38, %v2077
        %v2079 = vsel %vm2076, %v2078, %v2074
        %v2080 = vmul.f32 1.0, %v2079
        %v2081 = vrcp.pop %v1981
        %v2082 = vmul.f32 %v1981, %v2081
        %v2083 = vsub.f32 1.0, %v2082
        %v2084 = vmul.f32 %v2081, %v2083
        %v2085 = vadd.f32 %v2081, %v2084
        %vm2086 = vweird.f32 %v1981
        %vm2087 = vweird.f32 %v2081
        %vm2088 = vmor %vm2086, %vm2087
        %v2089 = vsel %vm2088, %v2081, %v2085
        %v2090 = vand.u32 2147483647, %v1981
        %vm2091 = vcmp.eq.f32.partialorder %v2090, 8.507059e+37
        %v2092 = vand.u32 %v1981, 2147483648
        %v2093 = vor.u32 1.1754944e-38, %v2092
        %v2094 = vsel %vm2091, %v2093, %v2089
        %v2095 = vmul.f32 1.0, %v2094
        %v2096 = vrcp.pop %v1982
        %v2097 = vmul.f32 %v1982, %v2096
        %v2098 = vsub.f32 1.0, %v2097
        %v2099 = vmul.f32 %v2096, %v2098
        %v2100 = vadd.f32 %v2096, %v2099
        %vm2101 = vweird.f32 %v1982
        %vm2102 = vweird.f32 %v2096
        %vm2103 = vmor %vm2101, %vm2102
        %v2104 = vsel %vm2103, %v2096, %v2100
        %v2105 = vand.u32 2147483647, %v1982
        %vm2106 = vcmp.eq.f32.partialorder %v2105, 8.507059e+37
        %v2107 = vand.u32 %v1982, 2147483648
        %v2108 = vor.u32 1.1754944e-38, %v2107
        %v2109 = vsel %vm2106, %v2108, %v2104
        %v2110 = vmul.f32 1.0, %v2109
        %v2111 = vrcp.pop %v1983
        %v2112 = vmul.f32 %v1983, %v2111
        %v2113 = vsub.f32 1.0, %v2112
        %v2114 = vmul.f32 %v2111, %v2113
        %v2115 = vadd.f32 %v2111, %v2114
        %vm2116 = vweird.f32 %v1983
        %vm2117 = vweird.f32 %v2111
        %vm2118 = vmor %vm2116, %vm2117
        %v2119 = vsel %vm2118, %v2111, %v2115
        %v2120 = vand.u32 2147483647, %v1983
        %vm2121 = vcmp.eq.f32.partialorder %v2120, 8.507059e+37
        %v2122 = vand.u32 %v1983, 2147483648
        %v2123 = vor.u32 1.1754944e-38, %v2122
        %v2124 = vsel %vm2121, %v2123, %v2119
        %v2125 = vmul.f32 1.0, %v2124
        %v2126 = vrcp.pop %v1984
        %v2127 = vmul.f32 %v1984, %v2126
        %v2128 = vsub.f32 1.0, %v2127
        %v2129 = vmul.f32 %v2126, %v2128
        %v2130 = vadd.f32 %v2126, %v2129
        %vm2131 = vweird.f32 %v1984
        %vm2132 = vweird.f32 %v2126
        %vm2133 = vmor %vm2131, %vm2132
        %v2134 = vsel %vm2133, %v2126, %v2130
        %v2135 = vand.u32 2147483647, %v1984
        %vm2136 = vcmp.eq.f32.partialorder %v2135, 8.507059e+37
        %v2137 = vand.u32 %v1984, 2147483648
        %v2138 = vor.u32 1.1754944e-38, %v2137
        %v2139 = vsel %vm2136, %v2138, %v2134
        %v2140 = vmul.f32 1.0, %v2139
        %v2141 = vrcp.pop %v1985
        %v2142 = vmul.f32 %v1985, %v2141
        %v2143 = vsub.f32 1.0, %v2142
        %v2144 = vmul.f32 %v2141, %v2143
        %v2145 = vadd.f32 %v2141, %v2144
        %vm2146 = vweird.f32 %v1985
        %vm2147 = vweird.f32 %v2141
        %vm2148 = vmor %vm2146, %vm2147
        %v2149 = vsel %vm2148, %v2141, %v2145
        %v2150 = vand.u32 2147483647, %v1985
        %vm2151 = vcmp.eq.f32.partialorder %v2150, 8.507059e+37
        %v2152 = vand.u32 %v1985, 2147483648
        %v2153 = vor.u32 1.1754944e-38, %v2152
        %v2154 = vsel %vm2151, %v2153, %v2149
        %v2155 = vmul.f32 1.0, %v2154
        %v2156 = vrcp.pop %v1986
        %v2157 = vmul.f32 %v1986, %v2156
        %v2158 = vsub.f32 1.0, %v2157
        %v2159 = vmul.f32 %v2156, %v2158
        %v2160 = vadd.f32 %v2156, %v2159
        %vm2161 = vweird.f32 %v1986
        %vm2162 = vweird.f32 %v2156
        %vm2163 = vmor %vm2161, %vm2162
        %v2164 = vsel %vm2163, %v2156, %v2160
        %v2165 = vand.u32 2147483647, %v1986
        %vm2166 = vcmp.eq.f32.partialorder %v2165, 8.507059e+37
        %v2167 = vand.u32 %v1986, 2147483648
        %v2168 = vor.u32 1.1754944e-38, %v2167
        %v2169 = vsel %vm2166, %v2168, %v2164
        %v2170 = vmul.f32 1.0, %v2169
        %v2171 = vrcp.pop %v1987
        %v2172 = vmul.f32 %v1987, %v2171
        %v2173 = vsub.f32 1.0, %v2172
        %v2174 = vmul.f32 %v2171, %v2173
        %v2175 = vadd.f32 %v2171, %v2174
        %vm2176 = vweird.f32 %v1987
        %vm2177 = vweird.f32 %v2171
        %vm2178 = vmor %vm2176, %vm2177
        %v2179 = vsel %vm2178, %v2171, %v2175
        %v2180 = vand.u32 2147483647, %v1987
        %vm2181 = vcmp.eq.f32.partialorder %v2180, 8.507059e+37
        %v2182 = vand.u32 %v1987, 2147483648
        %v2183 = vor.u32 1.1754944e-38, %v2182
        %v2184 = vsel %vm2181, %v2183, %v2179
        %v2185 = vmul.f32 1.0, %v2184
        %v2186 = vrcp.pop %v1988
        %v2187 = vmul.f32 %v1988, %v2186
        %v2188 = vsub.f32 1.0, %v2187
        %v2189 = vmul.f32 %v2186, %v2188
        %v2190 = vadd.f32 %v2186, %v2189
        %vm2191 = vweird.f32 %v1988
        %vm2192 = vweird.f32 %v2186
        %vm2193 = vmor %vm2191, %vm2192
        %v2194 = vsel %vm2193, %v2186, %v2190
        %v2195 = vand.u32 2147483647, %v1988
        %vm2196 = vcmp.eq.f32.partialorder %v2195, 8.507059e+37
        %v2197 = vand.u32 %v1988, 2147483648
        %v2198 = vor.u32 1.1754944e-38, %v2197
        %v2199 = vsel %vm2196, %v2198, %v2194
        %v2200 = vmul.f32 1.0, %v2199
        %v2201 = vrcp.pop %v1989
        %v2202 = vmul.f32 %v1989, %v2201
        %v2203 = vsub.f32 1.0, %v2202
        %v2204 = vmul.f32 %v2201, %v2203
        %v2205 = vadd.f32 %v2201, %v2204
        %vm2206 = vweird.f32 %v1989
        %vm2207 = vweird.f32 %v2201
        %vm2208 = vmor %vm2206, %vm2207
        %v2209 = vsel %vm2208, %v2201, %v2205
        %v2210 = vand.u32 2147483647, %v1989
        %vm2211 = vcmp.eq.f32.partialorder %v2210, 8.507059e+37
        %v2212 = vand.u32 %v1989, 2147483648
        %v2213 = vor.u32 1.1754944e-38, %v2212
        %v2214 = vsel %vm2211, %v2213, %v2209
        %v2215 = vmul.f32 1.0, %v2214
        %v2216 = vrcp.pop %v1990
        %v2217 = vmul.f32 %v1990, %v2216
        %v2218 = vsub.f32 1.0, %v2217
        %v2219 = vmul.f32 %v2216, %v2218
        %v2220 = vadd.f32 %v2216, %v2219
        %vm2221 = vweird.f32 %v1990
        %vm2222 = vweird.f32 %v2216
        %vm2223 = vmor %vm2221, %vm2222
        %v2224 = vsel %vm2223, %v2216, %v2220
        %v2225 = vand.u32 2147483647, %v1990
        %vm2226 = vcmp.eq.f32.partialorder %v2225, 8.507059e+37
        %v2227 = vand.u32 %v1990, 2147483648
        %v2228 = vor.u32 1.1754944e-38, %v2227
        %v2229 = vsel %vm2226, %v2228, %v2224
        %v2230 = vmul.f32 1.0, %v2229
        %v2231 = vmul.f32 %v2005, 1.0614054
        %v2232 = vmul.f32 %v2020, 1.0614054
        %v2233 = vmul.f32 %v2035, 1.0614054
        %v2234 = vmul.f32 %v2050, 1.0614054
        %v2235 = vmul.f32 %v2065, 1.0614054
        %v2236 = vmul.f32 %v2080, 1.0614054
        %v2237 = vmul.f32 %v2095, 1.0614054
        %v2238 = vmul.f32 %v2110, 1.0614054
        %v2239 = vmul.f32 %v2125, 1.0614054
        %v2240 = vmul.f32 %v2140, 1.0614054
        %v2241 = vmul.f32 %v2155, 1.0614054
        %v2242 = vmul.f32 %v2170, 1.0614054
        %v2243 = vmul.f32 %v2185, 1.0614054
        %v2244 = vmul.f32 %v2200, 1.0614054
        %v2245 = vmul.f32 %v2215, 1.0614054
        %v2246 = vmul.f32 %v2230, 1.0614054
        %v2247 = vadd.f32 %v2231, -1.4531521
        %v2248 = vadd.f32 %v2232, -1.4531521
        %v2249 = vadd.f32 %v2233, -1.4531521
        %v2250 = vadd.f32 %v2234, -1.4531521
        %v2251 = vadd.f32 %v2235, -1.4531521
        %v2252 = vadd.f32 %v2236, -1.4531521
        %v2253 = vadd.f32 %v2237, -1.4531521
        %v2254 = vadd.f32 %v2238, -1.4531521
        %v2255 = vadd.f32 %v2239, -1.4531521
        %v2256 = vadd.f32 %v2240, -1.4531521
        %v2257 = vadd.f32 %v2241, -1.4531521
        %v2258 = vadd.f32 %v2242, -1.4531521
        %v2259 = vadd.f32 %v2243, -1.4531521
        %v2260 = vadd.f32 %v2244, -1.4531521
        %v2261 = vadd.f32 %v2245, -1.4531521
        %v2262 = vadd.f32 %v2246, -1.4531521
        %v2263 = vmul.f32 %v2247, %v2005
        %v2264 = vmul.f32 %v2248, %v2020
        %v2265 = vmul.f32 %v2249, %v2035
        %v2266 = vmul.f32 %v2250, %v2050
        %v2267 = vmul.f32 %v2251, %v2065
        %v2268 = vmul.f32 %v2252, %v2080
        %v2269 = vmul.f32 %v2253, %v2095
        %v2270 = vmul.f32 %v2254, %v2110
        %v2271 = vmul.f32 %v2255, %v2125
        %v2272 = vmul.f32 %v2256, %v2140
        %v2273 = vmul.f32 %v2257, %v2155
        %v2274 = vmul.f32 %v2258, %v2170
        %v2275 = vmul.f32 %v2259, %v2185
        %v2276 = vmul.f32 %v2260, %v2200
        %v2277 = vmul.f32 %v2261, %v2215
        %v2278 = vmul.f32 %v2262, %v2230
        %v2279 = vadd.f32 %v2263, 1.4214138
        %v2280 = vadd.f32 %v2264, 1.4214138
        %v2281 = vadd.f32 %v2265, 1.4214138
        %v2282 = vadd.f32 %v2266, 1.4214138
        %v2283 = vadd.f32 %v2267, 1.4214138
        %v2284 = vadd.f32 %v2268, 1.4214138
        %v2285 = vadd.f32 %v2269, 1.4214138
        %v2286 = vadd.f32 %v2270, 1.4214138
        %v2287 = vadd.f32 %v2271, 1.4214138
        %v2288 = vadd.f32 %v2272, 1.4214138
        %v2289 = vadd.f32 %v2273, 1.4214138
        %v2290 = vadd.f32 %v2274, 1.4214138
        %v2291 = vadd.f32 %v2275, 1.4214138
        %v2292 = vadd.f32 %v2276, 1.4214138
        %v2293 = vadd.f32 %v2277, 1.4214138
        %v2294 = vadd.f32 %v2278, 1.4214138
        %v2295 = vmul.f32 %v2279, %v2005
        %v2296 = vmul.f32 %v2280, %v2020
        %v2297 = vmul.f32 %v2281, %v2035
        %v2298 = vmul.f32 %v2282, %v2050
        %v2299 = vmul.f32 %v2283, %v2065
        %v2300 = vmul.f32 %v2284, %v2080
        %v2301 = vmul.f32 %v2285, %v2095
        %v2302 = vmul.f32 %v2286, %v2110
        %v2303 = vmul.f32 %v2287, %v2125
        %v2304 = vmul.f32 %v2288, %v2140
        %v2305 = vmul.f32 %v2289, %v2155
        %v2306 = vmul.f32 %v2290, %v2170
        %v2307 = vmul.f32 %v2291, %v2185
        %v2308 = vmul.f32 %v2292, %v2200
        %v2309 = vmul.f32 %v2293, %v2215
        %v2310 = vmul.f32 %v2294, %v2230
        %v2311 = vadd.f32 %v2295, -0.28449672
        %v2312 = vadd.f32 %v2296, -0.28449672
        %v2313 = vadd.f32 %v2297, -0.28449672
        %v2314 = vadd.f32 %v2298, -0.28449672
        %v2315 = vadd.f32 %v2299, -0.28449672
        %v2316 = vadd.f32 %v2300, -0.28449672
        %v2317 = vadd.f32 %v2301, -0.28449672
        %v2318 = vadd.f32 %v2302, -0.28449672
        %v2319 = vadd.f32 %v2303, -0.28449672
        %v2320 = vadd.f32 %v2304, -0.28449672
        %v2321 = vadd.f32 %v2305, -0.28449672
        %v2322 = vadd.f32 %v2306, -0.28449672
        %v2323 = vadd.f32 %v2307, -0.28449672
        %v2324 = vadd.f32 %v2308, -0.28449672
        %v2325 = vadd.f32 %v2309, -0.28449672
        %v2326 = vadd.f32 %v2310, -0.28449672
        %v2327 = vmul.f32 %v2311, %v2005
        %v2328 = vmul.f32 %v2312, %v2020
        %v2329 = vmul.f32 %v2313, %v2035
        %v2330 = vmul.f32 %v2314, %v2050
        %v2331 = vmul.f32 %v2315, %v2065
        %v2332 = vmul.f32 %v2316, %v2080
        %v2333 = vmul.f32 %v2317, %v2095
        %v2334 = vmul.f32 %v2318, %v2110
        %v2335 = vmul.f32 %v2319, %v2125
        %v2336 = vmul.f32 %v2320, %v2140
        %v2337 = vmul.f32 %v2321, %v2155
        %v2338 = vmul.f32 %v2322, %v2170
        %v2339 = vmul.f32 %v2323, %v2185
        %v2340 = vmul.f32 %v2324, %v2200
        %v2341 = vmul.f32 %v2325, %v2215
        %v2342 = vmul.f32 %v2326, %v2230
        %v2343 = vadd.f32 %v2327, 0.2548296
        %v2344 = vadd.f32 %v2328, 0.2548296
        %v2345 = vadd.f32 %v2329, 0.2548296
        %v2346 = vadd.f32 %v2330, 0.2548296
        %v2347 = vadd.f32 %v2331, 0.2548296
        %v2348 = vadd.f32 %v2332, 0.2548296
        %v2349 = vadd.f32 %v2333, 0.2548296
        %v2350 = vadd.f32 %v2334, 0.2548296
        %v2351 = vadd.f32 %v2335, 0.2548296
        %v2352 = vadd.f32 %v2336, 0.2548296
        %v2353 = vadd.f32 %v2337, 0.2548296
        %v2354 = vadd.f32 %v2338, 0.2548296
        %v2355 = vadd.f32 %v2339, 0.2548296
        %v2356 = vadd.f32 %v2340, 0.2548296
        %v2357 = vadd.f32 %v2341, 0.2548296
        %v2358 = vadd.f32 %v2342, 0.2548296
        %v2359 = vmul.f32 %v2343, %v2005
        %v2360 = vmul.f32 %v2344, %v2020
        %v2361 = vmul.f32 %v2345, %v2035
        %v2362 = vmul.f32 %v2346, %v2050
        %v2363 = vmul.f32 %v2347, %v2065
        %v2364 = vmul.f32 %v2348, %v2080
        %v2365 = vmul.f32 %v2349, %v2095
        %v2366 = vmul.f32 %v2350, %v2110
        %v2367 = vmul.f32 %v2351, %v2125
        %v2368 = vmul.f32 %v2352, %v2140
        %v2369 = vmul.f32 %v2353, %v2155
        %v2370 = vmul.f32 %v2354, %v2170
        %v2371 = vmul.f32 %v2355, %v2185
        %v2372 = vmul.f32 %v2356, %v2200
        %v2373 = vmul.f32 %v2357, %v2215
        %v2374 = vmul.f32 %v2358, %v2230
        %v2375 = vsub.f32 0.0, %v1943
        %v2376 = vsub.f32 0.0, %v1944
        %v2377 = vsub.f32 0.0, %v1945
        %v2378 = vsub.f32 0.0, %v1946
        %v2379 = vsub.f32 0.0, %v1947
        %v2380 = vsub.f32 0.0, %v1948
        %v2381 = vsub.f32 0.0, %v1949
        %v2382 = vsub.f32 0.0, %v1950
        %v2383 = vsub.f32 0.0, %v1951
        %v2384 = vsub.f32 0.0, %v1952
        %v2385 = vsub.f32 0.0, %v1953
        %v2386 = vsub.f32 0.0, %v1954
        %v2387 = vsub.f32 0.0, %v1955
        %v2388 = vsub.f32 0.0, %v1956
        %v2389 = vsub.f32 0.0, %v1957
        %v2390 = vsub.f32 0.0, %v1958
        %v2391 = vmul.f32 %v2375, %v1943
        %v2392 = vmul.f32 %v2376, %v1944
        %v2393 = vmul.f32 %v2377, %v1945
        %v2394 = vmul.f32 %v2378, %v1946
        %v2395 = vmul.f32 %v2379, %v1947
        %v2396 = vmul.f32 %v2380, %v1948
        %v2397 = vmul.f32 %v2381, %v1949
        %v2398 = vmul.f32 %v2382, %v1950
        %v2399 = vmul.f32 %v2383, %v1951
        %v2400 = vmul.f32 %v2384, %v1952
        %v2401 = vmul.f32 %v2385, %v1953
        %v2402 = vmul.f32 %v2386, %v1954
        %v2403 = vmul.f32 %v2387, %v1955
        %v2404 = vmul.f32 %v2388, %v1956
        %v2405 = vmul.f32 %v2389, %v1957
        %v2406 = vmul.f32 %v2390, %v1958
        %v2407 = vmul.f32 %v2391, 1.442695
        %v2408 = vpow.pop %v2407
        %v2409 = vmul.f32 %v2392, 1.442695
        %v2410 = vpow.pop %v2409
        %v2411 = vmul.f32 %v2393, 1.442695
        %v2412 = vpow.pop %v2411
        %v2413 = vmul.f32 %v2394, 1.442695
        %v2414 = vpow.pop %v2413
        %v2415 = vmul.f32 %v2395, 1.442695
        %v2416 = vpow.pop %v2415
        %v2417 = vmul.f32 %v2396, 1.442695
        %v2418 = vpow.pop %v2417
        %v2419 = vmul.f32 %v2397, 1.442695
        %v2420 = vpow.pop %v2419
        %v2421 = vmul.f32 %v2398, 1.442695
        %v2422 = vpow.pop %v2421
        %v2423 = vmul.f32 %v2399, 1.442695
        %v2424 = vpow.pop %v2423
        %v2425 = vmul.f32 %v2400, 1.442695
        %v2426 = vpow.pop %v2425
        %v2427 = vmul.f32 %v2401, 1.442695
        %v2428 = vpow.pop %v2427
        %v2429 = vmul.f32 %v2402, 1.442695
        %v2430 = vpow.pop %v2429
        %v2431 = vmul.f32 %v2403, 1.442695
        %v2432 = vpow.pop %v2431
        %v2433 = vmul.f32 %v2404, 1.442695
        %v2434 = vpow.pop %v2433
        %v2435 = vmul.f32 %v2405, 1.442695
        %v2436 = vpow.pop %v2435
        %v2437 = vmul.f32 %v2406, 1.442695
        %v2438 = vpow.pop %v2437
        %v2439 = vmul.f32 %v2359, %v2408
        %v2440 = vmul.f32 %v2360, %v2410
        %v2441 = vmul.f32 %v2361, %v2412
        %v2442 = vmul.f32 %v2362, %v2414
        %v2443 = vmul.f32 %v2363, %v2416
        %v2444 = vmul.f32 %v2364, %v2418
        %v2445 = vmul.f32 %v2365, %v2420
        %v2446 = vmul.f32 %v2366, %v2422
        %v2447 = vmul.f32 %v2367, %v2424
        %v2448 = vmul.f32 %v2368, %v2426
        %v2449 = vmul.f32 %v2369, %v2428
        %v2450 = vmul.f32 %v2370, %v2430
        %v2451 = vmul.f32 %v2371, %v2432
        %v2452 = vmul.f32 %v2372, %v2434
        %v2453 = vmul.f32 %v2373, %v2436
        %v2454 = vmul.f32 %v2374, %v2438
        %v2455 = vsub.f32 1.0, %v2439
        %v2456 = vsub.f32 1.0, %v2440
        %v2457 = vsub.f32 1.0, %v2441
        %v2458 = vsub.f32 1.0, %v2442
        %v2459 = vsub.f32 1.0, %v2443
        %v2460 = vsub.f32 1.0, %v2444
        %v2461 = vsub.f32 1.0, %v2445
        %v2462 = vsub.f32 1.0, %v2446
        %v2463 = vsub.f32 1.0, %v2447
        %v2464 = vsub.f32 1.0, %v2448
        %v2465 = vsub.f32 1.0, %v2449
        %v2466 = vsub.f32 1.0, %v2450
        %v2467 = vsub.f32 1.0, %v2451
        %v2468 = vsub.f32 1.0, %v2452
        %v2469 = vsub.f32 1.0, %v2453
        %v2470 = vsub.f32 1.0, %v2454
        %v2471 = vmul.f32 %v1927, %v2455
        %v2472 = vmul.f32 %v1928, %v2456
        %v2473 = vmul.f32 %v1929, %v2457
        %v2474 = vmul.f32 %v1930, %v2458
        %v2475 = vmul.f32 %v1931, %v2459
        %v2476 = vmul.f32 %v1932, %v2460
        %v2477 = vmul.f32 %v1933, %v2461
        %v2478 = vmul.f32 %v1934, %v2462
        %v2479 = vmul.f32 %v1935, %v2463
        %v2480 = vmul.f32 %v1936, %v2464
        %v2481 = vmul.f32 %v1937, %v2465
        %v2482 = vmul.f32 %v1938, %v2466
        %v2483 = vmul.f32 %v1939, %v2467
        %v2484 = vmul.f32 %v1940, %v2468
        %v2485 = vmul.f32 %v1941, %v2469
        %v2486 = vmul.f32 %v1942, %v2470
        %v2487 = vadd.f32 %v2471, 1.0
        %v2488 = vadd.f32 %v2472, 1.0
        %v2489 = vadd.f32 %v2473, 1.0
        %v2490 = vadd.f32 %v2474, 1.0
        %v2491 = vadd.f32 %v2475, 1.0
        %v2492 = vadd.f32 %v2476, 1.0
        %v2493 = vadd.f32 %v2477, 1.0
        %v2494 = vadd.f32 %v2478, 1.0
        %v2495 = vadd.f32 %v2479, 1.0
        %v2496 = vadd.f32 %v2480, 1.0
        %v2497 = vadd.f32 %v2481, 1.0
        %v2498 = vadd.f32 %v2482, 1.0
        %v2499 = vadd.f32 %v2483, 1.0
        %v2500 = vadd.f32 %v2484, 1.0
        %v2501 = vadd.f32 %v2485, 1.0
        %v2502 = vadd.f32 %v2486, 1.0
        %v2503 = vmul.f32 %v1879, %v2487
        %v2504 = vmul.f32 %v1880, %v2488
        %v2505 = vmul.f32 %v1881, %v2489
        %v2506 = vmul.f32 %v1882, %v2490
        %v2507 = vmul.f32 %v1883, %v2491
        %v2508 = vmul.f32 %v1884, %v2492
        %v2509 = vmul.f32 %v1885, %v2493
        %v2510 = vmul.f32 %v1886, %v2494
        %v2511 = vmul.f32 %v1887, %v2495
        %v2512 = vmul.f32 %v1888, %v2496
        %v2513 = vmul.f32 %v1889, %v2497
        %v2514 = vmul.f32 %v1890, %v2498
        %v2515 = vmul.f32 %v1891, %v2499
        %v2516 = vmul.f32 %v1892, %v2500
        %v2517 = vmul.f32 %v1893, %v2501
        %v2518 = vmul.f32 %v1894, %v2502
        %v2519 = vpack.c.bf16 %v2505, %v2503
        %v2520 = vpack.c.bf16 %v2506, %v2504
        %v2521 = vpack.c.bf16 %v2509, %v2507
        %v2522 = vpack.c.bf16 %v2510, %v2508
        %v2523 = vpack.c.bf16 %v2513, %v2511
        %v2524 = vpack.c.bf16 %v2514, %v2512
        %v2525 = vpack.c.bf16 %v2517, %v2515
        %v2526 = vpack.c.bf16 %v2518, %v2516
        %v2527 = vld [vmem:[#allocation16] sm:$0xf]
        %v2528 = vld [vmem:[#allocation16 + $0x4] sm:$0xf]
        %v2529 = vld [vmem:[#allocation16 + $0x8] sm:$0xf]
        %v2530 = vld [vmem:[#allocation16 + $0xc] sm:$0xf]
        %v2531 = vld [vmem:[#allocation16 + $0x10] sm:$0xf]
        %v2532 = vld [vmem:[#allocation16 + $0x14] sm:$0xf]
        %v2533 = vld [vmem:[#allocation16 + $0x18] sm:$0xf]
        %v2534 = vld [vmem:[#allocation16 + $0x1c] sm:$0xf]
        %v2535 = vld [vmem:[#allocation16 + $0x20] sm:$0xf]
        %v2536 = vld [vmem:[#allocation16 + $0x24] sm:$0xf]
        %v2537 = vld [vmem:[#allocation16 + $0x28] sm:$0xf]
        %v2538 = vld [vmem:[#allocation16 + $0x2c] sm:$0xf]
        %v2539 = vld [vmem:[#allocation16 + $0x30] sm:$0xf]
        %v2540 = vld [vmem:[#allocation16 + $0x34] sm:$0xf]
        %v2541 = vld [vmem:[#allocation16 + $0x38] sm:$0xf]
        %v2542 = vld [vmem:[#allocation16 + $0x3c] sm:$0xf]
        %v2543 = vld [vmem:[#allocation16 + $0x40] sm:$0xf]
        %v2544 = vld [vmem:[#allocation16 + $0x44] sm:$0xf]
        %v2545 = vld [vmem:[#allocation16 + $0x48] sm:$0xf]
        %v2546 = vld [vmem:[#allocation16 + $0x4c] sm:$0xf]
        %v2547 = vld [vmem:[#allocation16 + $0x50] sm:$0xf]
        %v2548 = vld [vmem:[#allocation16 + $0x54] sm:$0xf]
        %v2549 = vld [vmem:[#allocation16 + $0x58] sm:$0xf]
        %v2550 = vld [vmem:[#allocation16 + $0x5c] sm:$0xf]
        %v2551 = vld [vmem:[#allocation16 + $0x60] sm:$0xf]
        %v2552 = vld [vmem:[#allocation16 + $0x64] sm:$0xf]
        %v2553 = vld [vmem:[#allocation16 + $0x68] sm:$0xf]
        %v2554 = vld [vmem:[#allocation16 + $0x6c] sm:$0xf]
        %v2555 = vld [vmem:[#allocation16 + $0x70] sm:$0xf]
        %v2556 = vld [vmem:[#allocation16 + $0x74] sm:$0xf]
        %v2557 = vld [vmem:[#allocation16 + $0x78] sm:$0xf]
        %v2558 = vld [vmem:[#allocation16 + $0x7c] sm:$0xf]
        %v2559 = vld [vmem:[%s12] sm:$0x1]
        %v2561 = vperm.slane %v2559, 0
        %v2595 = vunpack.c.l.b16 %v2527
        %v2596 = vunpack.c.l.b16 %v2528
        %v2597 = vunpack.c.l.b16 %v2529
        %v2598 = vunpack.c.l.b16 %v2530
        %v2599 = vunpack.c.l.b16 %v2531
        %v2600 = vunpack.c.l.b16 %v2532
        %v2601 = vunpack.c.l.b16 %v2533
        %v2602 = vunpack.c.l.b16 %v2534
        %v2603 = vunpack.c.l.b16 %v2535
        %v2604 = vunpack.c.l.b16 %v2536
        %v2605 = vunpack.c.l.b16 %v2537
        %v2606 = vunpack.c.l.b16 %v2538
        %v2607 = vunpack.c.l.b16 %v2539
        %v2608 = vunpack.c.l.b16 %v2540
        %v2609 = vunpack.c.l.b16 %v2541
        %v2610 = vunpack.c.l.b16 %v2542
        %v2611 = vunpack.c.l.b16 %v2543
        %v2612 = vunpack.c.l.b16 %v2544
        %v2613 = vunpack.c.l.b16 %v2545
        %v2614 = vunpack.c.l.b16 %v2546
        %v2615 = vunpack.c.l.b16 %v2547
        %v2616 = vunpack.c.l.b16 %v2548
        %v2617 = vunpack.c.l.b16 %v2549
        %v2618 = vunpack.c.l.b16 %v2550
        %v2619 = vunpack.c.l.b16 %v2551
        %v2620 = vunpack.c.l.b16 %v2552
        %v2621 = vunpack.c.l.b16 %v2553
        %v2622 = vunpack.c.l.b16 %v2554
        %v2623 = vunpack.c.l.b16 %v2555
        %v2624 = vunpack.c.l.b16 %v2556
        %v2625 = vunpack.c.l.b16 %v2557
        %v2626 = vunpack.c.l.b16 %v2558
        %v2627 = vpack.c.b16 %v2596, %v2595
        %v2628 = vpack.c.b16 %v2598, %v2597
        %v2629 = vpack.c.b16 %v2600, %v2599
        %v2630 = vpack.c.b16 %v2602, %v2601
        %v2631 = vpack.c.b16 %v2604, %v2603
        %v2632 = vpack.c.b16 %v2606, %v2605
        %v2633 = vpack.c.b16 %v2608, %v2607
        %v2634 = vpack.c.b16 %v2610, %v2609
        %v2635 = vpack.c.b16 %v2612, %v2611
        %v2636 = vpack.c.b16 %v2614, %v2613
        %v2637 = vpack.c.b16 %v2616, %v2615
        %v2638 = vpack.c.b16 %v2618, %v2617
        %v2639 = vpack.c.b16 %v2620, %v2619
        %v2640 = vpack.c.b16 %v2622, %v2621
        %v2641 = vpack.c.b16 %v2624, %v2623
        %v2642 = vpack.c.b16 %v2626, %v2625
        %2659 = vmatpush.bf16.msra.mxu0 %v2634
        %2660 = vmatpush.bf16.msra.mxu0 %v2633
        %2661 = vmatpush.bf16.msra.mxu0 %v2632
        %2662 = vmatpush.bf16.msra.mxu0 %v2631
        %2663 = vmatpush.bf16.msra.mxu0 %v2630
        %2664 = vmatpush.bf16.msra.mxu0 %v2629
        %2665 = vmatpush.bf16.msra.mxu0 %v2628
        %2666 = vmatpush.bf16.msra.mxu0 %v2627
        %2667 = vmatmul.bf16.gmra.mxu0 %v2519
        %v2668 = vpop.f32.mrf.mxu0
        %v2669 = vadd.f32 %v2561, %v2668
        %v2670 = vpop.f32.mrf.mxu0
        %v2671 = vadd.f32 %v2561, %v2670
        %2672 = vmatmul.bf16.gmra.mxu0 %v2521
        %v2673 = vpop.f32.mrf.mxu0
        %v2674 = vadd.f32 %v2561, %v2673
        %v2675 = vpop.f32.mrf.mxu0
        %v2676 = vadd.f32 %v2561, %v2675
        %2677 = vmatmul.bf16.gmra.mxu0 %v2523
        %v2678 = vpop.f32.mrf.mxu0
        %v2679 = vadd.f32 %v2561, %v2678
        %v2680 = vpop.f32.mrf.mxu0
        %v2681 = vadd.f32 %v2561, %v2680
        %2682 = vmatmul.bf16.gmra.mxu0 %v2525
        %v2683 = vpop.f32.mrf.mxu0
        %v2684 = vadd.f32 %v2561, %v2683
        %v2685 = vpop.f32.mrf.mxu0
        %v2686 = vadd.f32 %v2561, %v2685
        %2687 = vdwg.mxu0
        %2688 = vmatpush.bf16.msra.mxu0 %v2642
        %2689 = vmatpush.bf16.msra.mxu0 %v2641
        %2690 = vmatpush.bf16.msra.mxu0 %v2640
        %2691 = vmatpush.bf16.msra.mxu0 %v2639
        %2692 = vmatpush.bf16.msra.mxu0 %v2638
        %2693 = vmatpush.bf16.msra.mxu0 %v2637
        %2694 = vmatpush.bf16.msra.mxu0 %v2636
        %2695 = vmatpush.bf16.msra.mxu0 %v2635
        %2696 = vmatmul.bf16.gmra.mxu0 %v2520
        %v2697 = vpop.f32.mrf.mxu0
        %v2698 = vadd.f32 %v2669, %v2697
        %v2699 = vpop.f32.mrf.mxu0
        %v2700 = vadd.f32 %v2671, %v2699
        %2701 = vmatmul.bf16.gmra.mxu0 %v2522
        %v2702 = vpop.f32.mrf.mxu0
        %v2703 = vadd.f32 %v2674, %v2702
        %v2704 = vpop.f32.mrf.mxu0
        %v2705 = vadd.f32 %v2676, %v2704
        %2706 = vmatmul.bf16.gmra.mxu0 %v2524
        %v2707 = vpop.f32.mrf.mxu0
        %v2708 = vadd.f32 %v2679, %v2707
        %v2709 = vpop.f32.mrf.mxu0
        %v2710 = vadd.f32 %v2681, %v2709
        %2711 = vmatmul.bf16.gmra.mxu0 %v2526
        %v2712 = vpop.f32.mrf.mxu0
        %v2713 = vadd.f32 %v2684, %v2712
        %v2714 = vpop.f32.mrf.mxu0
        %v2715 = vadd.f32 %v2686, %v2714
        %2716 = vdwg.mxu0
        %v2717 = vadd.f32 %v1523, %v2698
        %v2718 = vadd.f32 %v1524, %v2700
        %v2719 = vadd.f32 %v1525, %v2703
        %v2720 = vadd.f32 %v1526, %v2705
        %v2721 = vadd.f32 %v1527, %v2708
        %v2722 = vadd.f32 %v1528, %v2710
        %v2723 = vadd.f32 %v1529, %v2713
        %v2724 = vadd.f32 %v1530, %v2715
        %2725 = vst [vmem:[%s571] sm:$0xff] %v2717
        %2726 = vst [vmem:[%s571 + $0x8] sm:$0xff] %v2718
        %2727 = vst [vmem:[%s571 + $0x10] sm:$0xff] %v2719
        %2728 = vst [vmem:[%s571 + $0x18] sm:$0xff] %v2720
        %2729 = vst [vmem:[%s571 + $0x20] sm:$0xff] %v2721
        %2730 = vst [vmem:[%s571 + $0x28] sm:$0xff] %v2722
        %2731 = vst [vmem:[%s571 + $0x30] sm:$0xff] %v2723
        %2732 = vst [vmem:[%s571 + $0x38] sm:$0xff] %v2724
        %s2733 = sand.u32 %s320, 1
        %s2734 = scalar_lea.sflag [#allocation6], %s2733
        %s2735 = sand.u32 %s320, 1
        %s2736 = smul.addr %s2735, 64
        %s2737 = scalar_lea.vmem [#allocation18], %s2736
        // Predicated region
        $region112: #{tpu_custom_call.1} parent=71 // pred_check
          %p2738 = pneg %p330
        $region113: #{tpu_custom_call.1} parent=71 // pred_check_branch
          %2740 = sbr.rel (%p2738) target = $region115
        $region114: #{tpu_custom_call.1} parent=71 // pred_region
          %s2741 = smul.u32 4, %s34
          %2743 = vsyncadd %s2734, 0
          %s2744 = smul.addr %s2741, 2
          %s2745 = smul.addr %s2744, 8
          %s2746 = scalar_lea.hbm %s13, %s2745
          %s2747 = sshll.u32 %s2737, 4
          %s2748 = int_to_ptr.vmem [resolvable:$true] %s2747
          %s2749 = sshll.u32 %s2746, 4
          %s2750 = int_to_ptr.hbm [resolvable:$true] %s2749
          %2755 = dma.vmem_to_hbm [thread:$0]  %s2748, 1024, %s2750, %s2734, 128, 128, 8
        $region115: #{tpu_custom_call.1} parent=71 // pred_fallthru
          _
      $region72: #{tpu_custom_call.1} parent=5 // pred_fallthru
        _
      %p2756 = scmp.le.s32.totalorder 2, %s29
      // Predicated region
      $region116: #{tpu_custom_call.1} parent=5 // pred_check
        %p2757 = pneg %p2756
      $region117: #{tpu_custom_call.1} parent=5 // pred_check_branch
        %2759 = sbr.rel (%p2757) target = $region119
      $region118: #{tpu_custom_call.1} parent=5 // pred_region
        %s2760 = ssub.s32 %s29, 2
        // Predicated region
        $region120: #{tpu_custom_call.1} parent=118 // pred_check
          %p2761 = pneg %p336
        $region121: #{tpu_custom_call.1} parent=118 // pred_check_branch
          %2763 = sbr.rel (%p2761) target = $region123
        $region122: #{tpu_custom_call.1} parent=118 // pred_region
          %s2764 = sand.u32 %s321, 1
          %s2765 = scalar_lea.sflag [#allocation6], %s2764
          %s2766 = sand.u32 %s321, 1
          %s2767 = smul.addr %s2766, 64
          %s2768 = scalar_lea.vmem [#allocation18], %s2767
          %2770 = dma.done %s2765, 1024
        $region123: #{tpu_custom_call.1} parent=118 // pred_fallthru
          _
      $region119: #{tpu_custom_call.1} parent=5 // pred_fallthru
        _
    $region6: #{tpu_custom_call.1} parent=1 // loop_footer
      %s33 = sadd.s32 1, %s29
    $region7: #{tpu_custom_call.1} parent=1 // loop_footer_branch
      %28 = sbr.rel target = $region3
    $region8: #{tpu_custom_call.1} parent=1 // loop_exit
      _
    %2771 = vsyncpa [#allocation5], 1
    %s2772 = scalar_lea.sflag [#allocation5], 1
    %2773 = vsyncpa %s2772, 1
    %2774 = vsyncpa [#allocation8], 1
    %2775 = vsyncpa [#allocation11], 1
    %2776 = vsyncpa [#allocation14], 1
    %2777 = vsyncpa [#allocation17], 1
    %2778 = vsyncpa [#allocation6], 1
    %s2779 = scalar_lea.sflag [#allocation6], 1
    %2780 = vsyncpa %s2779, 1

</llo_original>
